<compile_context>
chip_gen: v7x
topology: tpu7x:2x2x1
jax: 0.10.0
libtpu: 0.0.40
codegen_flags: <defaults>
</compile_context>

<pallas_src>
import math

import jax
import jax.numpy as jnp
from jax.experimental import pallas as pl
from jax.experimental.pallas import tpu as pltpu


def _mixture_agg_kernel(x_ref, mu_ref, sig_ref, pts_ref, o_ref):
    # Block shapes: x (Bb,C,K), mu/sig (Bb,D,K), pts (Bb,K,D), out (Bb,C,K).
    Bb = x_ref.shape[0]
    D = mu_ref.shape[1]

    for b in range(Bb):                              # Bb is small -> static unroll
        pts = pts_ref[b].astype(jnp.float32)         # (K, D)  points (= mu^T)
        mu = mu_ref[b].astype(jnp.float32)           # (D, K)
        sig = sig_ref[b].astype(jnp.float32)         # (D, K)
        sig2 = sig * sig                             # (D, K)

        # P[i,j] = prod_d ((pt[i,d] - mu[d,j])^2 + sig[d,j]^2), d = 0 peeled.
        diff = pts[:, 0:1] - mu[0:1, :]              # (K, K)
        p_prod = diff * diff + sig2[0:1, :]
        for d in range(1, D):                        # D is tiny (4) -> static unroll
            diff = pts[:, d:d + 1] - mu[d:d + 1, :]
            p_prod = p_prod * (diff * diff + sig2[d:d + 1, :])

        # coef[i,j] = (1/P[i,j]) / sum_i (1/P[i,j]); the column prefactor
        # pi_j * (1/pi)^D * prod_d sig[d,j] cancels exactly in the ratio.
        r = pl.reciprocal(p_prod, approx=True)       # (K, K) seed on the EUP
        r = r * (2.0 - p_prod * r)                   # one Newton step -> ~exact 1/P
        denom = jnp.sum(r, axis=0, keepdims=True)    # (1, K) sum over points i
        coef = r * pl.reciprocal(denom, approx=True)  # (K, K)
        # TODO(synk): coef_detach (stop_gradient) is a no-op for the forward pass.

        x = x_ref[b].astype(jnp.float32)             # (C, K)
        # Matmul kept in f32 so results stay within the reference tolerance at
        # these shapes; on v6e/v7x casting x/coef to bf16 (f32 accumulation) is
        # a further MXU-pass saving if C/K grow in production.
        y = jnp.dot(x, coef, preferred_element_type=jnp.float32)   # (C, K) on MXU
        o_ref[b] = y.astype(o_ref.dtype)


def _pick_block_b(B, want=4):
    """Largest divisor of B <= want, keeping >= 2 grid steps when B > 1 (v7x)."""
    cap = max(1, min(want, B if B == 1 else B // 2))
    bb = 1
    for cand in range(1, cap + 1):
        if B % cand == 0:
            bb = cand
    return bb


def mixture_aggregation(x, pi, mu, sig, *, block_b=None):
    B, C, K = x.shape
    D = mu.shape[1]
    # pi cancels exactly in coef = lh / sum_i lh, so it never enters the kernel.
    del pi
    points = jnp.transpose(mu, (0, 2, 1))            # (B, K, D), glue-level

    Bb = _pick_block_b(B) if block_b is None else block_b
    assert B % Bb == 0, "block_b must divide the batch size"

    return pl.pallas_call(
        _mixture_agg_kernel,
        out_shape=jax.ShapeDtypeStruct((B, C, K), x.dtype),
        grid_spec=pltpu.PrefetchScalarGridSpec(
            num_scalar_prefetch=0,
            grid=(B // Bb,),
            in_specs=[
                pl.BlockSpec((Bb, C, K), lambda b: (b, 0, 0)),   # x
                pl.BlockSpec((Bb, D, K), lambda b: (b, 0, 0)),   # mu
                pl.BlockSpec((Bb, D, K), lambda b: (b, 0, 0)),   # sig
                pl.BlockSpec((Bb, K, D), lambda b: (b, 0, 0)),   # points
            ],
            out_specs=pl.BlockSpec((Bb, C, K), lambda b: (b, 0, 0)),
        ),
        compiler_params=pltpu.CompilerParams(
            dimension_semantics=("parallel",)),
    )(x, mu, sig, points)


def _reference(x, pi, mu, sig):
    # Pure-JAX replica of the PyTorch forward (mm_pdf with cauchy_pdf).
    points = jnp.transpose(mu, (0, 2, 1))            # (B, K, D)
    mu_e = mu[:, None, :, :]                         # (B, 1, D, K)
    sig_e = sig[:, None, :, :]                       # (B, 1, D, K)
    pts_e = points[:, :, :, None]                    # (B, K, D, 1)
    comp = (1.0 / math.pi) * sig_e / ((pts_e - mu_e) ** 2 + sig_e ** 2)
    comp = jnp.prod(comp, axis=2)                    # (B, K, K)
    lh = comp * pi                                   # pi (B,1,K) broadcasts
    coef = lh / jnp.sum(lh, axis=1, keepdims=True)
    return jnp.einsum('bck,bkj->bcj', x, coef)


if __name__ == "__main__":
    B, C, D, K = 8, 32, 4, 128

    key = jax.random.PRNGKey(0)
    kx, kpi, kmu, ksig = jax.random.split(key, 4)

    x = jax.random.normal(kx, (B, C, K), dtype=jnp.float32)
    pi = jax.nn.softmax(jax.random.normal(kpi, (B, 1, K), dtype=jnp.float32), axis=-1)
    mu = jax.random.uniform(kmu, (B, D, K), dtype=jnp.float32)
    sig = jax.random.uniform(ksig, (B, D, K), dtype=jnp.float32,
                             minval=0.1, maxval=0.5)

    y = jax.block_until_ready(mixture_aggregation(x, pi, mu, sig))

    y_ref = _reference(x, pi, mu, sig)
    assert y.shape == (B, C, K)
    assert jnp.allclose(y, y_ref, rtol=1e-2, atol=1e-3), (
        float(jnp.max(jnp.abs(y - y_ref))))

    print("KERNEL_OK")
</pallas_src>

<mosaic_0001>
module attributes {stable_mosaic.version = 11 : i64} {
  func.func @_mixture_agg_kernel(%arg0: i32, %arg1: memref<4x32x128xf32, #tpu.memory_space<vmem>>, %arg2: memref<4x4x128xf32, #tpu.memory_space<vmem>>, %arg3: memref<4x4x128xf32, #tpu.memory_space<vmem>>, %arg4: memref<4x128x4xf32, #tpu.memory_space<vmem>>, %arg5: memref<4x32x128xf32, #tpu.memory_space<vmem>>) attributes {dimension_semantics = [#tpu.dimension_semantics<parallel>], iteration_bounds = array<i64: 2>, scalar_prefetch = 0 : i64, scratch_operands = 0 : i64, tpu.core_type = #tpu.core_type<tc>, window_params = [{transform_indices = @transform_0, window_bounds = array<i64: 4, 32, 128>}, {transform_indices = @transform_1, window_bounds = array<i64: 4, 4, 128>}, {transform_indices = @transform_2, window_bounds = array<i64: 4, 4, 128>}, {transform_indices = @transform_3, window_bounds = array<i64: 4, 128, 4>}, {transform_indices = @transform_4, window_bounds = array<i64: 4, 32, 128>}]} {
    %c0 = arith.constant 0 : index
    %c0_0 = arith.constant 0 : index
    %c0_1 = arith.constant 0 : index
    %0 = vector.load %arg4[%c0, %c0_0, %c0_1] : memref<4x128x4xf32, #tpu.memory_space<vmem>>, vector<1x128x4xf32>
    %1 = vector.shape_cast %0 : vector<1x128x4xf32> to vector<128x4xf32>
    %c0_2 = arith.constant 0 : index
    %c0_3 = arith.constant 0 : index
    %c0_4 = arith.constant 0 : index
    %2 = vector.load %arg2[%c0_2, %c0_3, %c0_4] : memref<4x4x128xf32, #tpu.memory_space<vmem>>, vector<1x4x128xf32>
    %3 = vector.shape_cast %2 : vector<1x4x128xf32> to vector<4x128xf32>
    %c0_5 = arith.constant 0 : index
    %c0_6 = arith.constant 0 : index
    %c0_7 = arith.constant 0 : index
    %4 = vector.load %arg3[%c0_5, %c0_6, %c0_7] : memref<4x4x128xf32, #tpu.memory_space<vmem>>, vector<1x4x128xf32>
    %5 = vector.shape_cast %4 : vector<1x4x128xf32> to vector<4x128xf32>
    %6 = arith.mulf %5, %5 : vector<4x128xf32>
    %7 = vector.extract_strided_slice %1 {offsets = [0, 0], sizes = [128, 1], strides = [1, 1]} : vector<128x4xf32> to vector<128x1xf32>
    %8 = vector.extract_strided_slice %3 {offsets = [0, 0], sizes = [1, 128], strides = [1, 1]} : vector<4x128xf32> to vector<1x128xf32>
    %9 = vector.broadcast %7 : vector<128x1xf32> to vector<128x128xf32>
    %10 = vector.broadcast %8 : vector<1x128xf32> to vector<128x128xf32>
    %11 = arith.subf %9, %10 : vector<128x128xf32>
    %12 = arith.mulf %11, %11 : vector<128x128xf32>
    %13 = vector.extract_strided_slice %6 {offsets = [0, 0], sizes = [1, 128], strides = [1, 1]} : vector<4x128xf32> to vector<1x128xf32>
    %14 = vector.broadcast %13 : vector<1x128xf32> to vector<128x128xf32>
    %15 = arith.addf %12, %14 : vector<128x128xf32>
    %16 = vector.extract_strided_slice %1 {offsets = [0, 1], sizes = [128, 1], strides = [1, 1]} : vector<128x4xf32> to vector<128x1xf32>
    %17 = vector.extract_strided_slice %3 {offsets = [1, 0], sizes = [1, 128], strides = [1, 1]} : vector<4x128xf32> to vector<1x128xf32>
    %18 = vector.broadcast %16 : vector<128x1xf32> to vector<128x128xf32>
    %19 = vector.broadcast %17 : vector<1x128xf32> to vector<128x128xf32>
    %20 = arith.subf %18, %19 : vector<128x128xf32>
    %21 = arith.mulf %20, %20 : vector<128x128xf32>
    %22 = vector.extract_strided_slice %6 {offsets = [1, 0], sizes = [1, 128], strides = [1, 1]} : vector<4x128xf32> to vector<1x128xf32>
    %23 = vector.broadcast %22 : vector<1x128xf32> to vector<128x128xf32>
    %24 = arith.addf %21, %23 : vector<128x128xf32>
    %25 = arith.mulf %15, %24 : vector<128x128xf32>
    %26 = vector.extract_strided_slice %1 {offsets = [0, 2], sizes = [128, 1], strides = [1, 1]} : vector<128x4xf32> to vector<128x1xf32>
    %27 = vector.extract_strided_slice %3 {offsets = [2, 0], sizes = [1, 128], strides = [1, 1]} : vector<4x128xf32> to vector<1x128xf32>
    %28 = vector.broadcast %26 : vector<128x1xf32> to vector<128x128xf32>
    %29 = vector.broadcast %27 : vector<1x128xf32> to vector<128x128xf32>
    %30 = arith.subf %28, %29 : vector<128x128xf32>
    %31 = arith.mulf %30, %30 : vector<128x128xf32>
    %32 = vector.extract_strided_slice %6 {offsets = [2, 0], sizes = [1, 128], strides = [1, 1]} : vector<4x128xf32> to vector<1x128xf32>
    %33 = vector.broadcast %32 : vector<1x128xf32> to vector<128x128xf32>
    %34 = arith.addf %31, %33 : vector<128x128xf32>
    %35 = arith.mulf %25, %34 : vector<128x128xf32>
    %36 = vector.extract_strided_slice %1 {offsets = [0, 3], sizes = [128, 1], strides = [1, 1]} : vector<128x4xf32> to vector<128x1xf32>
    %37 = vector.extract_strided_slice %3 {offsets = [3, 0], sizes = [1, 128], strides = [1, 1]} : vector<4x128xf32> to vector<1x128xf32>
    %38 = vector.broadcast %36 : vector<128x1xf32> to vector<128x128xf32>
    %39 = vector.broadcast %37 : vector<1x128xf32> to vector<128x128xf32>
    %40 = arith.subf %38, %39 : vector<128x128xf32>
    %41 = arith.mulf %40, %40 : vector<128x128xf32>
    %42 = vector.extract_strided_slice %6 {offsets = [3, 0], sizes = [1, 128], strides = [1, 1]} : vector<4x128xf32> to vector<1x128xf32>
    %43 = vector.broadcast %42 : vector<1x128xf32> to vector<128x128xf32>
    %44 = arith.addf %41, %43 : vector<128x128xf32>
    %45 = arith.mulf %35, %44 : vector<128x128xf32>
    %46 = tpu.reciprocal %45 {approx = true} : vector<128x128xf32> -> vector<128x128xf32>
    %47 = arith.mulf %45, %46 : vector<128x128xf32>
    %cst = arith.constant 2.000000e+00 : f32
    %48 = vector.broadcast %cst : f32 to vector<128x128xf32>
    %49 = arith.subf %48, %47 : vector<128x128xf32>
    %50 = arith.mulf %46, %49 : vector<128x128xf32>
    %cst_8 = arith.constant dense<0.000000e+00> : vector<128xf32>
    %51 = vector.multi_reduction <add>, %50, %cst_8 [0] : vector<128x128xf32> to vector<128xf32>
    %52 = vector.shape_cast %51 : vector<128xf32> to vector<1x128xf32>
    %53 = tpu.reciprocal %52 {approx = true} : vector<1x128xf32> -> vector<1x128xf32>
    %54 = vector.broadcast %53 : vector<1x128xf32> to vector<128x128xf32>
    %55 = arith.mulf %50, %54 : vector<128x128xf32>
    %c0_9 = arith.constant 0 : index
    %c0_10 = arith.constant 0 : index
    %c0_11 = arith.constant 0 : index
    %56 = vector.load %arg1[%c0_9, %c0_10, %c0_11] : memref<4x32x128xf32, #tpu.memory_space<vmem>>, vector<1x32x128xf32>
    %57 = vector.shape_cast %56 : vector<1x32x128xf32> to vector<32x128xf32>
    %cst_12 = arith.constant dense<0.000000e+00> : vector<32x128xf32>
    %58 = tpu.matmul %57, %55, %cst_12 {dimension_numbers = #tpu.dot_dimension_numbers<[1], [0], [0], [1], [0, 0, 1, 1], [], []>} : vector<32x128xf32>, vector<128x128xf32>, vector<32x128xf32> -> vector<32x128xf32>
    %c0_13 = arith.constant 0 : index
    %c0_14 = arith.constant 0 : index
    %c0_15 = arith.constant 0 : index
    %59 = vector.load %arg5[%c0_13, %c0_14, %c0_15] : memref<4x32x128xf32, #tpu.memory_space<vmem>>, vector<1x32x128xf32>
    %60 = vector.shape_cast %59 : vector<1x32x128xf32> to vector<32x128xf32>
    %61 = vector.shape_cast %58 : vector<32x128xf32> to vector<1x32x128xf32>
    tpu.vector_store %arg5[%c0_13, %c0_14, %c0_15], %61 {strides = array<i32>} : memref<4x32x128xf32, #tpu.memory_space<vmem>>, vector<1x32x128xf32>,
    %c1 = arith.constant 1 : index
    %c0_16 = arith.constant 0 : index
    %c0_17 = arith.constant 0 : index
    %62 = vector.load %arg4[%c1, %c0_16, %c0_17] : memref<4x128x4xf32, #tpu.memory_space<vmem>>, vector<1x128x4xf32>
    %63 = vector.shape_cast %62 : vector<1x128x4xf32> to vector<128x4xf32>
    %c1_18 = arith.constant 1 : index
    %c0_19 = arith.constant 0 : index
    %c0_20 = arith.constant 0 : index
    %64 = vector.load %arg2[%c1_18, %c0_19, %c0_20] : memref<4x4x128xf32, #tpu.memory_space<vmem>>, vector<1x4x128xf32>
    %65 = vector.shape_cast %64 : vector<1x4x128xf32> to vector<4x128xf32>
    %c1_21 = arith.constant 1 : index
    %c0_22 = arith.constant 0 : index
    %c0_23 = arith.constant 0 : index
    %66 = vector.load %arg3[%c1_21, %c0_22, %c0_23] : memref<4x4x128xf32, #tpu.memory_space<vmem>>, vector<1x4x128xf32>
    %67 = vector.shape_cast %66 : vector<1x4x128xf32> to vector<4x128xf32>
    %68 = arith.mulf %67, %67 : vector<4x128xf32>
    %69 = vector.extract_strided_slice %63 {offsets = [0, 0], sizes = [128, 1], strides = [1, 1]} : vector<128x4xf32> to vector<128x1xf32>
    %70 = vector.extract_strided_slice %65 {offsets = [0, 0], sizes = [1, 128], strides = [1, 1]} : vector<4x128xf32> to vector<1x128xf32>
    %71 = vector.broadcast %69 : vector<128x1xf32> to vector<128x128xf32>
    %72 = vector.broadcast %70 : vector<1x128xf32> to vector<128x128xf32>
    %73 = arith.subf %71, %72 : vector<128x128xf32>
    %74 = arith.mulf %73, %73 : vector<128x128xf32>
    %75 = vector.extract_strided_slice %68 {offsets = [0, 0], sizes = [1, 128], strides = [1, 1]} : vector<4x128xf32> to vector<1x128xf32>
    %76 = vector.broadcast %75 : vector<1x128xf32> to vector<128x128xf32>
    %77 = arith.addf %74, %76 : vector<128x128xf32>
    %78 = vector.extract_strided_slice %63 {offsets = [0, 1], sizes = [128, 1], strides = [1, 1]} : vector<128x4xf32> to vector<128x1xf32>
    %79 = vector.extract_strided_slice %65 {offsets = [1, 0], sizes = [1, 128], strides = [1, 1]} : vector<4x128xf32> to vector<1x128xf32>
    %80 = vector.broadcast %78 : vector<128x1xf32> to vector<128x128xf32>
    %81 = vector.broadcast %79 : vector<1x128xf32> to vector<128x128xf32>
    %82 = arith.subf %80, %81 : vector<128x128xf32>
    %83 = arith.mulf %82, %82 : vector<128x128xf32>
    %84 = vector.extract_strided_slice %68 {offsets = [1, 0], sizes = [1, 128], strides = [1, 1]} : vector<4x128xf32> to vector<1x128xf32>
    %85 = vector.broadcast %84 : vector<1x128xf32> to vector<128x128xf32>
    %86 = arith.addf %83, %85 : vector<128x128xf32>
    %87 = arith.mulf %77, %86 : vector<128x128xf32>
    %88 = vector.extract_strided_slice %63 {offsets = [0, 2], sizes = [128, 1], strides = [1, 1]} : vector<128x4xf32> to vector<128x1xf32>
    %89 = vector.extract_strided_slice %65 {offsets = [2, 0], sizes = [1, 128], strides = [1, 1]} : vector<4x128xf32> to vector<1x128xf32>
    %90 = vector.broadcast %88 : vector<128x1xf32> to vector<128x128xf32>
    %91 = vector.broadcast %89 : vector<1x128xf32> to vector<128x128xf32>
    %92 = arith.subf %90, %91 : vector<128x128xf32>
    %93 = arith.mulf %92, %92 : vector<128x128xf32>
    %94 = vector.extract_strided_slice %68 {offsets = [2, 0], sizes = [1, 128], strides = [1, 1]} : vector<4x128xf32> to vector<1x128xf32>
    %95 = vector.broadcast %94 : vector<1x128xf32> to vector<128x128xf32>
    %96 = arith.addf %93, %95 : vector<128x128xf32>
    %97 = arith.mulf %87, %96 : vector<128x128xf32>
    %98 = vector.extract_strided_slice %63 {offsets = [0, 3], sizes = [128, 1], strides = [1, 1]} : vector<128x4xf32> to vector<128x1xf32>
    %99 = vector.extract_strided_slice %65 {offsets = [3, 0], sizes = [1, 128], strides = [1, 1]} : vector<4x128xf32> to vector<1x128xf32>
    %100 = vector.broadcast %98 : vector<128x1xf32> to vector<128x128xf32>
    %101 = vector.broadcast %99 : vector<1x128xf32> to vector<128x128xf32>
    %102 = arith.subf %100, %101 : vector<128x128xf32>
    %103 = arith.mulf %102, %102 : vector<128x128xf32>
    %104 = vector.extract_strided_slice %68 {offsets = [3, 0], sizes = [1, 128], strides = [1, 1]} : vector<4x128xf32> to vector<1x128xf32>
    %105 = vector.broadcast %104 : vector<1x128xf32> to vector<128x128xf32>
    %106 = arith.addf %103, %105 : vector<128x128xf32>
    %107 = arith.mulf %97, %106 : vector<128x128xf32>
    %108 = tpu.reciprocal %107 {approx = true} : vector<128x128xf32> -> vector<128x128xf32>
    %109 = arith.mulf %107, %108 : vector<128x128xf32>
    %cst_24 = arith.constant 2.000000e+00 : f32
    %110 = vector.broadcast %cst_24 : f32 to vector<128x128xf32>
    %111 = arith.subf %110, %109 : vector<128x128xf32>
    %112 = arith.mulf %108, %111 : vector<128x128xf32>
    %cst_25 = arith.constant dense<0.000000e+00> : vector<128xf32>
    %113 = vector.multi_reduction <add>, %112, %cst_25 [0] : vector<128x128xf32> to vector<128xf32>
    %114 = vector.shape_cast %113 : vector<128xf32> to vector<1x128xf32>
    %115 = tpu.reciprocal %114 {approx = true} : vector<1x128xf32> -> vector<1x128xf32>
    %116 = vector.broadcast %115 : vector<1x128xf32> to vector<128x128xf32>
    %117 = arith.mulf %112, %116 : vector<128x128xf32>
    %c1_26 = arith.constant 1 : index
    %c0_27 = arith.constant 0 : index
    %c0_28 = arith.constant 0 : index
    %118 = vector.load %arg1[%c1_26, %c0_27, %c0_28] : memref<4x32x128xf32, #tpu.memory_space<vmem>>, vector<1x32x128xf32>
    %119 = vector.shape_cast %118 : vector<1x32x128xf32> to vector<32x128xf32>
    %cst_29 = arith.constant dense<0.000000e+00> : vector<32x128xf32>
    %120 = tpu.matmul %119, %117, %cst_29 {dimension_numbers = #tpu.dot_dimension_numbers<[1], [0], [0], [1], [0, 0, 1, 1], [], []>} : vector<32x128xf32>, vector<128x128xf32>, vector<32x128xf32> -> vector<32x128xf32>
    %c1_30 = arith.constant 1 : index
    %c0_31 = arith.constant 0 : index
    %c0_32 = arith.constant 0 : index
    %121 = vector.load %arg5[%c1_30, %c0_31, %c0_32] : memref<4x32x128xf32, #tpu.memory_space<vmem>>, vector<1x32x128xf32>
    %122 = vector.shape_cast %121 : vector<1x32x128xf32> to vector<32x128xf32>
    %123 = vector.shape_cast %120 : vector<32x128xf32> to vector<1x32x128xf32>
    tpu.vector_store %arg5[%c1_30, %c0_31, %c0_32], %123 {strides = array<i32>} : memref<4x32x128xf32, #tpu.memory_space<vmem>>, vector<1x32x128xf32>,
    %c2 = arith.constant 2 : index
    %c0_33 = arith.constant 0 : index
    %c0_34 = arith.constant 0 : index
    %124 = vector.load %arg4[%c2, %c0_33, %c0_34] : memref<4x128x4xf32, #tpu.memory_space<vmem>>, vector<1x128x4xf32>
    %125 = vector.shape_cast %124 : vector<1x128x4xf32> to vector<128x4xf32>
    %c2_35 = arith.constant 2 : index
    %c0_36 = arith.constant 0 : index
    %c0_37 = arith.constant 0 : index
    %126 = vector.load %arg2[%c2_35, %c0_36, %c0_37] : memref<4x4x128xf32, #tpu.memory_space<vmem>>, vector<1x4x128xf32>
    %127 = vector.shape_cast %126 : vector<1x4x128xf32> to vector<4x128xf32>
    %c2_38 = arith.constant 2 : index
    %c0_39 = arith.constant 0 : index
    %c0_40 = arith.constant 0 : index
    %128 = vector.load %arg3[%c2_38, %c0_39, %c0_40] : memref<4x4x128xf32, #tpu.memory_space<vmem>>, vector<1x4x128xf32>
    %129 = vector.shape_cast %128 : vector<1x4x128xf32> to vector<4x128xf32>
    %130 = arith.mulf %129, %129 : vector<4x128xf32>
    %131 = vector.extract_strided_slice %125 {offsets = [0, 0], sizes = [128, 1], strides = [1, 1]} : vector<128x4xf32> to vector<128x1xf32>
    %132 = vector.extract_strided_slice %127 {offsets = [0, 0], sizes = [1, 128], strides = [1, 1]} : vector<4x128xf32> to vector<1x128xf32>
    %133 = vector.broadcast %131 : vector<128x1xf32> to vector<128x128xf32>
    %134 = vector.broadcast %132 : vector<1x128xf32> to vector<128x128xf32>
    %135 = arith.subf %133, %134 : vector<128x128xf32>
    %136 = arith.mulf %135, %135 : vector<128x128xf32>
    %137 = vector.extract_strided_slice %130 {offsets = [0, 0], sizes = [1, 128], strides = [1, 1]} : vector<4x128xf32> to vector<1x128xf32>
    %138 = vector.broadcast %137 : vector<1x128xf32> to vector<128x128xf32>
    %139 = arith.addf %136, %138 : vector<128x128xf32>
    %140 = vector.extract_strided_slice %125 {offsets = [0, 1], sizes = [128, 1], strides = [1, 1]} : vector<128x4xf32> to vector<128x1xf32>
    %141 = vector.extract_strided_slice %127 {offsets = [1, 0], sizes = [1, 128], strides = [1, 1]} : vector<4x128xf32> to vector<1x128xf32>
    %142 = vector.broadcast %140 : vector<128x1xf32> to vector<128x128xf32>
    %143 = vector.broadcast %141 : vector<1x128xf32> to vector<128x128xf32>
    %144 = arith.subf %142, %143 : vector<128x128xf32>
    %145 = arith.mulf %144, %144 : vector<128x128xf32>
    %146 = vector.extract_strided_slice %130 {offsets = [1, 0], sizes = [1, 128], strides = [1, 1]} : vector<4x128xf32> to vector<1x128xf32>
    %147 = vector.broadcast %146 : vector<1x128xf32> to vector<128x128xf32>
    %148 = arith.addf %145, %147 : vector<128x128xf32>
    %149 = arith.mulf %139, %148 : vector<128x128xf32>
    %150 = vector.extract_strided_slice %125 {offsets = [0, 2], sizes = [128, 1], strides = [1, 1]} : vector<128x4xf32> to vector<128x1xf32>
    %151 = vector.extract_strided_slice %127 {offsets = [2, 0], sizes = [1, 128], strides = [1, 1]} : vector<4x128xf32> to vector<1x128xf32>
    %152 = vector.broadcast %150 : vector<128x1xf32> to vector<128x128xf32>
    %153 = vector.broadcast %151 : vector<1x128xf32> to vector<128x128xf32>
    %154 = arith.subf %152, %153 : vector<128x128xf32>
    %155 = arith.mulf %154, %154 : vector<128x128xf32>
    %156 = vector.extract_strided_slice %130 {offsets = [2, 0], sizes = [1, 128], strides = [1, 1]} : vector<4x128xf32> to vector<1x128xf32>
    %157 = vector.broadcast %156 : vector<1x128xf32> to vector<128x128xf32>
    %158 = arith.addf %155, %157 : vector<128x128xf32>
    %159 = arith.mulf %149, %158 : vector<128x128xf32>
    %160 = vector.extract_strided_slice %125 {offsets = [0, 3], sizes = [128, 1], strides = [1, 1]} : vector<128x4xf32> to vector<128x1xf32>
    %161 = vector.extract_strided_slice %127 {offsets = [3, 0], sizes = [1, 128], strides = [1, 1]} : vector<4x128xf32> to vector<1x128xf32>
    %162 = vector.broadcast %160 : vector<128x1xf32> to vector<128x128xf32>
    %163 = vector.broadcast %161 : vector<1x128xf32> to vector<128x128xf32>
    %164 = arith.subf %162, %163 : vector<128x128xf32>
    %165 = arith.mulf %164, %164 : vector<128x128xf32>
    %166 = vector.extract_strided_slice %130 {offsets = [3, 0], sizes = [1, 128], strides = [1, 1]} : vector<4x128xf32> to vector<1x128xf32>
    %167 = vector.broadcast %166 : vector<1x128xf32> to vector<128x128xf32>
    %168 = arith.addf %165, %167 : vector<128x128xf32>
    %169 = arith.mulf %159, %168 : vector<128x128xf32>
    %170 = tpu.reciprocal %169 {approx = true} : vector<128x128xf32> -> vector<128x128xf32>
    %171 = arith.mulf %169, %170 : vector<128x128xf32>
    %cst_41 = arith.constant 2.000000e+00 : f32
    %172 = vector.broadcast %cst_41 : f32 to vector<128x128xf32>
    %173 = arith.subf %172, %171 : vector<128x128xf32>
    %174 = arith.mulf %170, %173 : vector<128x128xf32>
    %cst_42 = arith.constant dense<0.000000e+00> : vector<128xf32>
    %175 = vector.multi_reduction <add>, %174, %cst_42 [0] : vector<128x128xf32> to vector<128xf32>
    %176 = vector.shape_cast %175 : vector<128xf32> to vector<1x128xf32>
    %177 = tpu.reciprocal %176 {approx = true} : vector<1x128xf32> -> vector<1x128xf32>
    %178 = vector.broadcast %177 : vector<1x128xf32> to vector<128x128xf32>
    %179 = arith.mulf %174, %178 : vector<128x128xf32>
    %c2_43 = arith.constant 2 : index
    %c0_44 = arith.constant 0 : index
    %c0_45 = arith.constant 0 : index
    %180 = vector.load %arg1[%c2_43, %c0_44, %c0_45] : memref<4x32x128xf32, #tpu.memory_space<vmem>>, vector<1x32x128xf32>
    %181 = vector.shape_cast %180 : vector<1x32x128xf32> to vector<32x128xf32>
    %cst_46 = arith.constant dense<0.000000e+00> : vector<32x128xf32>
    %182 = tpu.matmul %181, %179, %cst_46 {dimension_numbers = #tpu.dot_dimension_numbers<[1], [0], [0], [1], [0, 0, 1, 1], [], []>} : vector<32x128xf32>, vector<128x128xf32>, vector<32x128xf32> -> vector<32x128xf32>
    %c2_47 = arith.constant 2 : index
    %c0_48 = arith.constant 0 : index
    %c0_49 = arith.constant 0 : index
    %183 = vector.load %arg5[%c2_47, %c0_48, %c0_49] : memref<4x32x128xf32, #tpu.memory_space<vmem>>, vector<1x32x128xf32>
    %184 = vector.shape_cast %183 : vector<1x32x128xf32> to vector<32x128xf32>
    %185 = vector.shape_cast %182 : vector<32x128xf32> to vector<1x32x128xf32>
    tpu.vector_store %arg5[%c2_47, %c0_48, %c0_49], %185 {strides = array<i32>} : memref<4x32x128xf32, #tpu.memory_space<vmem>>, vector<1x32x128xf32>,
    %c3 = arith.constant 3 : index
    %c0_50 = arith.constant 0 : index
    %c0_51 = arith.constant 0 : index
    %186 = vector.load %arg4[%c3, %c0_50, %c0_51] : memref<4x128x4xf32, #tpu.memory_space<vmem>>, vector<1x128x4xf32>
    %187 = vector.shape_cast %186 : vector<1x128x4xf32> to vector<128x4xf32>
    %c3_52 = arith.constant 3 : index
    %c0_53 = arith.constant 0 : index
    %c0_54 = arith.constant 0 : index
    %188 = vector.load %arg2[%c3_52, %c0_53, %c0_54] : memref<4x4x128xf32, #tpu.memory_space<vmem>>, vector<1x4x128xf32>
    %189 = vector.shape_cast %188 : vector<1x4x128xf32> to vector<4x128xf32>
    %c3_55 = arith.constant 3 : index
    %c0_56 = arith.constant 0 : index
    %c0_57 = arith.constant 0 : index
    %190 = vector.load %arg3[%c3_55, %c0_56, %c0_57] : memref<4x4x128xf32, #tpu.memory_space<vmem>>, vector<1x4x128xf32>
    %191 = vector.shape_cast %190 : vector<1x4x128xf32> to vector<4x128xf32>
    %192 = arith.mulf %191, %191 : vector<4x128xf32>
    %193 = vector.extract_strided_slice %187 {offsets = [0, 0], sizes = [128, 1], strides = [1, 1]} : vector<128x4xf32> to vector<128x1xf32>
    %194 = vector.extract_strided_slice %189 {offsets = [0, 0], sizes = [1, 128], strides = [1, 1]} : vector<4x128xf32> to vector<1x128xf32>
    %195 = vector.broadcast %193 : vector<128x1xf32> to vector<128x128xf32>
    %196 = vector.broadcast %194 : vector<1x128xf32> to vector<128x128xf32>
    %197 = arith.subf %195, %196 : vector<128x128xf32>
    %198 = arith.mulf %197, %197 : vector<128x128xf32>
    %199 = vector.extract_strided_slice %192 {offsets = [0, 0], sizes = [1, 128], strides = [1, 1]} : vector<4x128xf32> to vector<1x128xf32>
    %200 = vector.broadcast %199 : vector<1x128xf32> to vector<128x128xf32>
    %201 = arith.addf %198, %200 : vector<128x128xf32>
    %202 = vector.extract_strided_slice %187 {offsets = [0, 1], sizes = [128, 1], strides = [1, 1]} : vector<128x4xf32> to vector<128x1xf32>
    %203 = vector.extract_strided_slice %189 {offsets = [1, 0], sizes = [1, 128], strides = [1, 1]} : vector<4x128xf32> to vector<1x128xf32>
    %204 = vector.broadcast %202 : vector<128x1xf32> to vector<128x128xf32>
    %205 = vector.broadcast %203 : vector<1x128xf32> to vector<128x128xf32>
    %206 = arith.subf %204, %205 : vector<128x128xf32>
    %207 = arith.mulf %206, %206 : vector<128x128xf32>
    %208 = vector.extract_strided_slice %192 {offsets = [1, 0], sizes = [1, 128], strides = [1, 1]} : vector<4x128xf32> to vector<1x128xf32>
    %209 = vector.broadcast %208 : vector<1x128xf32> to vector<128x128xf32>
    %210 = arith.addf %207, %209 : vector<128x128xf32>
    %211 = arith.mulf %201, %210 : vector<128x128xf32>
    %212 = vector.extract_strided_slice %187 {offsets = [0, 2], sizes = [128, 1], strides = [1, 1]} : vector<128x4xf32> to vector<128x1xf32>
    %213 = vector.extract_strided_slice %189 {offsets = [2, 0], sizes = [1, 128], strides = [1, 1]} : vector<4x128xf32> to vector<1x128xf32>
    %214 = vector.broadcast %212 : vector<128x1xf32> to vector<128x128xf32>
    %215 = vector.broadcast %213 : vector<1x128xf32> to vector<128x128xf32>
    %216 = arith.subf %214, %215 : vector<128x128xf32>
    %217 = arith.mulf %216, %216 : vector<128x128xf32>
    %218 = vector.extract_strided_slice %192 {offsets = [2, 0], sizes = [1, 128], strides = [1, 1]} : vector<4x128xf32> to vector<1x128xf32>
    %219 = vector.broadcast %218 : vector<1x128xf32> to vector<128x128xf32>
    %220 = arith.addf %217, %219 : vector<128x128xf32>
    %221 = arith.mulf %211, %220 : vector<128x128xf32>
    %222 = vector.extract_strided_slice %187 {offsets = [0, 3], sizes = [128, 1], strides = [1, 1]} : vector<128x4xf32> to vector<128x1xf32>
    %223 = vector.extract_strided_slice %189 {offsets = [3, 0], sizes = [1, 128], strides = [1, 1]} : vector<4x128xf32> to vector<1x128xf32>
    %224 = vector.broadcast %222 : vector<128x1xf32> to vector<128x128xf32>
    %225 = vector.broadcast %223 : vector<1x128xf32> to vector<128x128xf32>
    %226 = arith.subf %224, %225 : vector<128x128xf32>
    %227 = arith.mulf %226, %226 : vector<128x128xf32>
    %228 = vector.extract_strided_slice %192 {offsets = [3, 0], sizes = [1, 128], strides = [1, 1]} : vector<4x128xf32> to vector<1x128xf32>
    %229 = vector.broadcast %228 : vector<1x128xf32> to vector<128x128xf32>
    %230 = arith.addf %227, %229 : vector<128x128xf32>
    %231 = arith.mulf %221, %230 : vector<128x128xf32>
    %232 = tpu.reciprocal %231 {approx = true} : vector<128x128xf32> -> vector<128x128xf32>
    %233 = arith.mulf %231, %232 : vector<128x128xf32>
    %cst_58 = arith.constant 2.000000e+00 : f32
    %234 = vector.broadcast %cst_58 : f32 to vector<128x128xf32>
    %235 = arith.subf %234, %233 : vector<128x128xf32>
    %236 = arith.mulf %232, %235 : vector<128x128xf32>
    %cst_59 = arith.constant dense<0.000000e+00> : vector<128xf32>
    %237 = vector.multi_reduction <add>, %236, %cst_59 [0] : vector<128x128xf32> to vector<128xf32>
    %238 = vector.shape_cast %237 : vector<128xf32> to vector<1x128xf32>
    %239 = tpu.reciprocal %238 {approx = true} : vector<1x128xf32> -> vector<1x128xf32>
    %240 = vector.broadcast %239 : vector<1x128xf32> to vector<128x128xf32>
    %241 = arith.mulf %236, %240 : vector<128x128xf32>
    %c3_60 = arith.constant 3 : index
    %c0_61 = arith.constant 0 : index
    %c0_62 = arith.constant 0 : index
    %242 = vector.load %arg1[%c3_60, %c0_61, %c0_62] : memref<4x32x128xf32, #tpu.memory_space<vmem>>, vector<1x32x128xf32>
    %243 = vector.shape_cast %242 : vector<1x32x128xf32> to vector<32x128xf32>
    %cst_63 = arith.constant dense<0.000000e+00> : vector<32x128xf32>
    %244 = tpu.matmul %243, %241, %cst_63 {dimension_numbers = #tpu.dot_dimension_numbers<[1], [0], [0], [1], [0, 0, 1, 1], [], []>} : vector<32x128xf32>, vector<128x128xf32>, vector<32x128xf32> -> vector<32x128xf32>
    %c3_64 = arith.constant 3 : index
    %c0_65 = arith.constant 0 : index
    %c0_66 = arith.constant 0 : index
    %245 = vector.load %arg5[%c3_64, %c0_65, %c0_66] : memref<4x32x128xf32, #tpu.memory_space<vmem>>, vector<1x32x128xf32>
    %246 = vector.shape_cast %245 : vector<1x32x128xf32> to vector<32x128xf32>
    %247 = vector.shape_cast %244 : vector<32x128xf32> to vector<1x32x128xf32>
    tpu.vector_store %arg5[%c3_64, %c0_65, %c0_66], %247 {strides = array<i32>} : memref<4x32x128xf32, #tpu.memory_space<vmem>>, vector<1x32x128xf32>,
    return
  }
  func.func @transform_0(%arg0: i32) -> (i32, i32, i32) {
    %c0_i32 = arith.constant 0 : i32
    %c0_i32_0 = arith.constant 0 : i32
    %c0_i32_1 = arith.constant 0 : i32
    return %arg0, %c0_i32, %c0_i32_0 : i32, i32, i32
  }
  func.func @transform_1(%arg0: i32) -> (i32, i32, i32) {
    %c0_i32 = arith.constant 0 : i32
    %c0_i32_0 = arith.constant 0 : i32
    %c0_i32_1 = arith.constant 0 : i32
    return %arg0, %c0_i32, %c0_i32_0 : i32, i32, i32
  }
  func.func @transform_2(%arg0: i32) -> (i32, i32, i32) {
    %c0_i32 = arith.constant 0 : i32
    %c0_i32_0 = arith.constant 0 : i32
    %c0_i32_1 = arith.constant 0 : i32
    return %arg0, %c0_i32, %c0_i32_0 : i32, i32, i32
  }
  func.func @transform_3(%arg0: i32) -> (i32, i32, i32) {
    %c0_i32 = arith.constant 0 : i32
    %c0_i32_0 = arith.constant 0 : i32
    %c0_i32_1 = arith.constant 0 : i32
    return %arg0, %c0_i32, %c0_i32_0 : i32, i32, i32
  }
  func.func @transform_4(%arg0: i32) -> (i32, i32, i32) {
    %c0_i32 = arith.constant 0 : i32
    %c0_i32_0 = arith.constant 0 : i32
    %c0_i32_1 = arith.constant 0 : i32
    return %arg0, %c0_i32, %c0_i32_0 : i32, i32, i32
  }
}

</mosaic_0001>

<llo_original>
// kernel: tpu_custom_call.1
$region0: #{tpu_custom_call.1}
  #allocation0 [shape = 'u32[]', space=smem, size = 0x4, offset = 0x4, fixed_abs, tag = 'smem constant byte address 0x4 - core index']
  #allocation1 [shape = 'u32[144,128]{1,0:T(1,128)}', space=vmem, size = 0x12000, scoped, tag = 'internal scratch']
  %s0 = inlined_call_operand.vmem [shape: f32[8,32,128], index: 0, kind: input, shape index: {}]
  %s1 = inlined_call_operand.vmem [shape: f32[8,4,128], index: 1, kind: input, shape index: {}]
  %s2 = inlined_call_operand.vmem [shape: f32[8,4,128], index: 2, kind: input, shape index: {}]
  %s3 = inlined_call_operand.vmem [shape: f32[8,128,4], index: 3, kind: input, shape index: {}]
  %s4 = inlined_call_operand.hbm [shape: f32[8,32,128], index: 4, kind: output, shape index: {}]
  %s5 = sld [smem:[#allocation0]]
  $region49: #{tpu_custom_call.1} parent=0
    _
  %s7 = ssub.s32 1, %s5
  %s8 = scalar_select 0, %s7, %s5
  $region1: #{tpu_custom_call.1} parent=0
    #allocation2 [shape = 'u8[131072]{0}', space=vmem, size = 0x20000, scoped, tag = 'output window, operand 0']
    #allocation3 [shape = 's32[2]{0}', space=sflag, size = 0x8, scoped, tag = 'scoped memory for tpu_custom_call.1']
    %9 = vsyncpa [#allocation3], 0
    %s10 = scalar_lea.sflag [#allocation3], 1
    %11 = vsyncpa %s10, 0
    loop: start=0, step=1, limit=4
    $region2: #{tpu_custom_call.1} parent=1 // loop_pre_header
      _
    $region3: #{tpu_custom_call.1} parent=1 // loop_header
      %s13 = sphi 0, %s17
      %p14 = scmp.ge.s32.totalorder %s13, 4
      %s23 = sphi 0, %s25
      %s26 = sphi 0, %s23
      %s27 = sphi 0, %s26
      %s43 = sphi 0, %s27
      %s49 = sphi 0, %s51
      %s52 = sphi 0, %s49
      %s53 = sphi 0, %s52
      %s69 = sphi 0, %s53
      %s75 = sphi 0, %s77
      %s78 = sphi 0, %s75
      %s79 = sphi 0, %s78
      %s95 = sphi 0, %s79
      %s101 = sphi 0, %s103
      %s104 = sphi 0, %s101
      %s105 = sphi 0, %s104
      %s121 = sphi 0, %s105
      %s127 = sphi 0, %s129
      %s130 = sphi 0, %s127
      %s131 = sphi 0, %s130
      %s147 = sphi 0, %s131
    $region4: #{tpu_custom_call.1} parent=1 // loop_header_branch
      %16 = sbr.rel (%p14) target = $region8
    $region5: #{tpu_custom_call.1} parent=1 // loop_body
      %s18 = ssub.s32 %s13, 1
      %s19 = ssub.s32 %s13, 2
      %s20 = sadd.s32 %s13, 1
      %s21 = ssub.s32 %s13, %s20
      %p22 = scmp.eq.s32.totalorder %s21, 0
      %s24 = sadd.s32 %s23, 1
      %s25 = scalar_select %p22, %s23, %s24
      %p28 = pneg %p22
      %p29 = scmp.eq.s32.totalorder %s13, 1
      %p30 = por %p28, %p29
      %p31 = scmp.ne.s32.totalorder %s23, %s26
      %p32 = scmp.eq.s32.totalorder %s13, 0
      %p33 = por %p31, %p32
      %p34 = scmp.ne.s32.totalorder %s23, %s26
      %p35 = scmp.eq.s32.totalorder %s18, 1
      %p36 = por %p34, %p35
      %p37 = scmp.ne.s32.totalorder %s26, %s27
      %p38 = scmp.eq.s32.totalorder %s18, 0
      %p39 = por %p37, %p38
      %p40 = scmp.ne.s32.totalorder %s26, %s27
      %p41 = scmp.eq.s32.totalorder %s19, 1
      %p42 = por %p40, %p41
      %p44 = scmp.ne.s32.totalorder %s27, %s43
      %p45 = scmp.eq.s32.totalorder %s19, 0
      %p46 = por %p44, %p45
      %s47 = ssub.s32 %s13, %s20
      %p48 = scmp.eq.s32.totalorder %s47, 0
      %s50 = sadd.s32 %s49, 1
      %s51 = scalar_select %p48, %s49, %s50
      %p54 = pneg %p48
      %p55 = scmp.eq.s32.totalorder %s13, 1
      %p56 = por %p54, %p55
      %p57 = scmp.ne.s32.totalorder %s49, %s52
      %p58 = scmp.eq.s32.totalorder %s13, 0
      %p59 = por %p57, %p58
      %p60 = scmp.ne.s32.totalorder %s49, %s52
      %p61 = scmp.eq.s32.totalorder %s18, 1
      %p62 = por %p60, %p61
      %p63 = scmp.ne.s32.totalorder %s52, %s53
      %p64 = scmp.eq.s32.totalorder %s18, 0
      %p65 = por %p63, %p64
      %p66 = scmp.ne.s32.totalorder %s52, %s53
      %p67 = scmp.eq.s32.totalorder %s19, 1
      %p68 = por %p66, %p67
      %p70 = scmp.ne.s32.totalorder %s53, %s69
      %p71 = scmp.eq.s32.totalorder %s19, 0
      %p72 = por %p70, %p71
      %s73 = ssub.s32 %s13, %s20
      %p74 = scmp.eq.s32.totalorder %s73, 0
      %s76 = sadd.s32 %s75, 1
      %s77 = scalar_select %p74, %s75, %s76
      %p80 = pneg %p74
      %p81 = scmp.eq.s32.totalorder %s13, 1
      %p82 = por %p80, %p81
      %p83 = scmp.ne.s32.totalorder %s75, %s78
      %p84 = scmp.eq.s32.totalorder %s13, 0
      %p85 = por %p83, %p84
      %p86 = scmp.ne.s32.totalorder %s75, %s78
      %p87 = scmp.eq.s32.totalorder %s18, 1
      %p88 = por %p86, %p87
      %p89 = scmp.ne.s32.totalorder %s78, %s79
      %p90 = scmp.eq.s32.totalorder %s18, 0
      %p91 = por %p89, %p90
      %p92 = scmp.ne.s32.totalorder %s78, %s79
      %p93 = scmp.eq.s32.totalorder %s19, 1
      %p94 = por %p92, %p93
      %p96 = scmp.ne.s32.totalorder %s79, %s95
      %p97 = scmp.eq.s32.totalorder %s19, 0
      %p98 = por %p96, %p97
      %s99 = ssub.s32 %s13, %s20
      %p100 = scmp.eq.s32.totalorder %s99, 0
      %s102 = sadd.s32 %s101, 1
      %s103 = scalar_select %p100, %s101, %s102
      %p106 = pneg %p100
      %p107 = scmp.eq.s32.totalorder %s13, 1
      %p108 = por %p106, %p107
      %p109 = scmp.ne.s32.totalorder %s101, %s104
      %p110 = scmp.eq.s32.totalorder %s13, 0
      %p111 = por %p109, %p110
      %p112 = scmp.ne.s32.totalorder %s101, %s104
      %p113 = scmp.eq.s32.totalorder %s18, 1
      %p114 = por %p112, %p113
      %p115 = scmp.ne.s32.totalorder %s104, %s105
      %p116 = scmp.eq.s32.totalorder %s18, 0
      %p117 = por %p115, %p116
      %p118 = scmp.ne.s32.totalorder %s104, %s105
      %p119 = scmp.eq.s32.totalorder %s19, 1
      %p120 = por %p118, %p119
      %p122 = scmp.ne.s32.totalorder %s105, %s121
      %p123 = scmp.eq.s32.totalorder %s19, 0
      %p124 = por %p122, %p123
      %s125 = ssub.s32 %s13, %s20
      %p126 = scmp.eq.s32.totalorder %s125, 0
      %s128 = sadd.s32 %s127, 1
      %s129 = scalar_select %p126, %s127, %s128
      %p132 = pneg %p126
      %p133 = scmp.eq.s32.totalorder %s13, 1
      %p134 = por %p132, %p133
      %p135 = scmp.ne.s32.totalorder %s127, %s130
      %p136 = scmp.eq.s32.totalorder %s13, 0
      %p137 = por %p135, %p136
      %p138 = scmp.ne.s32.totalorder %s127, %s130
      %p139 = scmp.eq.s32.totalorder %s18, 1
      %p140 = por %p138, %p139
      %p141 = scmp.ne.s32.totalorder %s130, %s131
      %p142 = scmp.eq.s32.totalorder %s18, 0
      %p143 = por %p141, %p142
      %p144 = scmp.ne.s32.totalorder %s130, %s131
      %p145 = scmp.eq.s32.totalorder %s19, 1
      %p146 = por %p144, %p145
      %p148 = scmp.ne.s32.totalorder %s131, %s147
      %p149 = scmp.eq.s32.totalorder %s19, 0
      %p150 = por %p148, %p149
      %p151 = scmp.le.s32.totalorder 1, %s13
      %p152 = scmp.lt.s32.totalorder %s13, 3
      %p153 = pnand %p151, %p152
      %p154 = pneg %p153
      // Predicated region
      $region9: #{tpu_custom_call.1} parent=5 // pred_check
        _
      $region10: #{tpu_custom_call.1} parent=5 // pred_check_branch
        %156 = sbr.rel (%p153) target = $region12
      $region11: #{tpu_custom_call.1} parent=5 // pred_region
        %s157 = ssub.s32 %s13, 1
      $region12: #{tpu_custom_call.1} parent=5 // pred_fallthru
        _
      %p158 = scmp.lt.s32.totalorder %s13, 2
      // Predicated region
      $region13: #{tpu_custom_call.1} parent=5 // pred_check
        %p159 = pneg %p158
      $region14: #{tpu_custom_call.1} parent=5 // pred_check_branch
        %161 = sbr.rel (%p159) target = $region16
      $region15: #{tpu_custom_call.1} parent=5 // pred_region
        // Predicated region
        $region17: #{tpu_custom_call.1} parent=15 // pred_check
          %p162 = pneg %p33
        $region18: #{tpu_custom_call.1} parent=15 // pred_check_branch
          %164 = sbr.rel (%p162) target = $region20
        $region19: #{tpu_custom_call.1} parent=15 // pred_region
          %s165 = smul.u32 4, %s13
          %p166 = scmp.lt.s32.totalorder %s165, 7
          %s167 = scalar_select %p166, %s165, 7
          %s168 = smul.addr %s167, 4
          %s169 = smul.addr %s168, 8
          %s170 = scalar_lea.vmem %s0, %s169
          %s171 = smul.u32 4, %s13
        $region20: #{tpu_custom_call.1} parent=15 // pred_fallthru
          _
        // Predicated region
        $region21: #{tpu_custom_call.1} parent=15 // pred_check
          %p172 = pneg %p59
        $region22: #{tpu_custom_call.1} parent=15 // pred_check_branch
          %174 = sbr.rel (%p172) target = $region24
        $region23: #{tpu_custom_call.1} parent=15 // pred_region
          %s175 = smul.u32 4, %s13
          %p176 = scmp.lt.s32.totalorder %s175, 7
          %s177 = scalar_select %p176, %s175, 7
          %s178 = smul.addr %s177, 4
          %s179 = scalar_lea.vmem %s1, %s178
          %s180 = smul.u32 4, %s13
        $region24: #{tpu_custom_call.1} parent=15 // pred_fallthru
          _
        // Predicated region
        $region25: #{tpu_custom_call.1} parent=15 // pred_check
          %p181 = pneg %p85
        $region26: #{tpu_custom_call.1} parent=15 // pred_check_branch
          %183 = sbr.rel (%p181) target = $region28
        $region27: #{tpu_custom_call.1} parent=15 // pred_region
          %s184 = smul.u32 4, %s13
          %p185 = scmp.lt.s32.totalorder %s184, 7
          %s186 = scalar_select %p185, %s184, 7
          %s187 = smul.addr %s186, 4
          %s188 = scalar_lea.vmem %s2, %s187
          %s189 = smul.u32 4, %s13
        $region28: #{tpu_custom_call.1} parent=15 // pred_fallthru
          _
        // Predicated region
        $region29: #{tpu_custom_call.1} parent=15 // pred_check
          %p190 = pneg %p111
        $region30: #{tpu_custom_call.1} parent=15 // pred_check_branch
          %192 = sbr.rel (%p190) target = $region32
        $region31: #{tpu_custom_call.1} parent=15 // pred_region
          %s193 = smul.u32 4, %s13
          %p194 = scmp.lt.s32.totalorder %s193, 7
          %s195 = scalar_select %p194, %s193, 7
          %s196 = smul.addr %s195, 16
          %s197 = smul.addr %s196, 8
          %s198 = scalar_lea.vmem %s3, %s197
          %s199 = smul.u32 4, %s13
        $region32: #{tpu_custom_call.1} parent=15 // pred_fallthru
          _
      $region16: #{tpu_custom_call.1} parent=5 // pred_fallthru
        _
      %p200 = scmp.le.s32.totalorder 1, %s13
      %p201 = scmp.lt.s32.totalorder %s13, 3
      %p202 = pnand %p200, %p201
      %p203 = pneg %p202
      // Predicated region
      $region33: #{tpu_custom_call.1} parent=5 // pred_check
        _
      $region34: #{tpu_custom_call.1} parent=5 // pred_check_branch
        %205 = sbr.rel (%p202) target = $region36
      $region35: #{tpu_custom_call.1} parent=5 // pred_region
        %s206 = ssub.s32 %s13, 1
        %s207 = smul.u32 4, %s18
        %p208 = scmp.lt.s32.totalorder %s207, 7
        %s209 = scalar_select %p208, %s207, 7
        %s210 = smul.addr %s209, 4
        %s211 = smul.addr %s210, 8
        %s212 = scalar_lea.vmem %s0, %s211
        %p213 = pneg %p39
        %p214 = pneg %p36
        %s215 = smul.u32 4, %s18
        %p216 = scmp.lt.s32.totalorder %s215, 7
        %s217 = scalar_select %p216, %s215, 7
        %s218 = smul.addr %s217, 4
        %s219 = scalar_lea.vmem %s1, %s218
        %p220 = pneg %p65
        %p221 = pneg %p62
        %s222 = smul.u32 4, %s18
        %p223 = scmp.lt.s32.totalorder %s222, 7
        %s224 = scalar_select %p223, %s222, 7
        %s225 = smul.addr %s224, 4
        %s226 = scalar_lea.vmem %s2, %s225
        %p227 = pneg %p91
        %p228 = pneg %p88
        %s229 = smul.u32 4, %s18
        %p230 = scmp.lt.s32.totalorder %s229, 7
        %s231 = scalar_select %p230, %s229, 7
        %s232 = smul.addr %s231, 16
        %s233 = smul.addr %s232, 8
        %s234 = scalar_lea.vmem %s3, %s233
        %p235 = pneg %p117
        %p236 = pneg %p114
        %p237 = pneg %p143
        %p238 = pneg %p140
        %s239 = sand.u32 %s130, 1
        %s240 = scalar_lea.sflag [#allocation3], %s239
        %s241 = sand.u32 %s130, 1
        %s242 = smul.addr %s241, 128
        %s243 = scalar_lea.vmem [#allocation2], %s242
        %s244 = smul.u32 4, %s18
        %p245 = scmp.lt.s32.totalorder %s244, 7
        %s246 = scalar_select %p245, %s244, 7
        %s247 = smul.addr %s246, 4
        %s248 = smul.addr %s247, 8
        %s249 = scalar_lea.vmem %s0, %s248
        %s250 = smul.u32 4, %s18
        %s251 = smul.u32 4, %s18
        %p252 = scmp.lt.s32.totalorder %s251, 7
        %s253 = scalar_select %p252, %s251, 7
        %s254 = smul.addr %s253, 4
        %s255 = scalar_lea.vmem %s1, %s254
        %s256 = smul.u32 4, %s18
        %s257 = smul.u32 4, %s18
        %p258 = scmp.lt.s32.totalorder %s257, 7
        %s259 = scalar_select %p258, %s257, 7
        %s260 = smul.addr %s259, 4
        %s261 = scalar_lea.vmem %s2, %s260
        %s262 = smul.u32 4, %s18
        %s263 = smul.u32 4, %s18
        %p264 = scmp.lt.s32.totalorder %s263, 7
        %s265 = scalar_select %p264, %s263, 7
        %s266 = smul.addr %s265, 16
        %s267 = smul.addr %s266, 8
        %s268 = scalar_lea.vmem %s3, %s267
        %s269 = smul.u32 4, %s18
        %s270 = smul.u32 4, %s18
        %v271 = vld [vmem:[%s268] sm:$0xff]
        %v272 = vld [vmem:[%s268 + $0x8] sm:$0xff]
        %v273 = vld [vmem:[%s268 + $0x10] sm:$0xff]
        %v274 = vld [vmem:[%s268 + $0x18] sm:$0xff]
        %v275 = vld [vmem:[%s268 + $0x20] sm:$0xff]
        %v276 = vld [vmem:[%s268 + $0x28] sm:$0xff]
        %v277 = vld [vmem:[%s268 + $0x30] sm:$0xff]
        %v278 = vld [vmem:[%s268 + $0x38] sm:$0xff]
        %v279 = vld [vmem:[%s268 + $0x40] sm:$0xff]
        %v280 = vld [vmem:[%s268 + $0x48] sm:$0xff]
        %v281 = vld [vmem:[%s268 + $0x50] sm:$0xff]
        %v282 = vld [vmem:[%s268 + $0x58] sm:$0xff]
        %v283 = vld [vmem:[%s268 + $0x60] sm:$0xff]
        %v284 = vld [vmem:[%s268 + $0x68] sm:$0xff]
        %v285 = vld [vmem:[%s268 + $0x70] sm:$0xff]
        %v286 = vld [vmem:[%s268 + $0x78] sm:$0xff]
        %v287 = vld [vmem:[%s255] sm:$0xf]
        %v288 = vld [vmem:[%s261] sm:$0xf]
        %v289 = vmul.f32 %v288, %v288
        %291 = vset.pattern.permute.xlu0 0
        %292 = vperm.xlu0 %291, %v271
        %v293 = vpop.permute.xlu0 %292
        %296 = vset.pattern.permute.xlu0 0
        %297 = vperm.xlu0 %296, %v272
        %v298 = vpop.permute.xlu0 %297
        %301 = vset.pattern.permute.xlu0 0
        %302 = vperm.xlu0 %301, %v273
        %v303 = vpop.permute.xlu0 %302
        %306 = vset.pattern.permute.xlu0 0
        %307 = vperm.xlu0 %306, %v274
        %v308 = vpop.permute.xlu0 %307
        %311 = vset.pattern.permute.xlu0 0
        %312 = vperm.xlu0 %311, %v275
        %v313 = vpop.permute.xlu0 %312
        %316 = vset.pattern.permute.xlu0 0
        %317 = vperm.xlu0 %316, %v276
        %v318 = vpop.permute.xlu0 %317
        %321 = vset.pattern.permute.xlu0 0
        %322 = vperm.xlu0 %321, %v277
        %v323 = vpop.permute.xlu0 %322
        %326 = vset.pattern.permute.xlu0 0
        %327 = vperm.xlu0 %326, %v278
        %v328 = vpop.permute.xlu0 %327
        %331 = vset.pattern.permute.xlu0 0
        %332 = vperm.xlu0 %331, %v279
        %v333 = vpop.permute.xlu0 %332
        %336 = vset.pattern.permute.xlu0 0
        %337 = vperm.xlu0 %336, %v280
        %v338 = vpop.permute.xlu0 %337
        %341 = vset.pattern.permute.xlu0 0
        %342 = vperm.xlu0 %341, %v281
        %v343 = vpop.permute.xlu0 %342
        %346 = vset.pattern.permute.xlu0 0
        %347 = vperm.xlu0 %346, %v282
        %v348 = vpop.permute.xlu0 %347
        %351 = vset.pattern.permute.xlu0 0
        %352 = vperm.xlu0 %351, %v283
        %v353 = vpop.permute.xlu0 %352
        %356 = vset.pattern.permute.xlu0 0
        %357 = vperm.xlu0 %356, %v284
        %v358 = vpop.permute.xlu0 %357
        %361 = vset.pattern.permute.xlu0 0
        %362 = vperm.xlu0 %361, %v285
        %v363 = vpop.permute.xlu0 %362
        %366 = vset.pattern.permute.xlu0 0
        %367 = vperm.xlu0 %366, %v286
        %v368 = vpop.permute.xlu0 %367
        %v370 = vlaneseq
        %v371 = vshrl.u32 %v370, 7
        %v372 = vsub.s32 0, %v371
        %v373 = vrot.slane %v287, %v372
        %v374 = vsub.f32 %v293, %v373
        %v375 = vsub.f32 %v298, %v373
        %v376 = vsub.f32 %v303, %v373
        %v377 = vsub.f32 %v308, %v373
        %v378 = vsub.f32 %v313, %v373
        %v379 = vsub.f32 %v318, %v373
        %v380 = vsub.f32 %v323, %v373
        %v381 = vsub.f32 %v328, %v373
        %v382 = vsub.f32 %v333, %v373
        %v383 = vsub.f32 %v338, %v373
        %v384 = vsub.f32 %v343, %v373
        %v385 = vsub.f32 %v348, %v373
        %v386 = vsub.f32 %v353, %v373
        %v387 = vsub.f32 %v358, %v373
        %v388 = vsub.f32 %v363, %v373
        %v389 = vsub.f32 %v368, %v373
        %v390 = vmul.f32 %v374, %v374
        %v391 = vmul.f32 %v375, %v375
        %v392 = vmul.f32 %v376, %v376
        %v393 = vmul.f32 %v377, %v377
        %v394 = vmul.f32 %v378, %v378
        %v395 = vmul.f32 %v379, %v379
        %v396 = vmul.f32 %v380, %v380
        %v397 = vmul.f32 %v381, %v381
        %v398 = vmul.f32 %v382, %v382
        %v399 = vmul.f32 %v383, %v383
        %v400 = vmul.f32 %v384, %v384
        %v401 = vmul.f32 %v385, %v385
        %v402 = vmul.f32 %v386, %v386
        %v403 = vmul.f32 %v387, %v387
        %v404 = vmul.f32 %v388, %v388
        %v405 = vmul.f32 %v389, %v389
        %v406 = vlaneseq
        %v407 = vshrl.u32 %v406, 7
        %v408 = vsub.s32 0, %v407
        %v409 = vrot.slane %v289, %v408
        %v410 = vadd.f32 %v390, %v409
        %v411 = vadd.f32 %v391, %v409
        %v412 = vadd.f32 %v392, %v409
        %v413 = vadd.f32 %v393, %v409
        %v414 = vadd.f32 %v394, %v409
        %v415 = vadd.f32 %v395, %v409
        %v416 = vadd.f32 %v396, %v409
        %v417 = vadd.f32 %v397, %v409
        %v418 = vadd.f32 %v398, %v409
        %v419 = vadd.f32 %v399, %v409
        %v420 = vadd.f32 %v400, %v409
        %v421 = vadd.f32 %v401, %v409
        %v422 = vadd.f32 %v402, %v409
        %v423 = vadd.f32 %v403, %v409
        %v424 = vadd.f32 %v404, %v409
        %v425 = vadd.f32 %v405, %v409
        %426 = vset.pattern.permute.xlu0 1
        %427 = vperm.xlu0 %426, %v271
        %v428 = vpop.permute.xlu0 %427
        %430 = vset.pattern.permute.xlu0 1
        %431 = vperm.xlu0 %430, %v272
        %v432 = vpop.permute.xlu0 %431
        %434 = vset.pattern.permute.xlu0 1
        %435 = vperm.xlu0 %434, %v273
        %v436 = vpop.permute.xlu0 %435
        %438 = vset.pattern.permute.xlu0 1
        %439 = vperm.xlu0 %438, %v274
        %v440 = vpop.permute.xlu0 %439
        %442 = vset.pattern.permute.xlu0 1
        %443 = vperm.xlu0 %442, %v275
        %v444 = vpop.permute.xlu0 %443
        %446 = vset.pattern.permute.xlu0 1
        %447 = vperm.xlu0 %446, %v276
        %v448 = vpop.permute.xlu0 %447
        %450 = vset.pattern.permute.xlu0 1
        %451 = vperm.xlu0 %450, %v277
        %v452 = vpop.permute.xlu0 %451
        %454 = vset.pattern.permute.xlu0 1
        %455 = vperm.xlu0 %454, %v278
        %v456 = vpop.permute.xlu0 %455
        %458 = vset.pattern.permute.xlu0 1
        %459 = vperm.xlu0 %458, %v279
        %v460 = vpop.permute.xlu0 %459
        %462 = vset.pattern.permute.xlu0 1
        %463 = vperm.xlu0 %462, %v280
        %v464 = vpop.permute.xlu0 %463
        %466 = vset.pattern.permute.xlu0 1
        %467 = vperm.xlu0 %466, %v281
        %v468 = vpop.permute.xlu0 %467
        %470 = vset.pattern.permute.xlu0 1
        %471 = vperm.xlu0 %470, %v282
        %v472 = vpop.permute.xlu0 %471
        %474 = vset.pattern.permute.xlu0 1
        %475 = vperm.xlu0 %474, %v283
        %v476 = vpop.permute.xlu0 %475
        %478 = vset.pattern.permute.xlu0 1
        %479 = vperm.xlu0 %478, %v284
        %v480 = vpop.permute.xlu0 %479
        %482 = vset.pattern.permute.xlu0 1
        %483 = vperm.xlu0 %482, %v285
        %v484 = vpop.permute.xlu0 %483
        %486 = vset.pattern.permute.xlu0 1
        %487 = vperm.xlu0 %486, %v286
        %v488 = vpop.permute.xlu0 %487
        %v490 = vlaneseq
        %v491 = vshrl.u32 %v490, 7
        %v492 = vsub.s32 1, %v491
        %v493 = vrot.slane %v287, %v492
        %v494 = vsub.f32 %v428, %v493
        %v495 = vsub.f32 %v432, %v493
        %v496 = vsub.f32 %v436, %v493
        %v497 = vsub.f32 %v440, %v493
        %v498 = vsub.f32 %v444, %v493
        %v499 = vsub.f32 %v448, %v493
        %v500 = vsub.f32 %v452, %v493
        %v501 = vsub.f32 %v456, %v493
        %v502 = vsub.f32 %v460, %v493
        %v503 = vsub.f32 %v464, %v493
        %v504 = vsub.f32 %v468, %v493
        %v505 = vsub.f32 %v472, %v493
        %v506 = vsub.f32 %v476, %v493
        %v507 = vsub.f32 %v480, %v493
        %v508 = vsub.f32 %v484, %v493
        %v509 = vsub.f32 %v488, %v493
        %v510 = vmul.f32 %v494, %v494
        %v511 = vmul.f32 %v495, %v495
        %v512 = vmul.f32 %v496, %v496
        %v513 = vmul.f32 %v497, %v497
        %v514 = vmul.f32 %v498, %v498
        %v515 = vmul.f32 %v499, %v499
        %v516 = vmul.f32 %v500, %v500
        %v517 = vmul.f32 %v501, %v501
        %v518 = vmul.f32 %v502, %v502
        %v519 = vmul.f32 %v503, %v503
        %v520 = vmul.f32 %v504, %v504
        %v521 = vmul.f32 %v505, %v505
        %v522 = vmul.f32 %v506, %v506
        %v523 = vmul.f32 %v507, %v507
        %v524 = vmul.f32 %v508, %v508
        %v525 = vmul.f32 %v509, %v509
        %v526 = vlaneseq
        %v527 = vshrl.u32 %v526, 7
        %v528 = vsub.s32 1, %v527
        %v529 = vrot.slane %v289, %v528
        %v530 = vadd.f32 %v510, %v529
        %v531 = vadd.f32 %v511, %v529
        %v532 = vadd.f32 %v512, %v529
        %v533 = vadd.f32 %v513, %v529
        %v534 = vadd.f32 %v514, %v529
        %v535 = vadd.f32 %v515, %v529
        %v536 = vadd.f32 %v516, %v529
        %v537 = vadd.f32 %v517, %v529
        %v538 = vadd.f32 %v518, %v529
        %v539 = vadd.f32 %v519, %v529
        %v540 = vadd.f32 %v520, %v529
        %v541 = vadd.f32 %v521, %v529
        %v542 = vadd.f32 %v522, %v529
        %v543 = vadd.f32 %v523, %v529
        %v544 = vadd.f32 %v524, %v529
        %v545 = vadd.f32 %v525, %v529
        %v546 = vmul.f32 %v410, %v530
        %v547 = vmul.f32 %v411, %v531
        %v548 = vmul.f32 %v412, %v532
        %v549 = vmul.f32 %v413, %v533
        %v550 = vmul.f32 %v414, %v534
        %v551 = vmul.f32 %v415, %v535
        %v552 = vmul.f32 %v416, %v536
        %v553 = vmul.f32 %v417, %v537
        %v554 = vmul.f32 %v418, %v538
        %v555 = vmul.f32 %v419, %v539
        %v556 = vmul.f32 %v420, %v540
        %v557 = vmul.f32 %v421, %v541
        %v558 = vmul.f32 %v422, %v542
        %v559 = vmul.f32 %v423, %v543
        %v560 = vmul.f32 %v424, %v544
        %v561 = vmul.f32 %v425, %v545
        %562 = vset.pattern.permute.xlu0 2
        %563 = vperm.xlu0 %562, %v271
        %v564 = vpop.permute.xlu0 %563
        %566 = vset.pattern.permute.xlu0 2
        %567 = vperm.xlu0 %566, %v272
        %v568 = vpop.permute.xlu0 %567
        %570 = vset.pattern.permute.xlu0 2
        %571 = vperm.xlu0 %570, %v273
        %v572 = vpop.permute.xlu0 %571
        %574 = vset.pattern.permute.xlu0 2
        %575 = vperm.xlu0 %574, %v274
        %v576 = vpop.permute.xlu0 %575
        %578 = vset.pattern.permute.xlu0 2
        %579 = vperm.xlu0 %578, %v275
        %v580 = vpop.permute.xlu0 %579
        %582 = vset.pattern.permute.xlu0 2
        %583 = vperm.xlu0 %582, %v276
        %v584 = vpop.permute.xlu0 %583
        %586 = vset.pattern.permute.xlu0 2
        %587 = vperm.xlu0 %586, %v277
        %v588 = vpop.permute.xlu0 %587
        %590 = vset.pattern.permute.xlu0 2
        %591 = vperm.xlu0 %590, %v278
        %v592 = vpop.permute.xlu0 %591
        %594 = vset.pattern.permute.xlu0 2
        %595 = vperm.xlu0 %594, %v279
        %v596 = vpop.permute.xlu0 %595
        %598 = vset.pattern.permute.xlu0 2
        %599 = vperm.xlu0 %598, %v280
        %v600 = vpop.permute.xlu0 %599
        %602 = vset.pattern.permute.xlu0 2
        %603 = vperm.xlu0 %602, %v281
        %v604 = vpop.permute.xlu0 %603
        %606 = vset.pattern.permute.xlu0 2
        %607 = vperm.xlu0 %606, %v282
        %v608 = vpop.permute.xlu0 %607
        %610 = vset.pattern.permute.xlu0 2
        %611 = vperm.xlu0 %610, %v283
        %v612 = vpop.permute.xlu0 %611
        %614 = vset.pattern.permute.xlu0 2
        %615 = vperm.xlu0 %614, %v284
        %v616 = vpop.permute.xlu0 %615
        %618 = vset.pattern.permute.xlu0 2
        %619 = vperm.xlu0 %618, %v285
        %v620 = vpop.permute.xlu0 %619
        %622 = vset.pattern.permute.xlu0 2
        %623 = vperm.xlu0 %622, %v286
        %v624 = vpop.permute.xlu0 %623
        %v626 = vlaneseq
        %v627 = vshrl.u32 %v626, 7
        %v628 = vsub.s32 2, %v627
        %v629 = vrot.slane %v287, %v628
        %v630 = vsub.f32 %v564, %v629
        %v631 = vsub.f32 %v568, %v629
        %v632 = vsub.f32 %v572, %v629
        %v633 = vsub.f32 %v576, %v629
        %v634 = vsub.f32 %v580, %v629
        %v635 = vsub.f32 %v584, %v629
        %v636 = vsub.f32 %v588, %v629
        %v637 = vsub.f32 %v592, %v629
        %v638 = vsub.f32 %v596, %v629
        %v639 = vsub.f32 %v600, %v629
        %v640 = vsub.f32 %v604, %v629
        %v641 = vsub.f32 %v608, %v629
        %v642 = vsub.f32 %v612, %v629
        %v643 = vsub.f32 %v616, %v629
        %v644 = vsub.f32 %v620, %v629
        %v645 = vsub.f32 %v624, %v629
        %v646 = vmul.f32 %v630, %v630
        %v647 = vmul.f32 %v631, %v631
        %v648 = vmul.f32 %v632, %v632
        %v649 = vmul.f32 %v633, %v633
        %v650 = vmul.f32 %v634, %v634
        %v651 = vmul.f32 %v635, %v635
        %v652 = vmul.f32 %v636, %v636
        %v653 = vmul.f32 %v637, %v637
        %v654 = vmul.f32 %v638, %v638
        %v655 = vmul.f32 %v639, %v639
        %v656 = vmul.f32 %v640, %v640
        %v657 = vmul.f32 %v641, %v641
        %v658 = vmul.f32 %v642, %v642
        %v659 = vmul.f32 %v643, %v643
        %v660 = vmul.f32 %v644, %v644
        %v661 = vmul.f32 %v645, %v645
        %v662 = vlaneseq
        %v663 = vshrl.u32 %v662, 7
        %v664 = vsub.s32 2, %v663
        %v665 = vrot.slane %v289, %v664
        %v666 = vadd.f32 %v646, %v665
        %v667 = vadd.f32 %v647, %v665
        %v668 = vadd.f32 %v648, %v665
        %v669 = vadd.f32 %v649, %v665
        %v670 = vadd.f32 %v650, %v665
        %v671 = vadd.f32 %v651, %v665
        %v672 = vadd.f32 %v652, %v665
        %v673 = vadd.f32 %v653, %v665
        %v674 = vadd.f32 %v654, %v665
        %v675 = vadd.f32 %v655, %v665
        %v676 = vadd.f32 %v656, %v665
        %v677 = vadd.f32 %v657, %v665
        %v678 = vadd.f32 %v658, %v665
        %v679 = vadd.f32 %v659, %v665
        %v680 = vadd.f32 %v660, %v665
        %v681 = vadd.f32 %v661, %v665
        %v682 = vmul.f32 %v546, %v666
        %v683 = vmul.f32 %v547, %v667
        %v684 = vmul.f32 %v548, %v668
        %v685 = vmul.f32 %v549, %v669
        %v686 = vmul.f32 %v550, %v670
        %v687 = vmul.f32 %v551, %v671
        %v688 = vmul.f32 %v552, %v672
        %v689 = vmul.f32 %v553, %v673
        %v690 = vmul.f32 %v554, %v674
        %v691 = vmul.f32 %v555, %v675
        %v692 = vmul.f32 %v556, %v676
        %v693 = vmul.f32 %v557, %v677
        %v694 = vmul.f32 %v558, %v678
        %v695 = vmul.f32 %v559, %v679
        %v696 = vmul.f32 %v560, %v680
        %v697 = vmul.f32 %v561, %v681
        %698 = vset.pattern.permute.xlu0 3
        %699 = vperm.xlu0 %698, %v271
        %v700 = vpop.permute.xlu0 %699
        %702 = vset.pattern.permute.xlu0 3
        %703 = vperm.xlu0 %702, %v272
        %v704 = vpop.permute.xlu0 %703
        %706 = vset.pattern.permute.xlu0 3
        %707 = vperm.xlu0 %706, %v273
        %v708 = vpop.permute.xlu0 %707
        %710 = vset.pattern.permute.xlu0 3
        %711 = vperm.xlu0 %710, %v274
        %v712 = vpop.permute.xlu0 %711
        %714 = vset.pattern.permute.xlu0 3
        %715 = vperm.xlu0 %714, %v275
        %v716 = vpop.permute.xlu0 %715
        %718 = vset.pattern.permute.xlu0 3
        %719 = vperm.xlu0 %718, %v276
        %v720 = vpop.permute.xlu0 %719
        %722 = vset.pattern.permute.xlu0 3
        %723 = vperm.xlu0 %722, %v277
        %v724 = vpop.permute.xlu0 %723
        %726 = vset.pattern.permute.xlu0 3
        %727 = vperm.xlu0 %726, %v278
        %v728 = vpop.permute.xlu0 %727
        %730 = vset.pattern.permute.xlu0 3
        %731 = vperm.xlu0 %730, %v279
        %v732 = vpop.permute.xlu0 %731
        %734 = vset.pattern.permute.xlu0 3
        %735 = vperm.xlu0 %734, %v280
        %v736 = vpop.permute.xlu0 %735
        %738 = vset.pattern.permute.xlu0 3
        %739 = vperm.xlu0 %738, %v281
        %v740 = vpop.permute.xlu0 %739
        %742 = vset.pattern.permute.xlu0 3
        %743 = vperm.xlu0 %742, %v282
        %v744 = vpop.permute.xlu0 %743
        %746 = vset.pattern.permute.xlu0 3
        %747 = vperm.xlu0 %746, %v283
        %v748 = vpop.permute.xlu0 %747
        %750 = vset.pattern.permute.xlu0 3
        %751 = vperm.xlu0 %750, %v284
        %v752 = vpop.permute.xlu0 %751
        %754 = vset.pattern.permute.xlu0 3
        %755 = vperm.xlu0 %754, %v285
        %v756 = vpop.permute.xlu0 %755
        %758 = vset.pattern.permute.xlu0 3
        %759 = vperm.xlu0 %758, %v286
        %v760 = vpop.permute.xlu0 %759
        %v762 = vlaneseq
        %v763 = vshrl.u32 %v762, 7
        %v764 = vsub.s32 3, %v763
        %v765 = vrot.slane %v287, %v764
        %v766 = vsub.f32 %v700, %v765
        %v767 = vsub.f32 %v704, %v765
        %v768 = vsub.f32 %v708, %v765
        %v769 = vsub.f32 %v712, %v765
        %v770 = vsub.f32 %v716, %v765
        %v771 = vsub.f32 %v720, %v765
        %v772 = vsub.f32 %v724, %v765
        %v773 = vsub.f32 %v728, %v765
        %v774 = vsub.f32 %v732, %v765
        %v775 = vsub.f32 %v736, %v765
        %v776 = vsub.f32 %v740, %v765
        %v777 = vsub.f32 %v744, %v765
        %v778 = vsub.f32 %v748, %v765
        %v779 = vsub.f32 %v752, %v765
        %v780 = vsub.f32 %v756, %v765
        %v781 = vsub.f32 %v760, %v765
        %v782 = vmul.f32 %v766, %v766
        %v783 = vmul.f32 %v767, %v767
        %v784 = vmul.f32 %v768, %v768
        %v785 = vmul.f32 %v769, %v769
        %v786 = vmul.f32 %v770, %v770
        %v787 = vmul.f32 %v771, %v771
        %v788 = vmul.f32 %v772, %v772
        %v789 = vmul.f32 %v773, %v773
        %v790 = vmul.f32 %v774, %v774
        %v791 = vmul.f32 %v775, %v775
        %v792 = vmul.f32 %v776, %v776
        %v793 = vmul.f32 %v777, %v777
        %v794 = vmul.f32 %v778, %v778
        %v795 = vmul.f32 %v779, %v779
        %v796 = vmul.f32 %v780, %v780
        %v797 = vmul.f32 %v781, %v781
        %v798 = vlaneseq
        %v799 = vshrl.u32 %v798, 7
        %v800 = vsub.s32 3, %v799
        %v801 = vrot.slane %v289, %v800
        %v802 = vadd.f32 %v782, %v801
        %v803 = vadd.f32 %v783, %v801
        %v804 = vadd.f32 %v784, %v801
        %v805 = vadd.f32 %v785, %v801
        %v806 = vadd.f32 %v786, %v801
        %v807 = vadd.f32 %v787, %v801
        %v808 = vadd.f32 %v788, %v801
        %v809 = vadd.f32 %v789, %v801
        %v810 = vadd.f32 %v790, %v801
        %v811 = vadd.f32 %v791, %v801
        %v812 = vadd.f32 %v792, %v801
        %v813 = vadd.f32 %v793, %v801
        %v814 = vadd.f32 %v794, %v801
        %v815 = vadd.f32 %v795, %v801
        %v816 = vadd.f32 %v796, %v801
        %v817 = vadd.f32 %v797, %v801
        %v818 = vmul.f32 %v682, %v802
        %v819 = vmul.f32 %v683, %v803
        %v820 = vmul.f32 %v684, %v804
        %v821 = vmul.f32 %v685, %v805
        %v822 = vmul.f32 %v686, %v806
        %v823 = vmul.f32 %v687, %v807
        %v824 = vmul.f32 %v688, %v808
        %v825 = vmul.f32 %v689, %v809
        %v826 = vmul.f32 %v690, %v810
        %v827 = vmul.f32 %v691, %v811
        %v828 = vmul.f32 %v692, %v812
        %v829 = vmul.f32 %v693, %v813
        %v830 = vmul.f32 %v694, %v814
        %v831 = vmul.f32 %v695, %v815
        %v832 = vmul.f32 %v696, %v816
        %v833 = vmul.f32 %v697, %v817
        %v834 = vrcp.pop %v818
        %v835 = vrcp.pop %v819
        %v836 = vrcp.pop %v820
        %v837 = vrcp.pop %v821
        %v838 = vrcp.pop %v822
        %v839 = vrcp.pop %v823
        %v840 = vrcp.pop %v824
        %v841 = vrcp.pop %v825
        %v842 = vrcp.pop %v826
        %v843 = vrcp.pop %v827
        %v844 = vrcp.pop %v828
        %v845 = vrcp.pop %v829
        %v846 = vrcp.pop %v830
        %v847 = vrcp.pop %v831
        %v848 = vrcp.pop %v832
        %v849 = vrcp.pop %v833
        %v850 = vmul.f32 %v818, %v834
        %v851 = vmul.f32 %v819, %v835
        %v852 = vmul.f32 %v820, %v836
        %v853 = vmul.f32 %v821, %v837
        %v854 = vmul.f32 %v822, %v838
        %v855 = vmul.f32 %v823, %v839
        %v856 = vmul.f32 %v824, %v840
        %v857 = vmul.f32 %v825, %v841
        %v858 = vmul.f32 %v826, %v842
        %v859 = vmul.f32 %v827, %v843
        %v860 = vmul.f32 %v828, %v844
        %v861 = vmul.f32 %v829, %v845
        %v862 = vmul.f32 %v830, %v846
        %v863 = vmul.f32 %v831, %v847
        %v864 = vmul.f32 %v832, %v848
        %v865 = vmul.f32 %v833, %v849
        %v866 = vsub.f32 2.0, %v850
        %v867 = vsub.f32 2.0, %v851
        %v868 = vsub.f32 2.0, %v852
        %v869 = vsub.f32 2.0, %v853
        %v870 = vsub.f32 2.0, %v854
        %v871 = vsub.f32 2.0, %v855
        %v872 = vsub.f32 2.0, %v856
        %v873 = vsub.f32 2.0, %v857
        %v874 = vsub.f32 2.0, %v858
        %v875 = vsub.f32 2.0, %v859
        %v876 = vsub.f32 2.0, %v860
        %v877 = vsub.f32 2.0, %v861
        %v878 = vsub.f32 2.0, %v862
        %v879 = vsub.f32 2.0, %v863
        %v880 = vsub.f32 2.0, %v864
        %v881 = vsub.f32 2.0, %v865
        %v882 = vmul.f32 %v834, %v866
        %v883 = vmul.f32 %v835, %v867
        %v884 = vmul.f32 %v836, %v868
        %v885 = vmul.f32 %v837, %v869
        %v886 = vmul.f32 %v838, %v870
        %v887 = vmul.f32 %v839, %v871
        %v888 = vmul.f32 %v840, %v872
        %v889 = vmul.f32 %v841, %v873
        %v890 = vmul.f32 %v842, %v874
        %v891 = vmul.f32 %v843, %v875
        %v892 = vmul.f32 %v844, %v876
        %v893 = vmul.f32 %v845, %v877
        %v894 = vmul.f32 %v846, %v878
        %v895 = vmul.f32 %v847, %v879
        %v896 = vmul.f32 %v848, %v880
        %v897 = vmul.f32 %v849, %v881
        %v898 = vadd.f32 %v882, %v883
        %v899 = vadd.f32 %v898, %v884
        %v900 = vadd.f32 %v899, %v885
        %v901 = vadd.f32 %v900, %v886
        %v902 = vadd.f32 %v901, %v887
        %v903 = vadd.f32 %v902, %v888
        %v904 = vadd.f32 %v903, %v889
        %v905 = vadd.f32 %v904, %v890
        %v906 = vadd.f32 %v905, %v891
        %v907 = vadd.f32 %v906, %v892
        %v908 = vadd.f32 %v907, %v893
        %v909 = vadd.f32 %v908, %v894
        %v910 = vadd.f32 %v909, %v895
        %v911 = vadd.f32 %v910, %v896
        %v912 = vadd.f32 %v911, %v897
        %v913 = vrot.slane %v912, 4
        %v914 = vadd.f32 %v912, %v913
        %v915 = vrot.slane %v914, 2
        %v916 = vadd.f32 %v914, %v915
        %v917 = vrot.slane %v916, 1
        %v918 = vadd.f32 %v916, %v917
        %v919 = vrcp.pop %v918
        %v920 = vmul.f32 %v882, %v919
        %v921 = vmul.f32 %v883, %v919
        %v922 = vmul.f32 %v884, %v919
        %v923 = vmul.f32 %v885, %v919
        %v924 = vmul.f32 %v886, %v919
        %v925 = vmul.f32 %v887, %v919
        %v926 = vmul.f32 %v888, %v919
        %v927 = vmul.f32 %v889, %v919
        %v928 = vmul.f32 %v890, %v919
        %v929 = vmul.f32 %v891, %v919
        %v930 = vmul.f32 %v892, %v919
        %v931 = vmul.f32 %v893, %v919
        %v932 = vmul.f32 %v894, %v919
        %v933 = vmul.f32 %v895, %v919
        %v934 = vmul.f32 %v896, %v919
        %v935 = vmul.f32 %v897, %v919
        %v936 = vld [vmem:[%s249] sm:$0xff]
        %v937 = vld [vmem:[%s249 + $0x8] sm:$0xff]
        %v938 = vld [vmem:[%s249 + $0x10] sm:$0xff]
        %v939 = vld [vmem:[%s249 + $0x18] sm:$0xff]
        %940 = vmatprep.subr.mxu0 0.0
        %941 = vmatpush1.msra.mxu0 %v920
        %942 = vmatprep.subr.mxu0 0.0
        %943 = vmatpush1.msra.mxu0 %v921
        %944 = vmatprep.subr.mxu0 0.0
        %945 = vmatpush1.msra.mxu0 %v922
        %946 = vmatprep.subr.mxu0 0.0
        %947 = vmatpush1.msra.mxu0 %v923
        %948 = vmatprep.subr.mxu0 0.0
        %949 = vmatpush1.msra.mxu0 %v924
        %950 = vmatprep.subr.mxu0 0.0
        %951 = vmatpush1.msra.mxu0 %v925
        %952 = vmatprep.subr.mxu0 0.0
        %953 = vmatpush1.msra.mxu0 %v926
        %954 = vmatprep.subr.mxu0 0.0
        %955 = vmatpush1.msra.mxu0 %v927
        %956 = vmatprep.subr.mxu0 0.0
        %957 = vmatpush1.msra.mxu0 %v928
        %958 = vmatprep.subr.mxu0 0.0
        %959 = vmatpush1.msra.mxu0 %v929
        %960 = vmatprep.subr.mxu0 0.0
        %961 = vmatpush1.msra.mxu0 %v930
        %962 = vmatprep.subr.mxu0 0.0
        %963 = vmatpush1.msra.mxu0 %v931
        %964 = vmatprep.subr.mxu0 0.0
        %965 = vmatpush1.msra.mxu0 %v932
        %966 = vmatprep.subr.mxu0 0.0
        %967 = vmatpush1.msra.mxu0 %v933
        %968 = vmatprep.subr.mxu0 0.0
        %969 = vmatpush1.msra.mxu0 %v934
        %970 = vmatprep.subr.mxu0 0.0
        %971 = vmatpush1.msra.mxu0 %v935
        %972 = vmatprep.subr.mxu0 0.0
        %973 = vmatpush1.msra.mxu0 0.0
        %974 = vmatprep.subr.mxu0 0.0
        %975 = vmatpush1.msra.mxu0 0.0
        %976 = vmatprep.subr.mxu0 0.0
        %977 = vmatpush1.msra.mxu0 0.0
        %978 = vmatprep.subr.mxu0 0.0
        %979 = vmatpush1.msra.mxu0 0.0
        %980 = vmatprep.subr.mxu0 0.0
        %981 = vmatpush1.msra.mxu0 0.0
        %982 = vmatprep.subr.mxu0 0.0
        %983 = vmatpush1.msra.mxu0 0.0
        %984 = vmatprep.subr.mxu0 0.0
        %985 = vmatpush1.msra.mxu0 0.0
        %986 = vmatprep.subr.mxu0 0.0
        %987 = vmatpush1.msra.mxu0 0.0
        %988 = vmatprep.subr.mxu0 0.0
        %989 = vmatpush1.msra.mxu0 0.0
        %990 = vmatprep.subr.mxu0 0.0
        %991 = vmatpush1.msra.mxu0 0.0
        %992 = vmatprep.subr.mxu0 0.0
        %993 = vmatpush1.msra.mxu0 0.0
        %994 = vmatprep.subr.mxu0 0.0
        %995 = vmatpush1.msra.mxu0 0.0
        %996 = vmatprep.subr.mxu0 0.0
        %997 = vmatpush1.msra.mxu0 0.0
        %998 = vmatprep.subr.mxu0 0.0
        %999 = vmatpush1.msra.mxu0 0.0
        %1000 = vmatprep.subr.mxu0 0.0
        %1001 = vmatpush1.msra.mxu0 0.0
        %1002 = vmatprep.subr.mxu0 0.0
        %1003 = vmatpush1.msra.mxu0 0.0
        %1004 = vmatprep.mubr.f32.mxu0 0.0
        %1005 = vmatmul.mubr.f32.gmra.mrb[0].mxu0 %v936
        %v1006 = vpop.f32.mrb[0].mxu0
        %v1007 = vadd.f32 0.0, %v1006
        %v1008 = vpop.f32.mrb[0].mxu0
        %1009 = vmatprep.mubr.f32.mxu0 0.0
        %1010 = vmatmul.mubr.f32.gmra.mrb[0].mxu0 %v937
        %v1011 = vpop.f32.mrb[0].mxu0
        %v1012 = vadd.f32 0.0, %v1011
        %v1013 = vpop.f32.mrb[0].mxu0
        %1014 = vmatprep.mubr.f32.mxu0 0.0
        %1015 = vmatmul.mubr.f32.gmra.mrb[0].mxu0 %v938
        %v1016 = vpop.f32.mrb[0].mxu0
        %v1017 = vadd.f32 0.0, %v1016
        %v1018 = vpop.f32.mrb[0].mxu0
        %1019 = vmatprep.mubr.f32.mxu0 0.0
        %1020 = vmatmul.mubr.f32.gmra.mrb[0].mxu0 %v939
        %v1021 = vpop.f32.mrb[0].mxu0
        %v1022 = vadd.f32 0.0, %v1021
        %v1023 = vpop.f32.mrb[0].mxu0
        %1024 = vdwg.mxu0
        %1025 = vst [vmem:[%s243] sm:$0xff] %v1007
        %1026 = vst [vmem:[%s243 + $0x8] sm:$0xff] %v1012
        %1027 = vst [vmem:[%s243 + $0x10] sm:$0xff] %v1017
        %1028 = vst [vmem:[%s243 + $0x18] sm:$0xff] %v1022
        %s1029 = scalar_lea.vmem %s268, 128
        %v1030 = vld [vmem:[%s1029] sm:$0xff]
        %v1031 = vld [vmem:[%s1029 + $0x8] sm:$0xff]
        %v1032 = vld [vmem:[%s1029 + $0x10] sm:$0xff]
        %v1033 = vld [vmem:[%s1029 + $0x18] sm:$0xff]
        %v1034 = vld [vmem:[%s1029 + $0x20] sm:$0xff]
        %v1035 = vld [vmem:[%s1029 + $0x28] sm:$0xff]
        %v1036 = vld [vmem:[%s1029 + $0x30] sm:$0xff]
        %v1037 = vld [vmem:[%s1029 + $0x38] sm:$0xff]
        %v1038 = vld [vmem:[%s1029 + $0x40] sm:$0xff]
        %v1039 = vld [vmem:[%s1029 + $0x48] sm:$0xff]
        %v1040 = vld [vmem:[%s1029 + $0x50] sm:$0xff]
        %v1041 = vld [vmem:[%s1029 + $0x58] sm:$0xff]
        %v1042 = vld [vmem:[%s1029 + $0x60] sm:$0xff]
        %v1043 = vld [vmem:[%s1029 + $0x68] sm:$0xff]
        %v1044 = vld [vmem:[%s1029 + $0x70] sm:$0xff]
        %v1045 = vld [vmem:[%s1029 + $0x78] sm:$0xff]
        %s1046 = scalar_lea.vmem %s255, 4
        %v1047 = vld [vmem:[%s1046] sm:$0xf]
        %s1048 = scalar_lea.vmem %s261, 4
        %v1049 = vld [vmem:[%s1048] sm:$0xf]
        %v1050 = vmul.f32 %v1049, %v1049
        %1052 = vset.pattern.permute.xlu0 0
        %1053 = vperm.xlu0 %1052, %v1030
        %v1054 = vpop.permute.xlu0 %1053
        %1057 = vset.pattern.permute.xlu0 0
        %1058 = vperm.xlu0 %1057, %v1031
        %v1059 = vpop.permute.xlu0 %1058
        %1062 = vset.pattern.permute.xlu0 0
        %1063 = vperm.xlu0 %1062, %v1032
        %v1064 = vpop.permute.xlu0 %1063
        %1067 = vset.pattern.permute.xlu0 0
        %1068 = vperm.xlu0 %1067, %v1033
        %v1069 = vpop.permute.xlu0 %1068
        %1072 = vset.pattern.permute.xlu0 0
        %1073 = vperm.xlu0 %1072, %v1034
        %v1074 = vpop.permute.xlu0 %1073
        %1077 = vset.pattern.permute.xlu0 0
        %1078 = vperm.xlu0 %1077, %v1035
        %v1079 = vpop.permute.xlu0 %1078
        %1082 = vset.pattern.permute.xlu0 0
        %1083 = vperm.xlu0 %1082, %v1036
        %v1084 = vpop.permute.xlu0 %1083
        %1087 = vset.pattern.permute.xlu0 0
        %1088 = vperm.xlu0 %1087, %v1037
        %v1089 = vpop.permute.xlu0 %1088
        %1092 = vset.pattern.permute.xlu0 0
        %1093 = vperm.xlu0 %1092, %v1038
        %v1094 = vpop.permute.xlu0 %1093
        %1097 = vset.pattern.permute.xlu0 0
        %1098 = vperm.xlu0 %1097, %v1039
        %v1099 = vpop.permute.xlu0 %1098
        %1102 = vset.pattern.permute.xlu0 0
        %1103 = vperm.xlu0 %1102, %v1040
        %v1104 = vpop.permute.xlu0 %1103
        %1107 = vset.pattern.permute.xlu0 0
        %1108 = vperm.xlu0 %1107, %v1041
        %v1109 = vpop.permute.xlu0 %1108
        %1112 = vset.pattern.permute.xlu0 0
        %1113 = vperm.xlu0 %1112, %v1042
        %v1114 = vpop.permute.xlu0 %1113
        %1117 = vset.pattern.permute.xlu0 0
        %1118 = vperm.xlu0 %1117, %v1043
        %v1119 = vpop.permute.xlu0 %1118
        %1122 = vset.pattern.permute.xlu0 0
        %1123 = vperm.xlu0 %1122, %v1044
        %v1124 = vpop.permute.xlu0 %1123
        %1127 = vset.pattern.permute.xlu0 0
        %1128 = vperm.xlu0 %1127, %v1045
        %v1129 = vpop.permute.xlu0 %1128
        %v1131 = vlaneseq
        %v1132 = vshrl.u32 %v1131, 7
        %v1133 = vsub.s32 0, %v1132
        %v1134 = vrot.slane %v1047, %v1133
        %v1135 = vsub.f32 %v1054, %v1134
        %v1136 = vsub.f32 %v1059, %v1134
        %v1137 = vsub.f32 %v1064, %v1134
        %v1138 = vsub.f32 %v1069, %v1134
        %v1139 = vsub.f32 %v1074, %v1134
        %v1140 = vsub.f32 %v1079, %v1134
        %v1141 = vsub.f32 %v1084, %v1134
        %v1142 = vsub.f32 %v1089, %v1134
        %v1143 = vsub.f32 %v1094, %v1134
        %v1144 = vsub.f32 %v1099, %v1134
        %v1145 = vsub.f32 %v1104, %v1134
        %v1146 = vsub.f32 %v1109, %v1134
        %v1147 = vsub.f32 %v1114, %v1134
        %v1148 = vsub.f32 %v1119, %v1134
        %v1149 = vsub.f32 %v1124, %v1134
        %v1150 = vsub.f32 %v1129, %v1134
        %v1151 = vmul.f32 %v1135, %v1135
        %v1152 = vmul.f32 %v1136, %v1136
        %v1153 = vmul.f32 %v1137, %v1137
        %v1154 = vmul.f32 %v1138, %v1138
        %v1155 = vmul.f32 %v1139, %v1139
        %v1156 = vmul.f32 %v1140, %v1140
        %v1157 = vmul.f32 %v1141, %v1141
        %v1158 = vmul.f32 %v1142, %v1142
        %v1159 = vmul.f32 %v1143, %v1143
        %v1160 = vmul.f32 %v1144, %v1144
        %v1161 = vmul.f32 %v1145, %v1145
        %v1162 = vmul.f32 %v1146, %v1146
        %v1163 = vmul.f32 %v1147, %v1147
        %v1164 = vmul.f32 %v1148, %v1148
        %v1165 = vmul.f32 %v1149, %v1149
        %v1166 = vmul.f32 %v1150, %v1150
        %v1167 = vlaneseq
        %v1168 = vshrl.u32 %v1167, 7
        %v1169 = vsub.s32 0, %v1168
        %v1170 = vrot.slane %v1050, %v1169
        %v1171 = vadd.f32 %v1151, %v1170
        %v1172 = vadd.f32 %v1152, %v1170
        %v1173 = vadd.f32 %v1153, %v1170
        %v1174 = vadd.f32 %v1154, %v1170
        %v1175 = vadd.f32 %v1155, %v1170
        %v1176 = vadd.f32 %v1156, %v1170
        %v1177 = vadd.f32 %v1157, %v1170
        %v1178 = vadd.f32 %v1158, %v1170
        %v1179 = vadd.f32 %v1159, %v1170
        %v1180 = vadd.f32 %v1160, %v1170
        %v1181 = vadd.f32 %v1161, %v1170
        %v1182 = vadd.f32 %v1162, %v1170
        %v1183 = vadd.f32 %v1163, %v1170
        %v1184 = vadd.f32 %v1164, %v1170
        %v1185 = vadd.f32 %v1165, %v1170
        %v1186 = vadd.f32 %v1166, %v1170
        %1187 = vset.pattern.permute.xlu0 1
        %1188 = vperm.xlu0 %1187, %v1030
        %v1189 = vpop.permute.xlu0 %1188
        %1191 = vset.pattern.permute.xlu0 1
        %1192 = vperm.xlu0 %1191, %v1031
        %v1193 = vpop.permute.xlu0 %1192
        %1195 = vset.pattern.permute.xlu0 1
        %1196 = vperm.xlu0 %1195, %v1032
        %v1197 = vpop.permute.xlu0 %1196
        %1199 = vset.pattern.permute.xlu0 1
        %1200 = vperm.xlu0 %1199, %v1033
        %v1201 = vpop.permute.xlu0 %1200
        %1203 = vset.pattern.permute.xlu0 1
        %1204 = vperm.xlu0 %1203, %v1034
        %v1205 = vpop.permute.xlu0 %1204
        %1207 = vset.pattern.permute.xlu0 1
        %1208 = vperm.xlu0 %1207, %v1035
        %v1209 = vpop.permute.xlu0 %1208
        %1211 = vset.pattern.permute.xlu0 1
        %1212 = vperm.xlu0 %1211, %v1036
        %v1213 = vpop.permute.xlu0 %1212
        %1215 = vset.pattern.permute.xlu0 1
        %1216 = vperm.xlu0 %1215, %v1037
        %v1217 = vpop.permute.xlu0 %1216
        %1219 = vset.pattern.permute.xlu0 1
        %1220 = vperm.xlu0 %1219, %v1038
        %v1221 = vpop.permute.xlu0 %1220
        %1223 = vset.pattern.permute.xlu0 1
        %1224 = vperm.xlu0 %1223, %v1039
        %v1225 = vpop.permute.xlu0 %1224
        %1227 = vset.pattern.permute.xlu0 1
        %1228 = vperm.xlu0 %1227, %v1040
        %v1229 = vpop.permute.xlu0 %1228
        %1231 = vset.pattern.permute.xlu0 1
        %1232 = vperm.xlu0 %1231, %v1041
        %v1233 = vpop.permute.xlu0 %1232
        %1235 = vset.pattern.permute.xlu0 1
        %1236 = vperm.xlu0 %1235, %v1042
        %v1237 = vpop.permute.xlu0 %1236
        %1239 = vset.pattern.permute.xlu0 1
        %1240 = vperm.xlu0 %1239, %v1043
        %v1241 = vpop.permute.xlu0 %1240
        %1243 = vset.pattern.permute.xlu0 1
        %1244 = vperm.xlu0 %1243, %v1044
        %v1245 = vpop.permute.xlu0 %1244
        %1247 = vset.pattern.permute.xlu0 1
        %1248 = vperm.xlu0 %1247, %v1045
        %v1249 = vpop.permute.xlu0 %1248
        %v1251 = vlaneseq
        %v1252 = vshrl.u32 %v1251, 7
        %v1253 = vsub.s32 1, %v1252
        %v1254 = vrot.slane %v1047, %v1253
        %v1255 = vsub.f32 %v1189, %v1254
        %v1256 = vsub.f32 %v1193, %v1254
        %v1257 = vsub.f32 %v1197, %v1254
        %v1258 = vsub.f32 %v1201, %v1254
        %v1259 = vsub.f32 %v1205, %v1254
        %v1260 = vsub.f32 %v1209, %v1254
        %v1261 = vsub.f32 %v1213, %v1254
        %v1262 = vsub.f32 %v1217, %v1254
        %v1263 = vsub.f32 %v1221, %v1254
        %v1264 = vsub.f32 %v1225, %v1254
        %v1265 = vsub.f32 %v1229, %v1254
        %v1266 = vsub.f32 %v1233, %v1254
        %v1267 = vsub.f32 %v1237, %v1254
        %v1268 = vsub.f32 %v1241, %v1254
        %v1269 = vsub.f32 %v1245, %v1254
        %v1270 = vsub.f32 %v1249, %v1254
        %v1271 = vmul.f32 %v1255, %v1255
        %v1272 = vmul.f32 %v1256, %v1256
        %v1273 = vmul.f32 %v1257, %v1257
        %v1274 = vmul.f32 %v1258, %v1258
        %v1275 = vmul.f32 %v1259, %v1259
        %v1276 = vmul.f32 %v1260, %v1260
        %v1277 = vmul.f32 %v1261, %v1261
        %v1278 = vmul.f32 %v1262, %v1262
        %v1279 = vmul.f32 %v1263, %v1263
        %v1280 = vmul.f32 %v1264, %v1264
        %v1281 = vmul.f32 %v1265, %v1265
        %v1282 = vmul.f32 %v1266, %v1266
        %v1283 = vmul.f32 %v1267, %v1267
        %v1284 = vmul.f32 %v1268, %v1268
        %v1285 = vmul.f32 %v1269, %v1269
        %v1286 = vmul.f32 %v1270, %v1270
        %v1287 = vlaneseq
        %v1288 = vshrl.u32 %v1287, 7
        %v1289 = vsub.s32 1, %v1288
        %v1290 = vrot.slane %v1050, %v1289
        %v1291 = vadd.f32 %v1271, %v1290
        %v1292 = vadd.f32 %v1272, %v1290
        %v1293 = vadd.f32 %v1273, %v1290
        %v1294 = vadd.f32 %v1274, %v1290
        %v1295 = vadd.f32 %v1275, %v1290
        %v1296 = vadd.f32 %v1276, %v1290
        %v1297 = vadd.f32 %v1277, %v1290
        %v1298 = vadd.f32 %v1278, %v1290
        %v1299 = vadd.f32 %v1279, %v1290
        %v1300 = vadd.f32 %v1280, %v1290
        %v1301 = vadd.f32 %v1281, %v1290
        %v1302 = vadd.f32 %v1282, %v1290
        %v1303 = vadd.f32 %v1283, %v1290
        %v1304 = vadd.f32 %v1284, %v1290
        %v1305 = vadd.f32 %v1285, %v1290
        %v1306 = vadd.f32 %v1286, %v1290
        %v1307 = vmul.f32 %v1171, %v1291
        %v1308 = vmul.f32 %v1172, %v1292
        %v1309 = vmul.f32 %v1173, %v1293
        %v1310 = vmul.f32 %v1174, %v1294
        %v1311 = vmul.f32 %v1175, %v1295
        %v1312 = vmul.f32 %v1176, %v1296
        %v1313 = vmul.f32 %v1177, %v1297
        %v1314 = vmul.f32 %v1178, %v1298
        %v1315 = vmul.f32 %v1179, %v1299
        %v1316 = vmul.f32 %v1180, %v1300
        %v1317 = vmul.f32 %v1181, %v1301
        %v1318 = vmul.f32 %v1182, %v1302
        %v1319 = vmul.f32 %v1183, %v1303
        %v1320 = vmul.f32 %v1184, %v1304
        %v1321 = vmul.f32 %v1185, %v1305
        %v1322 = vmul.f32 %v1186, %v1306
        %1323 = vset.pattern.permute.xlu0 2
        %1324 = vperm.xlu0 %1323, %v1030
        %v1325 = vpop.permute.xlu0 %1324
        %1327 = vset.pattern.permute.xlu0 2
        %1328 = vperm.xlu0 %1327, %v1031
        %v1329 = vpop.permute.xlu0 %1328
        %1331 = vset.pattern.permute.xlu0 2
        %1332 = vperm.xlu0 %1331, %v1032
        %v1333 = vpop.permute.xlu0 %1332
        %1335 = vset.pattern.permute.xlu0 2
        %1336 = vperm.xlu0 %1335, %v1033
        %v1337 = vpop.permute.xlu0 %1336
        %1339 = vset.pattern.permute.xlu0 2
        %1340 = vperm.xlu0 %1339, %v1034
        %v1341 = vpop.permute.xlu0 %1340
        %1343 = vset.pattern.permute.xlu0 2
        %1344 = vperm.xlu0 %1343, %v1035
        %v1345 = vpop.permute.xlu0 %1344
        %1347 = vset.pattern.permute.xlu0 2
        %1348 = vperm.xlu0 %1347, %v1036
        %v1349 = vpop.permute.xlu0 %1348
        %1351 = vset.pattern.permute.xlu0 2
        %1352 = vperm.xlu0 %1351, %v1037
        %v1353 = vpop.permute.xlu0 %1352
        %1355 = vset.pattern.permute.xlu0 2
        %1356 = vperm.xlu0 %1355, %v1038
        %v1357 = vpop.permute.xlu0 %1356
        %1359 = vset.pattern.permute.xlu0 2
        %1360 = vperm.xlu0 %1359, %v1039
        %v1361 = vpop.permute.xlu0 %1360
        %1363 = vset.pattern.permute.xlu0 2
        %1364 = vperm.xlu0 %1363, %v1040
        %v1365 = vpop.permute.xlu0 %1364
        %1367 = vset.pattern.permute.xlu0 2
        %1368 = vperm.xlu0 %1367, %v1041
        %v1369 = vpop.permute.xlu0 %1368
        %1371 = vset.pattern.permute.xlu0 2
        %1372 = vperm.xlu0 %1371, %v1042
        %v1373 = vpop.permute.xlu0 %1372
        %1375 = vset.pattern.permute.xlu0 2
        %1376 = vperm.xlu0 %1375, %v1043
        %v1377 = vpop.permute.xlu0 %1376
        %1379 = vset.pattern.permute.xlu0 2
        %1380 = vperm.xlu0 %1379, %v1044
        %v1381 = vpop.permute.xlu0 %1380
        %1383 = vset.pattern.permute.xlu0 2
        %1384 = vperm.xlu0 %1383, %v1045
        %v1385 = vpop.permute.xlu0 %1384
        %v1387 = vlaneseq
        %v1388 = vshrl.u32 %v1387, 7
        %v1389 = vsub.s32 2, %v1388
        %v1390 = vrot.slane %v1047, %v1389
        %v1391 = vsub.f32 %v1325, %v1390
        %v1392 = vsub.f32 %v1329, %v1390
        %v1393 = vsub.f32 %v1333, %v1390
        %v1394 = vsub.f32 %v1337, %v1390
        %v1395 = vsub.f32 %v1341, %v1390
        %v1396 = vsub.f32 %v1345, %v1390
        %v1397 = vsub.f32 %v1349, %v1390
        %v1398 = vsub.f32 %v1353, %v1390
        %v1399 = vsub.f32 %v1357, %v1390
        %v1400 = vsub.f32 %v1361, %v1390
        %v1401 = vsub.f32 %v1365, %v1390
        %v1402 = vsub.f32 %v1369, %v1390
        %v1403 = vsub.f32 %v1373, %v1390
        %v1404 = vsub.f32 %v1377, %v1390
        %v1405 = vsub.f32 %v1381, %v1390
        %v1406 = vsub.f32 %v1385, %v1390
        %v1407 = vmul.f32 %v1391, %v1391
        %v1408 = vmul.f32 %v1392, %v1392
        %v1409 = vmul.f32 %v1393, %v1393
        %v1410 = vmul.f32 %v1394, %v1394
        %v1411 = vmul.f32 %v1395, %v1395
        %v1412 = vmul.f32 %v1396, %v1396
        %v1413 = vmul.f32 %v1397, %v1397
        %v1414 = vmul.f32 %v1398, %v1398
        %v1415 = vmul.f32 %v1399, %v1399
        %v1416 = vmul.f32 %v1400, %v1400
        %v1417 = vmul.f32 %v1401, %v1401
        %v1418 = vmul.f32 %v1402, %v1402
        %v1419 = vmul.f32 %v1403, %v1403
        %v1420 = vmul.f32 %v1404, %v1404
        %v1421 = vmul.f32 %v1405, %v1405
        %v1422 = vmul.f32 %v1406, %v1406
        %v1423 = vlaneseq
        %v1424 = vshrl.u32 %v1423, 7
        %v1425 = vsub.s32 2, %v1424
        %v1426 = vrot.slane %v1050, %v1425
        %v1427 = vadd.f32 %v1407, %v1426
        %v1428 = vadd.f32 %v1408, %v1426
        %v1429 = vadd.f32 %v1409, %v1426
        %v1430 = vadd.f32 %v1410, %v1426
        %v1431 = vadd.f32 %v1411, %v1426
        %v1432 = vadd.f32 %v1412, %v1426
        %v1433 = vadd.f32 %v1413, %v1426
        %v1434 = vadd.f32 %v1414, %v1426
        %v1435 = vadd.f32 %v1415, %v1426
        %v1436 = vadd.f32 %v1416, %v1426
        %v1437 = vadd.f32 %v1417, %v1426
        %v1438 = vadd.f32 %v1418, %v1426
        %v1439 = vadd.f32 %v1419, %v1426
        %v1440 = vadd.f32 %v1420, %v1426
        %v1441 = vadd.f32 %v1421, %v1426
        %v1442 = vadd.f32 %v1422, %v1426
        %v1443 = vmul.f32 %v1307, %v1427
        %v1444 = vmul.f32 %v1308, %v1428
        %v1445 = vmul.f32 %v1309, %v1429
        %v1446 = vmul.f32 %v1310, %v1430
        %v1447 = vmul.f32 %v1311, %v1431
        %v1448 = vmul.f32 %v1312, %v1432
        %v1449 = vmul.f32 %v1313, %v1433
        %v1450 = vmul.f32 %v1314, %v1434
        %v1451 = vmul.f32 %v1315, %v1435
        %v1452 = vmul.f32 %v1316, %v1436
        %v1453 = vmul.f32 %v1317, %v1437
        %v1454 = vmul.f32 %v1318, %v1438
        %v1455 = vmul.f32 %v1319, %v1439
        %v1456 = vmul.f32 %v1320, %v1440
        %v1457 = vmul.f32 %v1321, %v1441
        %v1458 = vmul.f32 %v1322, %v1442
        %1459 = vset.pattern.permute.xlu0 3
        %1460 = vperm.xlu0 %1459, %v1030
        %v1461 = vpop.permute.xlu0 %1460
        %1463 = vset.pattern.permute.xlu0 3
        %1464 = vperm.xlu0 %1463, %v1031
        %v1465 = vpop.permute.xlu0 %1464
        %1467 = vset.pattern.permute.xlu0 3
        %1468 = vperm.xlu0 %1467, %v1032
        %v1469 = vpop.permute.xlu0 %1468
        %1471 = vset.pattern.permute.xlu0 3
        %1472 = vperm.xlu0 %1471, %v1033
        %v1473 = vpop.permute.xlu0 %1472
        %1475 = vset.pattern.permute.xlu0 3
        %1476 = vperm.xlu0 %1475, %v1034
        %v1477 = vpop.permute.xlu0 %1476
        %1479 = vset.pattern.permute.xlu0 3
        %1480 = vperm.xlu0 %1479, %v1035
        %v1481 = vpop.permute.xlu0 %1480
        %1483 = vset.pattern.permute.xlu0 3
        %1484 = vperm.xlu0 %1483, %v1036
        %v1485 = vpop.permute.xlu0 %1484
        %1487 = vset.pattern.permute.xlu0 3
        %1488 = vperm.xlu0 %1487, %v1037
        %v1489 = vpop.permute.xlu0 %1488
        %1491 = vset.pattern.permute.xlu0 3
        %1492 = vperm.xlu0 %1491, %v1038
        %v1493 = vpop.permute.xlu0 %1492
        %1495 = vset.pattern.permute.xlu0 3
        %1496 = vperm.xlu0 %1495, %v1039
        %v1497 = vpop.permute.xlu0 %1496
        %1499 = vset.pattern.permute.xlu0 3
        %1500 = vperm.xlu0 %1499, %v1040
        %v1501 = vpop.permute.xlu0 %1500
        %1503 = vset.pattern.permute.xlu0 3
        %1504 = vperm.xlu0 %1503, %v1041
        %v1505 = vpop.permute.xlu0 %1504
        %1507 = vset.pattern.permute.xlu0 3
        %1508 = vperm.xlu0 %1507, %v1042
        %v1509 = vpop.permute.xlu0 %1508
        %1511 = vset.pattern.permute.xlu0 3
        %1512 = vperm.xlu0 %1511, %v1043
        %v1513 = vpop.permute.xlu0 %1512
        %1515 = vset.pattern.permute.xlu0 3
        %1516 = vperm.xlu0 %1515, %v1044
        %v1517 = vpop.permute.xlu0 %1516
        %1519 = vset.pattern.permute.xlu0 3
        %1520 = vperm.xlu0 %1519, %v1045
        %v1521 = vpop.permute.xlu0 %1520
        %v1523 = vlaneseq
        %v1524 = vshrl.u32 %v1523, 7
        %v1525 = vsub.s32 3, %v1524
        %v1526 = vrot.slane %v1047, %v1525
        %v1527 = vsub.f32 %v1461, %v1526
        %v1528 = vsub.f32 %v1465, %v1526
        %v1529 = vsub.f32 %v1469, %v1526
        %v1530 = vsub.f32 %v1473, %v1526
        %v1531 = vsub.f32 %v1477, %v1526
        %v1532 = vsub.f32 %v1481, %v1526
        %v1533 = vsub.f32 %v1485, %v1526
        %v1534 = vsub.f32 %v1489, %v1526
        %v1535 = vsub.f32 %v1493, %v1526
        %v1536 = vsub.f32 %v1497, %v1526
        %v1537 = vsub.f32 %v1501, %v1526
        %v1538 = vsub.f32 %v1505, %v1526
        %v1539 = vsub.f32 %v1509, %v1526
        %v1540 = vsub.f32 %v1513, %v1526
        %v1541 = vsub.f32 %v1517, %v1526
        %v1542 = vsub.f32 %v1521, %v1526
        %v1543 = vmul.f32 %v1527, %v1527
        %v1544 = vmul.f32 %v1528, %v1528
        %v1545 = vmul.f32 %v1529, %v1529
        %v1546 = vmul.f32 %v1530, %v1530
        %v1547 = vmul.f32 %v1531, %v1531
        %v1548 = vmul.f32 %v1532, %v1532
        %v1549 = vmul.f32 %v1533, %v1533
        %v1550 = vmul.f32 %v1534, %v1534
        %v1551 = vmul.f32 %v1535, %v1535
        %v1552 = vmul.f32 %v1536, %v1536
        %v1553 = vmul.f32 %v1537, %v1537
        %v1554 = vmul.f32 %v1538, %v1538
        %v1555 = vmul.f32 %v1539, %v1539
        %v1556 = vmul.f32 %v1540, %v1540
        %v1557 = vmul.f32 %v1541, %v1541
        %v1558 = vmul.f32 %v1542, %v1542
        %v1559 = vlaneseq
        %v1560 = vshrl.u32 %v1559, 7
        %v1561 = vsub.s32 3, %v1560
        %v1562 = vrot.slane %v1050, %v1561
        %v1563 = vadd.f32 %v1543, %v1562
        %v1564 = vadd.f32 %v1544, %v1562
        %v1565 = vadd.f32 %v1545, %v1562
        %v1566 = vadd.f32 %v1546, %v1562
        %v1567 = vadd.f32 %v1547, %v1562
        %v1568 = vadd.f32 %v1548, %v1562
        %v1569 = vadd.f32 %v1549, %v1562
        %v1570 = vadd.f32 %v1550, %v1562
        %v1571 = vadd.f32 %v1551, %v1562
        %v1572 = vadd.f32 %v1552, %v1562
        %v1573 = vadd.f32 %v1553, %v1562
        %v1574 = vadd.f32 %v1554, %v1562
        %v1575 = vadd.f32 %v1555, %v1562
        %v1576 = vadd.f32 %v1556, %v1562
        %v1577 = vadd.f32 %v1557, %v1562
        %v1578 = vadd.f32 %v1558, %v1562
        %v1579 = vmul.f32 %v1443, %v1563
        %v1580 = vmul.f32 %v1444, %v1564
        %v1581 = vmul.f32 %v1445, %v1565
        %v1582 = vmul.f32 %v1446, %v1566
        %v1583 = vmul.f32 %v1447, %v1567
        %v1584 = vmul.f32 %v1448, %v1568
        %v1585 = vmul.f32 %v1449, %v1569
        %v1586 = vmul.f32 %v1450, %v1570
        %v1587 = vmul.f32 %v1451, %v1571
        %v1588 = vmul.f32 %v1452, %v1572
        %v1589 = vmul.f32 %v1453, %v1573
        %v1590 = vmul.f32 %v1454, %v1574
        %v1591 = vmul.f32 %v1455, %v1575
        %v1592 = vmul.f32 %v1456, %v1576
        %v1593 = vmul.f32 %v1457, %v1577
        %v1594 = vmul.f32 %v1458, %v1578
        %v1595 = vrcp.pop %v1579
        %v1596 = vrcp.pop %v1580
        %v1597 = vrcp.pop %v1581
        %v1598 = vrcp.pop %v1582
        %v1599 = vrcp.pop %v1583
        %v1600 = vrcp.pop %v1584
        %v1601 = vrcp.pop %v1585
        %v1602 = vrcp.pop %v1586
        %v1603 = vrcp.pop %v1587
        %v1604 = vrcp.pop %v1588
        %v1605 = vrcp.pop %v1589
        %v1606 = vrcp.pop %v1590
        %v1607 = vrcp.pop %v1591
        %v1608 = vrcp.pop %v1592
        %v1609 = vrcp.pop %v1593
        %v1610 = vrcp.pop %v1594
        %v1611 = vmul.f32 %v1579, %v1595
        %v1612 = vmul.f32 %v1580, %v1596
        %v1613 = vmul.f32 %v1581, %v1597
        %v1614 = vmul.f32 %v1582, %v1598
        %v1615 = vmul.f32 %v1583, %v1599
        %v1616 = vmul.f32 %v1584, %v1600
        %v1617 = vmul.f32 %v1585, %v1601
        %v1618 = vmul.f32 %v1586, %v1602
        %v1619 = vmul.f32 %v1587, %v1603
        %v1620 = vmul.f32 %v1588, %v1604
        %v1621 = vmul.f32 %v1589, %v1605
        %v1622 = vmul.f32 %v1590, %v1606
        %v1623 = vmul.f32 %v1591, %v1607
        %v1624 = vmul.f32 %v1592, %v1608
        %v1625 = vmul.f32 %v1593, %v1609
        %v1626 = vmul.f32 %v1594, %v1610
        %v1627 = vsub.f32 2.0, %v1611
        %v1628 = vsub.f32 2.0, %v1612
        %v1629 = vsub.f32 2.0, %v1613
        %v1630 = vsub.f32 2.0, %v1614
        %v1631 = vsub.f32 2.0, %v1615
        %v1632 = vsub.f32 2.0, %v1616
        %v1633 = vsub.f32 2.0, %v1617
        %v1634 = vsub.f32 2.0, %v1618
        %v1635 = vsub.f32 2.0, %v1619
        %v1636 = vsub.f32 2.0, %v1620
        %v1637 = vsub.f32 2.0, %v1621
        %v1638 = vsub.f32 2.0, %v1622
        %v1639 = vsub.f32 2.0, %v1623
        %v1640 = vsub.f32 2.0, %v1624
        %v1641 = vsub.f32 2.0, %v1625
        %v1642 = vsub.f32 2.0, %v1626
        %v1643 = vmul.f32 %v1595, %v1627
        %v1644 = vmul.f32 %v1596, %v1628
        %v1645 = vmul.f32 %v1597, %v1629
        %v1646 = vmul.f32 %v1598, %v1630
        %v1647 = vmul.f32 %v1599, %v1631
        %v1648 = vmul.f32 %v1600, %v1632
        %v1649 = vmul.f32 %v1601, %v1633
        %v1650 = vmul.f32 %v1602, %v1634
        %v1651 = vmul.f32 %v1603, %v1635
        %v1652 = vmul.f32 %v1604, %v1636
        %v1653 = vmul.f32 %v1605, %v1637
        %v1654 = vmul.f32 %v1606, %v1638
        %v1655 = vmul.f32 %v1607, %v1639
        %v1656 = vmul.f32 %v1608, %v1640
        %v1657 = vmul.f32 %v1609, %v1641
        %v1658 = vmul.f32 %v1610, %v1642
        %v1659 = vadd.f32 %v1643, %v1644
        %v1660 = vadd.f32 %v1659, %v1645
        %v1661 = vadd.f32 %v1660, %v1646
        %v1662 = vadd.f32 %v1661, %v1647
        %v1663 = vadd.f32 %v1662, %v1648
        %v1664 = vadd.f32 %v1663, %v1649
        %v1665 = vadd.f32 %v1664, %v1650
        %v1666 = vadd.f32 %v1665, %v1651
        %v1667 = vadd.f32 %v1666, %v1652
        %v1668 = vadd.f32 %v1667, %v1653
        %v1669 = vadd.f32 %v1668, %v1654
        %v1670 = vadd.f32 %v1669, %v1655
        %v1671 = vadd.f32 %v1670, %v1656
        %v1672 = vadd.f32 %v1671, %v1657
        %v1673 = vadd.f32 %v1672, %v1658
        %v1674 = vrot.slane %v1673, 4
        %v1675 = vadd.f32 %v1673, %v1674
        %v1676 = vrot.slane %v1675, 2
        %v1677 = vadd.f32 %v1675, %v1676
        %v1678 = vrot.slane %v1677, 1
        %v1679 = vadd.f32 %v1677, %v1678
        %v1680 = vrcp.pop %v1679
        %v1681 = vmul.f32 %v1643, %v1680
        %v1682 = vmul.f32 %v1644, %v1680
        %v1683 = vmul.f32 %v1645, %v1680
        %v1684 = vmul.f32 %v1646, %v1680
        %v1685 = vmul.f32 %v1647, %v1680
        %v1686 = vmul.f32 %v1648, %v1680
        %v1687 = vmul.f32 %v1649, %v1680
        %v1688 = vmul.f32 %v1650, %v1680
        %v1689 = vmul.f32 %v1651, %v1680
        %v1690 = vmul.f32 %v1652, %v1680
        %v1691 = vmul.f32 %v1653, %v1680
        %v1692 = vmul.f32 %v1654, %v1680
        %v1693 = vmul.f32 %v1655, %v1680
        %v1694 = vmul.f32 %v1656, %v1680
        %v1695 = vmul.f32 %v1657, %v1680
        %v1696 = vmul.f32 %v1658, %v1680
        %s1697 = scalar_lea.vmem %s249, 32
        %v1698 = vld [vmem:[%s1697] sm:$0xff]
        %v1699 = vld [vmem:[%s1697 + $0x8] sm:$0xff]
        %v1700 = vld [vmem:[%s1697 + $0x10] sm:$0xff]
        %v1701 = vld [vmem:[%s1697 + $0x18] sm:$0xff]
        %1702 = vmatprep.subr.mxu0 0.0
        %1703 = vmatpush1.msra.mxu0 %v1681
        %1704 = vmatprep.subr.mxu0 0.0
        %1705 = vmatpush1.msra.mxu0 %v1682
        %1706 = vmatprep.subr.mxu0 0.0
        %1707 = vmatpush1.msra.mxu0 %v1683
        %1708 = vmatprep.subr.mxu0 0.0
        %1709 = vmatpush1.msra.mxu0 %v1684
        %1710 = vmatprep.subr.mxu0 0.0
        %1711 = vmatpush1.msra.mxu0 %v1685
        %1712 = vmatprep.subr.mxu0 0.0
        %1713 = vmatpush1.msra.mxu0 %v1686
        %1714 = vmatprep.subr.mxu0 0.0
        %1715 = vmatpush1.msra.mxu0 %v1687
        %1716 = vmatprep.subr.mxu0 0.0
        %1717 = vmatpush1.msra.mxu0 %v1688
        %1718 = vmatprep.subr.mxu0 0.0
        %1719 = vmatpush1.msra.mxu0 %v1689
        %1720 = vmatprep.subr.mxu0 0.0
        %1721 = vmatpush1.msra.mxu0 %v1690
        %1722 = vmatprep.subr.mxu0 0.0
        %1723 = vmatpush1.msra.mxu0 %v1691
        %1724 = vmatprep.subr.mxu0 0.0
        %1725 = vmatpush1.msra.mxu0 %v1692
        %1726 = vmatprep.subr.mxu0 0.0
        %1727 = vmatpush1.msra.mxu0 %v1693
        %1728 = vmatprep.subr.mxu0 0.0
        %1729 = vmatpush1.msra.mxu0 %v1694
        %1730 = vmatprep.subr.mxu0 0.0
        %1731 = vmatpush1.msra.mxu0 %v1695
        %1732 = vmatprep.subr.mxu0 0.0
        %1733 = vmatpush1.msra.mxu0 %v1696
        %1734 = vmatprep.subr.mxu0 0.0
        %1735 = vmatpush1.msra.mxu0 0.0
        %1736 = vmatprep.subr.mxu0 0.0
        %1737 = vmatpush1.msra.mxu0 0.0
        %1738 = vmatprep.subr.mxu0 0.0
        %1739 = vmatpush1.msra.mxu0 0.0
        %1740 = vmatprep.subr.mxu0 0.0
        %1741 = vmatpush1.msra.mxu0 0.0
        %1742 = vmatprep.subr.mxu0 0.0
        %1743 = vmatpush1.msra.mxu0 0.0
        %1744 = vmatprep.subr.mxu0 0.0
        %1745 = vmatpush1.msra.mxu0 0.0
        %1746 = vmatprep.subr.mxu0 0.0
        %1747 = vmatpush1.msra.mxu0 0.0
        %1748 = vmatprep.subr.mxu0 0.0
        %1749 = vmatpush1.msra.mxu0 0.0
        %1750 = vmatprep.subr.mxu0 0.0
        %1751 = vmatpush1.msra.mxu0 0.0
        %1752 = vmatprep.subr.mxu0 0.0
        %1753 = vmatpush1.msra.mxu0 0.0
        %1754 = vmatprep.subr.mxu0 0.0
        %1755 = vmatpush1.msra.mxu0 0.0
        %1756 = vmatprep.subr.mxu0 0.0
        %1757 = vmatpush1.msra.mxu0 0.0
        %1758 = vmatprep.subr.mxu0 0.0
        %1759 = vmatpush1.msra.mxu0 0.0
        %1760 = vmatprep.subr.mxu0 0.0
        %1761 = vmatpush1.msra.mxu0 0.0
        %1762 = vmatprep.subr.mxu0 0.0
        %1763 = vmatpush1.msra.mxu0 0.0
        %1764 = vmatprep.subr.mxu0 0.0
        %1765 = vmatpush1.msra.mxu0 0.0
        %1766 = vmatprep.mubr.f32.mxu0 0.0
        %1767 = vmatmul.mubr.f32.gmra.mrb[0].mxu0 %v1698
        %v1768 = vpop.f32.mrb[0].mxu0
        %v1769 = vadd.f32 0.0, %v1768
        %v1770 = vpop.f32.mrb[0].mxu0
        %1771 = vmatprep.mubr.f32.mxu0 0.0
        %1772 = vmatmul.mubr.f32.gmra.mrb[0].mxu0 %v1699
        %v1773 = vpop.f32.mrb[0].mxu0
        %v1774 = vadd.f32 0.0, %v1773
        %v1775 = vpop.f32.mrb[0].mxu0
        %1776 = vmatprep.mubr.f32.mxu0 0.0
        %1777 = vmatmul.mubr.f32.gmra.mrb[0].mxu0 %v1700
        %v1778 = vpop.f32.mrb[0].mxu0
        %v1779 = vadd.f32 0.0, %v1778
        %v1780 = vpop.f32.mrb[0].mxu0
        %1781 = vmatprep.mubr.f32.mxu0 0.0
        %1782 = vmatmul.mubr.f32.gmra.mrb[0].mxu0 %v1701
        %v1783 = vpop.f32.mrb[0].mxu0
        %v1784 = vadd.f32 0.0, %v1783
        %v1785 = vpop.f32.mrb[0].mxu0
        %1786 = vdwg.mxu0
        %s1787 = scalar_lea.vmem %s243, 32 [#allocation2]
        %1788 = vst [vmem:[%s1787] sm:$0xff] %v1769
        %1789 = vst [vmem:[%s1787 + $0x8] sm:$0xff] %v1774
        %1790 = vst [vmem:[%s1787 + $0x10] sm:$0xff] %v1779
        %1791 = vst [vmem:[%s1787 + $0x18] sm:$0xff] %v1784
        %s1792 = scalar_lea.vmem %s268, 256
        %v1793 = vld [vmem:[%s1792] sm:$0xff]
        %v1794 = vld [vmem:[%s1792 + $0x8] sm:$0xff]
        %v1795 = vld [vmem:[%s1792 + $0x10] sm:$0xff]
        %v1796 = vld [vmem:[%s1792 + $0x18] sm:$0xff]
        %v1797 = vld [vmem:[%s1792 + $0x20] sm:$0xff]
        %v1798 = vld [vmem:[%s1792 + $0x28] sm:$0xff]
        %v1799 = vld [vmem:[%s1792 + $0x30] sm:$0xff]
        %v1800 = vld [vmem:[%s1792 + $0x38] sm:$0xff]
        %v1801 = vld [vmem:[%s1792 + $0x40] sm:$0xff]
        %v1802 = vld [vmem:[%s1792 + $0x48] sm:$0xff]
        %v1803 = vld [vmem:[%s1792 + $0x50] sm:$0xff]
        %v1804 = vld [vmem:[%s1792 + $0x58] sm:$0xff]
        %v1805 = vld [vmem:[%s1792 + $0x60] sm:$0xff]
        %v1806 = vld [vmem:[%s1792 + $0x68] sm:$0xff]
        %v1807 = vld [vmem:[%s1792 + $0x70] sm:$0xff]
        %v1808 = vld [vmem:[%s1792 + $0x78] sm:$0xff]
        %s1809 = scalar_lea.vmem %s255, 8
        %v1810 = vld [vmem:[%s1809] sm:$0xf]
        %s1811 = scalar_lea.vmem %s261, 8
        %v1812 = vld [vmem:[%s1811] sm:$0xf]
        %v1813 = vmul.f32 %v1812, %v1812
        %1815 = vset.pattern.permute.xlu0 0
        %1816 = vperm.xlu0 %1815, %v1793
        %v1817 = vpop.permute.xlu0 %1816
        %1820 = vset.pattern.permute.xlu0 0
        %1821 = vperm.xlu0 %1820, %v1794
        %v1822 = vpop.permute.xlu0 %1821
        %1825 = vset.pattern.permute.xlu0 0
        %1826 = vperm.xlu0 %1825, %v1795
        %v1827 = vpop.permute.xlu0 %1826
        %1830 = vset.pattern.permute.xlu0 0
        %1831 = vperm.xlu0 %1830, %v1796
        %v1832 = vpop.permute.xlu0 %1831
        %1835 = vset.pattern.permute.xlu0 0
        %1836 = vperm.xlu0 %1835, %v1797
        %v1837 = vpop.permute.xlu0 %1836
        %1840 = vset.pattern.permute.xlu0 0
        %1841 = vperm.xlu0 %1840, %v1798
        %v1842 = vpop.permute.xlu0 %1841
        %1845 = vset.pattern.permute.xlu0 0
        %1846 = vperm.xlu0 %1845, %v1799
        %v1847 = vpop.permute.xlu0 %1846
        %1850 = vset.pattern.permute.xlu0 0
        %1851 = vperm.xlu0 %1850, %v1800
        %v1852 = vpop.permute.xlu0 %1851
        %1855 = vset.pattern.permute.xlu0 0
        %1856 = vperm.xlu0 %1855, %v1801
        %v1857 = vpop.permute.xlu0 %1856
        %1860 = vset.pattern.permute.xlu0 0
        %1861 = vperm.xlu0 %1860, %v1802
        %v1862 = vpop.permute.xlu0 %1861
        %1865 = vset.pattern.permute.xlu0 0
        %1866 = vperm.xlu0 %1865, %v1803
        %v1867 = vpop.permute.xlu0 %1866
        %1870 = vset.pattern.permute.xlu0 0
        %1871 = vperm.xlu0 %1870, %v1804
        %v1872 = vpop.permute.xlu0 %1871
        %1875 = vset.pattern.permute.xlu0 0
        %1876 = vperm.xlu0 %1875, %v1805
        %v1877 = vpop.permute.xlu0 %1876
        %1880 = vset.pattern.permute.xlu0 0
        %1881 = vperm.xlu0 %1880, %v1806
        %v1882 = vpop.permute.xlu0 %1881
        %1885 = vset.pattern.permute.xlu0 0
        %1886 = vperm.xlu0 %1885, %v1807
        %v1887 = vpop.permute.xlu0 %1886
        %1890 = vset.pattern.permute.xlu0 0
        %1891 = vperm.xlu0 %1890, %v1808
        %v1892 = vpop.permute.xlu0 %1891
        %v1894 = vlaneseq
        %v1895 = vshrl.u32 %v1894, 7
        %v1896 = vsub.s32 0, %v1895
        %v1897 = vrot.slane %v1810, %v1896
        %v1898 = vsub.f32 %v1817, %v1897
        %v1899 = vsub.f32 %v1822, %v1897
        %v1900 = vsub.f32 %v1827, %v1897
        %v1901 = vsub.f32 %v1832, %v1897
        %v1902 = vsub.f32 %v1837, %v1897
        %v1903 = vsub.f32 %v1842, %v1897
        %v1904 = vsub.f32 %v1847, %v1897
        %v1905 = vsub.f32 %v1852, %v1897
        %v1906 = vsub.f32 %v1857, %v1897
        %v1907 = vsub.f32 %v1862, %v1897
        %v1908 = vsub.f32 %v1867, %v1897
        %v1909 = vsub.f32 %v1872, %v1897
        %v1910 = vsub.f32 %v1877, %v1897
        %v1911 = vsub.f32 %v1882, %v1897
        %v1912 = vsub.f32 %v1887, %v1897
        %v1913 = vsub.f32 %v1892, %v1897
        %v1914 = vmul.f32 %v1898, %v1898
        %v1915 = vmul.f32 %v1899, %v1899
        %v1916 = vmul.f32 %v1900, %v1900
        %v1917 = vmul.f32 %v1901, %v1901
        %v1918 = vmul.f32 %v1902, %v1902
        %v1919 = vmul.f32 %v1903, %v1903
        %v1920 = vmul.f32 %v1904, %v1904
        %v1921 = vmul.f32 %v1905, %v1905
        %v1922 = vmul.f32 %v1906, %v1906
        %v1923 = vmul.f32 %v1907, %v1907
        %v1924 = vmul.f32 %v1908, %v1908
        %v1925 = vmul.f32 %v1909, %v1909
        %v1926 = vmul.f32 %v1910, %v1910
        %v1927 = vmul.f32 %v1911, %v1911
        %v1928 = vmul.f32 %v1912, %v1912
        %v1929 = vmul.f32 %v1913, %v1913
        %v1930 = vlaneseq
        %v1931 = vshrl.u32 %v1930, 7
        %v1932 = vsub.s32 0, %v1931
        %v1933 = vrot.slane %v1813, %v1932
        %v1934 = vadd.f32 %v1914, %v1933
        %v1935 = vadd.f32 %v1915, %v1933
        %v1936 = vadd.f32 %v1916, %v1933
        %v1937 = vadd.f32 %v1917, %v1933
        %v1938 = vadd.f32 %v1918, %v1933
        %v1939 = vadd.f32 %v1919, %v1933
        %v1940 = vadd.f32 %v1920, %v1933
        %v1941 = vadd.f32 %v1921, %v1933
        %v1942 = vadd.f32 %v1922, %v1933
        %v1943 = vadd.f32 %v1923, %v1933
        %v1944 = vadd.f32 %v1924, %v1933
        %v1945 = vadd.f32 %v1925, %v1933
        %v1946 = vadd.f32 %v1926, %v1933
        %v1947 = vadd.f32 %v1927, %v1933
        %v1948 = vadd.f32 %v1928, %v1933
        %v1949 = vadd.f32 %v1929, %v1933
        %1950 = vset.pattern.permute.xlu0 1
        %1951 = vperm.xlu0 %1950, %v1793
        %v1952 = vpop.permute.xlu0 %1951
        %1954 = vset.pattern.permute.xlu0 1
        %1955 = vperm.xlu0 %1954, %v1794
        %v1956 = vpop.permute.xlu0 %1955
        %1958 = vset.pattern.permute.xlu0 1
        %1959 = vperm.xlu0 %1958, %v1795
        %v1960 = vpop.permute.xlu0 %1959
        %1962 = vset.pattern.permute.xlu0 1
        %1963 = vperm.xlu0 %1962, %v1796
        %v1964 = vpop.permute.xlu0 %1963
        %1966 = vset.pattern.permute.xlu0 1
        %1967 = vperm.xlu0 %1966, %v1797
        %v1968 = vpop.permute.xlu0 %1967
        %1970 = vset.pattern.permute.xlu0 1
        %1971 = vperm.xlu0 %1970, %v1798
        %v1972 = vpop.permute.xlu0 %1971
        %1974 = vset.pattern.permute.xlu0 1
        %1975 = vperm.xlu0 %1974, %v1799
        %v1976 = vpop.permute.xlu0 %1975
        %1978 = vset.pattern.permute.xlu0 1
        %1979 = vperm.xlu0 %1978, %v1800
        %v1980 = vpop.permute.xlu0 %1979
        %1982 = vset.pattern.permute.xlu0 1
        %1983 = vperm.xlu0 %1982, %v1801
        %v1984 = vpop.permute.xlu0 %1983
        %1986 = vset.pattern.permute.xlu0 1
        %1987 = vperm.xlu0 %1986, %v1802
        %v1988 = vpop.permute.xlu0 %1987
        %1990 = vset.pattern.permute.xlu0 1
        %1991 = vperm.xlu0 %1990, %v1803
        %v1992 = vpop.permute.xlu0 %1991
        %1994 = vset.pattern.permute.xlu0 1
        %1995 = vperm.xlu0 %1994, %v1804
        %v1996 = vpop.permute.xlu0 %1995
        %1998 = vset.pattern.permute.xlu0 1
        %1999 = vperm.xlu0 %1998, %v1805
        %v2000 = vpop.permute.xlu0 %1999
        %2002 = vset.pattern.permute.xlu0 1
        %2003 = vperm.xlu0 %2002, %v1806
        %v2004 = vpop.permute.xlu0 %2003
        %2006 = vset.pattern.permute.xlu0 1
        %2007 = vperm.xlu0 %2006, %v1807
        %v2008 = vpop.permute.xlu0 %2007
        %2010 = vset.pattern.permute.xlu0 1
        %2011 = vperm.xlu0 %2010, %v1808
        %v2012 = vpop.permute.xlu0 %2011
        %v2014 = vlaneseq
        %v2015 = vshrl.u32 %v2014, 7
        %v2016 = vsub.s32 1, %v2015
        %v2017 = vrot.slane %v1810, %v2016
        %v2018 = vsub.f32 %v1952, %v2017
        %v2019 = vsub.f32 %v1956, %v2017
        %v2020 = vsub.f32 %v1960, %v2017
        %v2021 = vsub.f32 %v1964, %v2017
        %v2022 = vsub.f32 %v1968, %v2017
        %v2023 = vsub.f32 %v1972, %v2017
        %v2024 = vsub.f32 %v1976, %v2017
        %v2025 = vsub.f32 %v1980, %v2017
        %v2026 = vsub.f32 %v1984, %v2017
        %v2027 = vsub.f32 %v1988, %v2017
        %v2028 = vsub.f32 %v1992, %v2017
        %v2029 = vsub.f32 %v1996, %v2017
        %v2030 = vsub.f32 %v2000, %v2017
        %v2031 = vsub.f32 %v2004, %v2017
        %v2032 = vsub.f32 %v2008, %v2017
        %v2033 = vsub.f32 %v2012, %v2017
        %v2034 = vmul.f32 %v2018, %v2018
        %v2035 = vmul.f32 %v2019, %v2019
        %v2036 = vmul.f32 %v2020, %v2020
        %v2037 = vmul.f32 %v2021, %v2021
        %v2038 = vmul.f32 %v2022, %v2022
        %v2039 = vmul.f32 %v2023, %v2023
        %v2040 = vmul.f32 %v2024, %v2024
        %v2041 = vmul.f32 %v2025, %v2025
        %v2042 = vmul.f32 %v2026, %v2026
        %v2043 = vmul.f32 %v2027, %v2027
        %v2044 = vmul.f32 %v2028, %v2028
        %v2045 = vmul.f32 %v2029, %v2029
        %v2046 = vmul.f32 %v2030, %v2030
        %v2047 = vmul.f32 %v2031, %v2031
        %v2048 = vmul.f32 %v2032, %v2032
        %v2049 = vmul.f32 %v2033, %v2033
        %v2050 = vlaneseq
        %v2051 = vshrl.u32 %v2050, 7
        %v2052 = vsub.s32 1, %v2051
        %v2053 = vrot.slane %v1813, %v2052
        %v2054 = vadd.f32 %v2034, %v2053
        %v2055 = vadd.f32 %v2035, %v2053
        %v2056 = vadd.f32 %v2036, %v2053
        %v2057 = vadd.f32 %v2037, %v2053
        %v2058 = vadd.f32 %v2038, %v2053
        %v2059 = vadd.f32 %v2039, %v2053
        %v2060 = vadd.f32 %v2040, %v2053
        %v2061 = vadd.f32 %v2041, %v2053
        %v2062 = vadd.f32 %v2042, %v2053
        %v2063 = vadd.f32 %v2043, %v2053
        %v2064 = vadd.f32 %v2044, %v2053
        %v2065 = vadd.f32 %v2045, %v2053
        %v2066 = vadd.f32 %v2046, %v2053
        %v2067 = vadd.f32 %v2047, %v2053
        %v2068 = vadd.f32 %v2048, %v2053
        %v2069 = vadd.f32 %v2049, %v2053
        %v2070 = vmul.f32 %v1934, %v2054
        %v2071 = vmul.f32 %v1935, %v2055
        %v2072 = vmul.f32 %v1936, %v2056
        %v2073 = vmul.f32 %v1937, %v2057
        %v2074 = vmul.f32 %v1938, %v2058
        %v2075 = vmul.f32 %v1939, %v2059
        %v2076 = vmul.f32 %v1940, %v2060
        %v2077 = vmul.f32 %v1941, %v2061
        %v2078 = vmul.f32 %v1942, %v2062
        %v2079 = vmul.f32 %v1943, %v2063
        %v2080 = vmul.f32 %v1944, %v2064
        %v2081 = vmul.f32 %v1945, %v2065
        %v2082 = vmul.f32 %v1946, %v2066
        %v2083 = vmul.f32 %v1947, %v2067
        %v2084 = vmul.f32 %v1948, %v2068
        %v2085 = vmul.f32 %v1949, %v2069
        %2086 = vset.pattern.permute.xlu0 2
        %2087 = vperm.xlu0 %2086, %v1793
        %v2088 = vpop.permute.xlu0 %2087
        %2090 = vset.pattern.permute.xlu0 2
        %2091 = vperm.xlu0 %2090, %v1794
        %v2092 = vpop.permute.xlu0 %2091
        %2094 = vset.pattern.permute.xlu0 2
        %2095 = vperm.xlu0 %2094, %v1795
        %v2096 = vpop.permute.xlu0 %2095
        %2098 = vset.pattern.permute.xlu0 2
        %2099 = vperm.xlu0 %2098, %v1796
        %v2100 = vpop.permute.xlu0 %2099
        %2102 = vset.pattern.permute.xlu0 2
        %2103 = vperm.xlu0 %2102, %v1797
        %v2104 = vpop.permute.xlu0 %2103
        %2106 = vset.pattern.permute.xlu0 2
        %2107 = vperm.xlu0 %2106, %v1798
        %v2108 = vpop.permute.xlu0 %2107
        %2110 = vset.pattern.permute.xlu0 2
        %2111 = vperm.xlu0 %2110, %v1799
        %v2112 = vpop.permute.xlu0 %2111
        %2114 = vset.pattern.permute.xlu0 2
        %2115 = vperm.xlu0 %2114, %v1800
        %v2116 = vpop.permute.xlu0 %2115
        %2118 = vset.pattern.permute.xlu0 2
        %2119 = vperm.xlu0 %2118, %v1801
        %v2120 = vpop.permute.xlu0 %2119
        %2122 = vset.pattern.permute.xlu0 2
        %2123 = vperm.xlu0 %2122, %v1802
        %v2124 = vpop.permute.xlu0 %2123
        %2126 = vset.pattern.permute.xlu0 2
        %2127 = vperm.xlu0 %2126, %v1803
        %v2128 = vpop.permute.xlu0 %2127
        %2130 = vset.pattern.permute.xlu0 2
        %2131 = vperm.xlu0 %2130, %v1804
        %v2132 = vpop.permute.xlu0 %2131
        %2134 = vset.pattern.permute.xlu0 2
        %2135 = vperm.xlu0 %2134, %v1805
        %v2136 = vpop.permute.xlu0 %2135
        %2138 = vset.pattern.permute.xlu0 2
        %2139 = vperm.xlu0 %2138, %v1806
        %v2140 = vpop.permute.xlu0 %2139
        %2142 = vset.pattern.permute.xlu0 2
        %2143 = vperm.xlu0 %2142, %v1807
        %v2144 = vpop.permute.xlu0 %2143
        %2146 = vset.pattern.permute.xlu0 2
        %2147 = vperm.xlu0 %2146, %v1808
        %v2148 = vpop.permute.xlu0 %2147
        %v2150 = vlaneseq
        %v2151 = vshrl.u32 %v2150, 7
        %v2152 = vsub.s32 2, %v2151
        %v2153 = vrot.slane %v1810, %v2152
        %v2154 = vsub.f32 %v2088, %v2153
        %v2155 = vsub.f32 %v2092, %v2153
        %v2156 = vsub.f32 %v2096, %v2153
        %v2157 = vsub.f32 %v2100, %v2153
        %v2158 = vsub.f32 %v2104, %v2153
        %v2159 = vsub.f32 %v2108, %v2153
        %v2160 = vsub.f32 %v2112, %v2153
        %v2161 = vsub.f32 %v2116, %v2153
        %v2162 = vsub.f32 %v2120, %v2153
        %v2163 = vsub.f32 %v2124, %v2153
        %v2164 = vsub.f32 %v2128, %v2153
        %v2165 = vsub.f32 %v2132, %v2153
        %v2166 = vsub.f32 %v2136, %v2153
        %v2167 = vsub.f32 %v2140, %v2153
        %v2168 = vsub.f32 %v2144, %v2153
        %v2169 = vsub.f32 %v2148, %v2153
        %v2170 = vmul.f32 %v2154, %v2154
        %v2171 = vmul.f32 %v2155, %v2155
        %v2172 = vmul.f32 %v2156, %v2156
        %v2173 = vmul.f32 %v2157, %v2157
        %v2174 = vmul.f32 %v2158, %v2158
        %v2175 = vmul.f32 %v2159, %v2159
        %v2176 = vmul.f32 %v2160, %v2160
        %v2177 = vmul.f32 %v2161, %v2161
        %v2178 = vmul.f32 %v2162, %v2162
        %v2179 = vmul.f32 %v2163, %v2163
        %v2180 = vmul.f32 %v2164, %v2164
        %v2181 = vmul.f32 %v2165, %v2165
        %v2182 = vmul.f32 %v2166, %v2166
        %v2183 = vmul.f32 %v2167, %v2167
        %v2184 = vmul.f32 %v2168, %v2168
        %v2185 = vmul.f32 %v2169, %v2169
        %v2186 = vlaneseq
        %v2187 = vshrl.u32 %v2186, 7
        %v2188 = vsub.s32 2, %v2187
        %v2189 = vrot.slane %v1813, %v2188
        %v2190 = vadd.f32 %v2170, %v2189
        %v2191 = vadd.f32 %v2171, %v2189
        %v2192 = vadd.f32 %v2172, %v2189
        %v2193 = vadd.f32 %v2173, %v2189
        %v2194 = vadd.f32 %v2174, %v2189
        %v2195 = vadd.f32 %v2175, %v2189
        %v2196 = vadd.f32 %v2176, %v2189
        %v2197 = vadd.f32 %v2177, %v2189
        %v2198 = vadd.f32 %v2178, %v2189
        %v2199 = vadd.f32 %v2179, %v2189
        %v2200 = vadd.f32 %v2180, %v2189
        %v2201 = vadd.f32 %v2181, %v2189
        %v2202 = vadd.f32 %v2182, %v2189
        %v2203 = vadd.f32 %v2183, %v2189
        %v2204 = vadd.f32 %v2184, %v2189
        %v2205 = vadd.f32 %v2185, %v2189
        %v2206 = vmul.f32 %v2070, %v2190
        %v2207 = vmul.f32 %v2071, %v2191
        %v2208 = vmul.f32 %v2072, %v2192
        %v2209 = vmul.f32 %v2073, %v2193
        %v2210 = vmul.f32 %v2074, %v2194
        %v2211 = vmul.f32 %v2075, %v2195
        %v2212 = vmul.f32 %v2076, %v2196
        %v2213 = vmul.f32 %v2077, %v2197
        %v2214 = vmul.f32 %v2078, %v2198
        %v2215 = vmul.f32 %v2079, %v2199
        %v2216 = vmul.f32 %v2080, %v2200
        %v2217 = vmul.f32 %v2081, %v2201
        %v2218 = vmul.f32 %v2082, %v2202
        %v2219 = vmul.f32 %v2083, %v2203
        %v2220 = vmul.f32 %v2084, %v2204
        %v2221 = vmul.f32 %v2085, %v2205
        %2222 = vset.pattern.permute.xlu0 3
        %2223 = vperm.xlu0 %2222, %v1793
        %v2224 = vpop.permute.xlu0 %2223
        %2226 = vset.pattern.permute.xlu0 3
        %2227 = vperm.xlu0 %2226, %v1794
        %v2228 = vpop.permute.xlu0 %2227
        %2230 = vset.pattern.permute.xlu0 3
        %2231 = vperm.xlu0 %2230, %v1795
        %v2232 = vpop.permute.xlu0 %2231
        %2234 = vset.pattern.permute.xlu0 3
        %2235 = vperm.xlu0 %2234, %v1796
        %v2236 = vpop.permute.xlu0 %2235
        %2238 = vset.pattern.permute.xlu0 3
        %2239 = vperm.xlu0 %2238, %v1797
        %v2240 = vpop.permute.xlu0 %2239
        %2242 = vset.pattern.permute.xlu0 3
        %2243 = vperm.xlu0 %2242, %v1798
        %v2244 = vpop.permute.xlu0 %2243
        %2246 = vset.pattern.permute.xlu0 3
        %2247 = vperm.xlu0 %2246, %v1799
        %v2248 = vpop.permute.xlu0 %2247
        %2250 = vset.pattern.permute.xlu0 3
        %2251 = vperm.xlu0 %2250, %v1800
        %v2252 = vpop.permute.xlu0 %2251
        %2254 = vset.pattern.permute.xlu0 3
        %2255 = vperm.xlu0 %2254, %v1801
        %v2256 = vpop.permute.xlu0 %2255
        %2258 = vset.pattern.permute.xlu0 3
        %2259 = vperm.xlu0 %2258, %v1802
        %v2260 = vpop.permute.xlu0 %2259
        %2262 = vset.pattern.permute.xlu0 3
        %2263 = vperm.xlu0 %2262, %v1803
        %v2264 = vpop.permute.xlu0 %2263
        %2266 = vset.pattern.permute.xlu0 3
        %2267 = vperm.xlu0 %2266, %v1804
        %v2268 = vpop.permute.xlu0 %2267
        %2270 = vset.pattern.permute.xlu0 3
        %2271 = vperm.xlu0 %2270, %v1805
        %v2272 = vpop.permute.xlu0 %2271
        %2274 = vset.pattern.permute.xlu0 3
        %2275 = vperm.xlu0 %2274, %v1806
        %v2276 = vpop.permute.xlu0 %2275
        %2278 = vset.pattern.permute.xlu0 3
        %2279 = vperm.xlu0 %2278, %v1807
        %v2280 = vpop.permute.xlu0 %2279
        %2282 = vset.pattern.permute.xlu0 3
        %2283 = vperm.xlu0 %2282, %v1808
        %v2284 = vpop.permute.xlu0 %2283
        %v2286 = vlaneseq
        %v2287 = vshrl.u32 %v2286, 7
        %v2288 = vsub.s32 3, %v2287
        %v2289 = vrot.slane %v1810, %v2288
        %v2290 = vsub.f32 %v2224, %v2289
        %v2291 = vsub.f32 %v2228, %v2289
        %v2292 = vsub.f32 %v2232, %v2289
        %v2293 = vsub.f32 %v2236, %v2289
        %v2294 = vsub.f32 %v2240, %v2289
        %v2295 = vsub.f32 %v2244, %v2289
        %v2296 = vsub.f32 %v2248, %v2289
        %v2297 = vsub.f32 %v2252, %v2289
        %v2298 = vsub.f32 %v2256, %v2289
        %v2299 = vsub.f32 %v2260, %v2289
        %v2300 = vsub.f32 %v2264, %v2289
        %v2301 = vsub.f32 %v2268, %v2289
        %v2302 = vsub.f32 %v2272, %v2289
        %v2303 = vsub.f32 %v2276, %v2289
        %v2304 = vsub.f32 %v2280, %v2289
        %v2305 = vsub.f32 %v2284, %v2289
        %v2306 = vmul.f32 %v2290, %v2290
        %v2307 = vmul.f32 %v2291, %v2291
        %v2308 = vmul.f32 %v2292, %v2292
        %v2309 = vmul.f32 %v2293, %v2293
        %v2310 = vmul.f32 %v2294, %v2294
        %v2311 = vmul.f32 %v2295, %v2295
        %v2312 = vmul.f32 %v2296, %v2296
        %v2313 = vmul.f32 %v2297, %v2297
        %v2314 = vmul.f32 %v2298, %v2298
        %v2315 = vmul.f32 %v2299, %v2299
        %v2316 = vmul.f32 %v2300, %v2300
        %v2317 = vmul.f32 %v2301, %v2301
        %v2318 = vmul.f32 %v2302, %v2302
        %v2319 = vmul.f32 %v2303, %v2303
        %v2320 = vmul.f32 %v2304, %v2304
        %v2321 = vmul.f32 %v2305, %v2305
        %v2322 = vlaneseq
        %v2323 = vshrl.u32 %v2322, 7
        %v2324 = vsub.s32 3, %v2323
        %v2325 = vrot.slane %v1813, %v2324
        %v2326 = vadd.f32 %v2306, %v2325
        %v2327 = vadd.f32 %v2307, %v2325
        %v2328 = vadd.f32 %v2308, %v2325
        %v2329 = vadd.f32 %v2309, %v2325
        %v2330 = vadd.f32 %v2310, %v2325
        %v2331 = vadd.f32 %v2311, %v2325
        %v2332 = vadd.f32 %v2312, %v2325
        %v2333 = vadd.f32 %v2313, %v2325
        %v2334 = vadd.f32 %v2314, %v2325
        %v2335 = vadd.f32 %v2315, %v2325
        %v2336 = vadd.f32 %v2316, %v2325
        %v2337 = vadd.f32 %v2317, %v2325
        %v2338 = vadd.f32 %v2318, %v2325
        %v2339 = vadd.f32 %v2319, %v2325
        %v2340 = vadd.f32 %v2320, %v2325
        %v2341 = vadd.f32 %v2321, %v2325
        %v2342 = vmul.f32 %v2206, %v2326
        %v2343 = vmul.f32 %v2207, %v2327
        %v2344 = vmul.f32 %v2208, %v2328
        %v2345 = vmul.f32 %v2209, %v2329
        %v2346 = vmul.f32 %v2210, %v2330
        %v2347 = vmul.f32 %v2211, %v2331
        %v2348 = vmul.f32 %v2212, %v2332
        %v2349 = vmul.f32 %v2213, %v2333
        %v2350 = vmul.f32 %v2214, %v2334
        %v2351 = vmul.f32 %v2215, %v2335
        %v2352 = vmul.f32 %v2216, %v2336
        %v2353 = vmul.f32 %v2217, %v2337
        %v2354 = vmul.f32 %v2218, %v2338
        %v2355 = vmul.f32 %v2219, %v2339
        %v2356 = vmul.f32 %v2220, %v2340
        %v2357 = vmul.f32 %v2221, %v2341
        %v2358 = vrcp.pop %v2342
        %v2359 = vrcp.pop %v2343
        %v2360 = vrcp.pop %v2344
        %v2361 = vrcp.pop %v2345
        %v2362 = vrcp.pop %v2346
        %v2363 = vrcp.pop %v2347
        %v2364 = vrcp.pop %v2348
        %v2365 = vrcp.pop %v2349
        %v2366 = vrcp.pop %v2350
        %v2367 = vrcp.pop %v2351
        %v2368 = vrcp.pop %v2352
        %v2369 = vrcp.pop %v2353
        %v2370 = vrcp.pop %v2354
        %v2371 = vrcp.pop %v2355
        %v2372 = vrcp.pop %v2356
        %v2373 = vrcp.pop %v2357
        %v2374 = vmul.f32 %v2342, %v2358
        %v2375 = vmul.f32 %v2343, %v2359
        %v2376 = vmul.f32 %v2344, %v2360
        %v2377 = vmul.f32 %v2345, %v2361
        %v2378 = vmul.f32 %v2346, %v2362
        %v2379 = vmul.f32 %v2347, %v2363
        %v2380 = vmul.f32 %v2348, %v2364
        %v2381 = vmul.f32 %v2349, %v2365
        %v2382 = vmul.f32 %v2350, %v2366
        %v2383 = vmul.f32 %v2351, %v2367
        %v2384 = vmul.f32 %v2352, %v2368
        %v2385 = vmul.f32 %v2353, %v2369
        %v2386 = vmul.f32 %v2354, %v2370
        %v2387 = vmul.f32 %v2355, %v2371
        %v2388 = vmul.f32 %v2356, %v2372
        %v2389 = vmul.f32 %v2357, %v2373
        %v2390 = vsub.f32 2.0, %v2374
        %v2391 = vsub.f32 2.0, %v2375
        %v2392 = vsub.f32 2.0, %v2376
        %v2393 = vsub.f32 2.0, %v2377
        %v2394 = vsub.f32 2.0, %v2378
        %v2395 = vsub.f32 2.0, %v2379
        %v2396 = vsub.f32 2.0, %v2380
        %v2397 = vsub.f32 2.0, %v2381
        %v2398 = vsub.f32 2.0, %v2382
        %v2399 = vsub.f32 2.0, %v2383
        %v2400 = vsub.f32 2.0, %v2384
        %v2401 = vsub.f32 2.0, %v2385
        %v2402 = vsub.f32 2.0, %v2386
        %v2403 = vsub.f32 2.0, %v2387
        %v2404 = vsub.f32 2.0, %v2388
        %v2405 = vsub.f32 2.0, %v2389
        %v2406 = vmul.f32 %v2358, %v2390
        %v2407 = vmul.f32 %v2359, %v2391
        %v2408 = vmul.f32 %v2360, %v2392
        %v2409 = vmul.f32 %v2361, %v2393
        %v2410 = vmul.f32 %v2362, %v2394
        %v2411 = vmul.f32 %v2363, %v2395
        %v2412 = vmul.f32 %v2364, %v2396
        %v2413 = vmul.f32 %v2365, %v2397
        %v2414 = vmul.f32 %v2366, %v2398
        %v2415 = vmul.f32 %v2367, %v2399
        %v2416 = vmul.f32 %v2368, %v2400
        %v2417 = vmul.f32 %v2369, %v2401
        %v2418 = vmul.f32 %v2370, %v2402
        %v2419 = vmul.f32 %v2371, %v2403
        %v2420 = vmul.f32 %v2372, %v2404
        %v2421 = vmul.f32 %v2373, %v2405
        %v2422 = vadd.f32 %v2406, %v2407
        %v2423 = vadd.f32 %v2422, %v2408
        %v2424 = vadd.f32 %v2423, %v2409
        %v2425 = vadd.f32 %v2424, %v2410
        %v2426 = vadd.f32 %v2425, %v2411
        %v2427 = vadd.f32 %v2426, %v2412
        %v2428 = vadd.f32 %v2427, %v2413
        %v2429 = vadd.f32 %v2428, %v2414
        %v2430 = vadd.f32 %v2429, %v2415
        %v2431 = vadd.f32 %v2430, %v2416
        %v2432 = vadd.f32 %v2431, %v2417
        %v2433 = vadd.f32 %v2432, %v2418
        %v2434 = vadd.f32 %v2433, %v2419
        %v2435 = vadd.f32 %v2434, %v2420
        %v2436 = vadd.f32 %v2435, %v2421
        %v2437 = vrot.slane %v2436, 4
        %v2438 = vadd.f32 %v2436, %v2437
        %v2439 = vrot.slane %v2438, 2
        %v2440 = vadd.f32 %v2438, %v2439
        %v2441 = vrot.slane %v2440, 1
        %v2442 = vadd.f32 %v2440, %v2441
        %v2443 = vrcp.pop %v2442
        %v2444 = vmul.f32 %v2406, %v2443
        %v2445 = vmul.f32 %v2407, %v2443
        %v2446 = vmul.f32 %v2408, %v2443
        %v2447 = vmul.f32 %v2409, %v2443
        %v2448 = vmul.f32 %v2410, %v2443
        %v2449 = vmul.f32 %v2411, %v2443
        %v2450 = vmul.f32 %v2412, %v2443
        %v2451 = vmul.f32 %v2413, %v2443
        %v2452 = vmul.f32 %v2414, %v2443
        %v2453 = vmul.f32 %v2415, %v2443
        %v2454 = vmul.f32 %v2416, %v2443
        %v2455 = vmul.f32 %v2417, %v2443
        %v2456 = vmul.f32 %v2418, %v2443
        %v2457 = vmul.f32 %v2419, %v2443
        %v2458 = vmul.f32 %v2420, %v2443
        %v2459 = vmul.f32 %v2421, %v2443
        %s2460 = scalar_lea.vmem %s249, 64
        %v2461 = vld [vmem:[%s2460] sm:$0xff]
        %v2462 = vld [vmem:[%s2460 + $0x8] sm:$0xff]
        %v2463 = vld [vmem:[%s2460 + $0x10] sm:$0xff]
        %v2464 = vld [vmem:[%s2460 + $0x18] sm:$0xff]
        %2465 = vmatprep.subr.mxu0 0.0
        %2466 = vmatpush1.msra.mxu0 %v2444
        %2467 = vmatprep.subr.mxu0 0.0
        %2468 = vmatpush1.msra.mxu0 %v2445
        %2469 = vmatprep.subr.mxu0 0.0
        %2470 = vmatpush1.msra.mxu0 %v2446
        %2471 = vmatprep.subr.mxu0 0.0
        %2472 = vmatpush1.msra.mxu0 %v2447
        %2473 = vmatprep.subr.mxu0 0.0
        %2474 = vmatpush1.msra.mxu0 %v2448
        %2475 = vmatprep.subr.mxu0 0.0
        %2476 = vmatpush1.msra.mxu0 %v2449
        %2477 = vmatprep.subr.mxu0 0.0
        %2478 = vmatpush1.msra.mxu0 %v2450
        %2479 = vmatprep.subr.mxu0 0.0
        %2480 = vmatpush1.msra.mxu0 %v2451
        %2481 = vmatprep.subr.mxu0 0.0
        %2482 = vmatpush1.msra.mxu0 %v2452
        %2483 = vmatprep.subr.mxu0 0.0
        %2484 = vmatpush1.msra.mxu0 %v2453
        %2485 = vmatprep.subr.mxu0 0.0
        %2486 = vmatpush1.msra.mxu0 %v2454
        %2487 = vmatprep.subr.mxu0 0.0
        %2488 = vmatpush1.msra.mxu0 %v2455
        %2489 = vmatprep.subr.mxu0 0.0
        %2490 = vmatpush1.msra.mxu0 %v2456
        %2491 = vmatprep.subr.mxu0 0.0
        %2492 = vmatpush1.msra.mxu0 %v2457
        %2493 = vmatprep.subr.mxu0 0.0
        %2494 = vmatpush1.msra.mxu0 %v2458
        %2495 = vmatprep.subr.mxu0 0.0
        %2496 = vmatpush1.msra.mxu0 %v2459
        %2497 = vmatprep.subr.mxu0 0.0
        %2498 = vmatpush1.msra.mxu0 0.0
        %2499 = vmatprep.subr.mxu0 0.0
        %2500 = vmatpush1.msra.mxu0 0.0
        %2501 = vmatprep.subr.mxu0 0.0
        %2502 = vmatpush1.msra.mxu0 0.0
        %2503 = vmatprep.subr.mxu0 0.0
        %2504 = vmatpush1.msra.mxu0 0.0
        %2505 = vmatprep.subr.mxu0 0.0
        %2506 = vmatpush1.msra.mxu0 0.0
        %2507 = vmatprep.subr.mxu0 0.0
        %2508 = vmatpush1.msra.mxu0 0.0
        %2509 = vmatprep.subr.mxu0 0.0
        %2510 = vmatpush1.msra.mxu0 0.0
        %2511 = vmatprep.subr.mxu0 0.0
        %2512 = vmatpush1.msra.mxu0 0.0
        %2513 = vmatprep.subr.mxu0 0.0
        %2514 = vmatpush1.msra.mxu0 0.0
        %2515 = vmatprep.subr.mxu0 0.0
        %2516 = vmatpush1.msra.mxu0 0.0
        %2517 = vmatprep.subr.mxu0 0.0
        %2518 = vmatpush1.msra.mxu0 0.0
        %2519 = vmatprep.subr.mxu0 0.0
        %2520 = vmatpush1.msra.mxu0 0.0
        %2521 = vmatprep.subr.mxu0 0.0
        %2522 = vmatpush1.msra.mxu0 0.0
        %2523 = vmatprep.subr.mxu0 0.0
        %2524 = vmatpush1.msra.mxu0 0.0
        %2525 = vmatprep.subr.mxu0 0.0
        %2526 = vmatpush1.msra.mxu0 0.0
        %2527 = vmatprep.subr.mxu0 0.0
        %2528 = vmatpush1.msra.mxu0 0.0
        %2529 = vmatprep.mubr.f32.mxu0 0.0
        %2530 = vmatmul.mubr.f32.gmra.mrb[0].mxu0 %v2461
        %v2531 = vpop.f32.mrb[0].mxu0
        %v2532 = vadd.f32 0.0, %v2531
        %v2533 = vpop.f32.mrb[0].mxu0
        %2534 = vmatprep.mubr.f32.mxu0 0.0
        %2535 = vmatmul.mubr.f32.gmra.mrb[0].mxu0 %v2462
        %v2536 = vpop.f32.mrb[0].mxu0
        %v2537 = vadd.f32 0.0, %v2536
        %v2538 = vpop.f32.mrb[0].mxu0
        %2539 = vmatprep.mubr.f32.mxu0 0.0
        %2540 = vmatmul.mubr.f32.gmra.mrb[0].mxu0 %v2463
        %v2541 = vpop.f32.mrb[0].mxu0
        %v2542 = vadd.f32 0.0, %v2541
        %v2543 = vpop.f32.mrb[0].mxu0
        %2544 = vmatprep.mubr.f32.mxu0 0.0
        %2545 = vmatmul.mubr.f32.gmra.mrb[0].mxu0 %v2464
        %v2546 = vpop.f32.mrb[0].mxu0
        %v2547 = vadd.f32 0.0, %v2546
        %v2548 = vpop.f32.mrb[0].mxu0
        %2549 = vdwg.mxu0
        %s2550 = scalar_lea.vmem %s243, 64 [#allocation2]
        %2551 = vst [vmem:[%s2550] sm:$0xff] %v2532
        %2552 = vst [vmem:[%s2550 + $0x8] sm:$0xff] %v2537
        %2553 = vst [vmem:[%s2550 + $0x10] sm:$0xff] %v2542
        %2554 = vst [vmem:[%s2550 + $0x18] sm:$0xff] %v2547
        %s2555 = scalar_lea.vmem %s268, 384
        %v2556 = vld [vmem:[%s2555] sm:$0xff]
        %v2557 = vld [vmem:[%s2555 + $0x8] sm:$0xff]
        %v2558 = vld [vmem:[%s2555 + $0x10] sm:$0xff]
        %v2559 = vld [vmem:[%s2555 + $0x18] sm:$0xff]
        %v2560 = vld [vmem:[%s2555 + $0x20] sm:$0xff]
        %v2561 = vld [vmem:[%s2555 + $0x28] sm:$0xff]
        %v2562 = vld [vmem:[%s2555 + $0x30] sm:$0xff]
        %v2563 = vld [vmem:[%s2555 + $0x38] sm:$0xff]
        %v2564 = vld [vmem:[%s2555 + $0x40] sm:$0xff]
        %v2565 = vld [vmem:[%s2555 + $0x48] sm:$0xff]
        %v2566 = vld [vmem:[%s2555 + $0x50] sm:$0xff]
        %v2567 = vld [vmem:[%s2555 + $0x58] sm:$0xff]
        %v2568 = vld [vmem:[%s2555 + $0x60] sm:$0xff]
        %v2569 = vld [vmem:[%s2555 + $0x68] sm:$0xff]
        %v2570 = vld [vmem:[%s2555 + $0x70] sm:$0xff]
        %v2571 = vld [vmem:[%s2555 + $0x78] sm:$0xff]
        %s2572 = scalar_lea.vmem %s255, 12
        %v2573 = vld [vmem:[%s2572] sm:$0xf]
        %s2574 = scalar_lea.vmem %s261, 12
        %v2575 = vld [vmem:[%s2574] sm:$0xf]
        %v2576 = vmul.f32 %v2575, %v2575
        %2578 = vset.pattern.permute.xlu0 0
        %2579 = vperm.xlu0 %2578, %v2556
        %v2580 = vpop.permute.xlu0 %2579
        %2583 = vset.pattern.permute.xlu0 0
        %2584 = vperm.xlu0 %2583, %v2557
        %v2585 = vpop.permute.xlu0 %2584
        %2588 = vset.pattern.permute.xlu0 0
        %2589 = vperm.xlu0 %2588, %v2558
        %v2590 = vpop.permute.xlu0 %2589
        %2593 = vset.pattern.permute.xlu0 0
        %2594 = vperm.xlu0 %2593, %v2559
        %v2595 = vpop.permute.xlu0 %2594
        %2598 = vset.pattern.permute.xlu0 0
        %2599 = vperm.xlu0 %2598, %v2560
        %v2600 = vpop.permute.xlu0 %2599
        %2603 = vset.pattern.permute.xlu0 0
        %2604 = vperm.xlu0 %2603, %v2561
        %v2605 = vpop.permute.xlu0 %2604
        %2608 = vset.pattern.permute.xlu0 0
        %2609 = vperm.xlu0 %2608, %v2562
        %v2610 = vpop.permute.xlu0 %2609
        %2613 = vset.pattern.permute.xlu0 0
        %2614 = vperm.xlu0 %2613, %v2563
        %v2615 = vpop.permute.xlu0 %2614
        %2618 = vset.pattern.permute.xlu0 0
        %2619 = vperm.xlu0 %2618, %v2564
        %v2620 = vpop.permute.xlu0 %2619
        %2623 = vset.pattern.permute.xlu0 0
        %2624 = vperm.xlu0 %2623, %v2565
        %v2625 = vpop.permute.xlu0 %2624
        %2628 = vset.pattern.permute.xlu0 0
        %2629 = vperm.xlu0 %2628, %v2566
        %v2630 = vpop.permute.xlu0 %2629
        %2633 = vset.pattern.permute.xlu0 0
        %2634 = vperm.xlu0 %2633, %v2567
        %v2635 = vpop.permute.xlu0 %2634
        %2638 = vset.pattern.permute.xlu0 0
        %2639 = vperm.xlu0 %2638, %v2568
        %v2640 = vpop.permute.xlu0 %2639
        %2643 = vset.pattern.permute.xlu0 0
        %2644 = vperm.xlu0 %2643, %v2569
        %v2645 = vpop.permute.xlu0 %2644
        %2648 = vset.pattern.permute.xlu0 0
        %2649 = vperm.xlu0 %2648, %v2570
        %v2650 = vpop.permute.xlu0 %2649
        %2653 = vset.pattern.permute.xlu0 0
        %2654 = vperm.xlu0 %2653, %v2571
        %v2655 = vpop.permute.xlu0 %2654
        %v2657 = vlaneseq
        %v2658 = vshrl.u32 %v2657, 7
        %v2659 = vsub.s32 0, %v2658
        %v2660 = vrot.slane %v2573, %v2659
        %v2661 = vsub.f32 %v2580, %v2660
        %v2662 = vsub.f32 %v2585, %v2660
        %v2663 = vsub.f32 %v2590, %v2660
        %v2664 = vsub.f32 %v2595, %v2660
        %v2665 = vsub.f32 %v2600, %v2660
        %v2666 = vsub.f32 %v2605, %v2660
        %v2667 = vsub.f32 %v2610, %v2660
        %v2668 = vsub.f32 %v2615, %v2660
        %v2669 = vsub.f32 %v2620, %v2660
        %v2670 = vsub.f32 %v2625, %v2660
        %v2671 = vsub.f32 %v2630, %v2660
        %v2672 = vsub.f32 %v2635, %v2660
        %v2673 = vsub.f32 %v2640, %v2660
        %v2674 = vsub.f32 %v2645, %v2660
        %v2675 = vsub.f32 %v2650, %v2660
        %v2676 = vsub.f32 %v2655, %v2660
        %v2677 = vmul.f32 %v2661, %v2661
        %v2678 = vmul.f32 %v2662, %v2662
        %v2679 = vmul.f32 %v2663, %v2663
        %v2680 = vmul.f32 %v2664, %v2664
        %v2681 = vmul.f32 %v2665, %v2665
        %v2682 = vmul.f32 %v2666, %v2666
        %v2683 = vmul.f32 %v2667, %v2667
        %v2684 = vmul.f32 %v2668, %v2668
        %v2685 = vmul.f32 %v2669, %v2669
        %v2686 = vmul.f32 %v2670, %v2670
        %v2687 = vmul.f32 %v2671, %v2671
        %v2688 = vmul.f32 %v2672, %v2672
        %v2689 = vmul.f32 %v2673, %v2673
        %v2690 = vmul.f32 %v2674, %v2674
        %v2691 = vmul.f32 %v2675, %v2675
        %v2692 = vmul.f32 %v2676, %v2676
        %v2693 = vlaneseq
        %v2694 = vshrl.u32 %v2693, 7
        %v2695 = vsub.s32 0, %v2694
        %v2696 = vrot.slane %v2576, %v2695
        %v2697 = vadd.f32 %v2677, %v2696
        %v2698 = vadd.f32 %v2678, %v2696
        %v2699 = vadd.f32 %v2679, %v2696
        %v2700 = vadd.f32 %v2680, %v2696
        %v2701 = vadd.f32 %v2681, %v2696
        %v2702 = vadd.f32 %v2682, %v2696
        %v2703 = vadd.f32 %v2683, %v2696
        %v2704 = vadd.f32 %v2684, %v2696
        %v2705 = vadd.f32 %v2685, %v2696
        %v2706 = vadd.f32 %v2686, %v2696
        %v2707 = vadd.f32 %v2687, %v2696
        %v2708 = vadd.f32 %v2688, %v2696
        %v2709 = vadd.f32 %v2689, %v2696
        %v2710 = vadd.f32 %v2690, %v2696
        %v2711 = vadd.f32 %v2691, %v2696
        %v2712 = vadd.f32 %v2692, %v2696
        %2713 = vset.pattern.permute.xlu0 1
        %2714 = vperm.xlu0 %2713, %v2556
        %v2715 = vpop.permute.xlu0 %2714
        %2717 = vset.pattern.permute.xlu0 1
        %2718 = vperm.xlu0 %2717, %v2557
        %v2719 = vpop.permute.xlu0 %2718
        %2721 = vset.pattern.permute.xlu0 1
        %2722 = vperm.xlu0 %2721, %v2558
        %v2723 = vpop.permute.xlu0 %2722
        %2725 = vset.pattern.permute.xlu0 1
        %2726 = vperm.xlu0 %2725, %v2559
        %v2727 = vpop.permute.xlu0 %2726
        %2729 = vset.pattern.permute.xlu0 1
        %2730 = vperm.xlu0 %2729, %v2560
        %v2731 = vpop.permute.xlu0 %2730
        %2733 = vset.pattern.permute.xlu0 1
        %2734 = vperm.xlu0 %2733, %v2561
        %v2735 = vpop.permute.xlu0 %2734
        %2737 = vset.pattern.permute.xlu0 1
        %2738 = vperm.xlu0 %2737, %v2562
        %v2739 = vpop.permute.xlu0 %2738
        %2741 = vset.pattern.permute.xlu0 1
        %2742 = vperm.xlu0 %2741, %v2563
        %v2743 = vpop.permute.xlu0 %2742
        %2745 = vset.pattern.permute.xlu0 1
        %2746 = vperm.xlu0 %2745, %v2564
        %v2747 = vpop.permute.xlu0 %2746
        %2749 = vset.pattern.permute.xlu0 1
        %2750 = vperm.xlu0 %2749, %v2565
        %v2751 = vpop.permute.xlu0 %2750
        %2753 = vset.pattern.permute.xlu0 1
        %2754 = vperm.xlu0 %2753, %v2566
        %v2755 = vpop.permute.xlu0 %2754
        %2757 = vset.pattern.permute.xlu0 1
        %2758 = vperm.xlu0 %2757, %v2567
        %v2759 = vpop.permute.xlu0 %2758
        %2761 = vset.pattern.permute.xlu0 1
        %2762 = vperm.xlu0 %2761, %v2568
        %v2763 = vpop.permute.xlu0 %2762
        %2765 = vset.pattern.permute.xlu0 1
        %2766 = vperm.xlu0 %2765, %v2569
        %v2767 = vpop.permute.xlu0 %2766
        %2769 = vset.pattern.permute.xlu0 1
        %2770 = vperm.xlu0 %2769, %v2570
        %v2771 = vpop.permute.xlu0 %2770
        %2773 = vset.pattern.permute.xlu0 1
        %2774 = vperm.xlu0 %2773, %v2571
        %v2775 = vpop.permute.xlu0 %2774
        %v2777 = vlaneseq
        %v2778 = vshrl.u32 %v2777, 7
        %v2779 = vsub.s32 1, %v2778
        %v2780 = vrot.slane %v2573, %v2779
        %v2781 = vsub.f32 %v2715, %v2780
        %v2782 = vsub.f32 %v2719, %v2780
        %v2783 = vsub.f32 %v2723, %v2780
        %v2784 = vsub.f32 %v2727, %v2780
        %v2785 = vsub.f32 %v2731, %v2780
        %v2786 = vsub.f32 %v2735, %v2780
        %v2787 = vsub.f32 %v2739, %v2780
        %v2788 = vsub.f32 %v2743, %v2780
        %v2789 = vsub.f32 %v2747, %v2780
        %v2790 = vsub.f32 %v2751, %v2780
        %v2791 = vsub.f32 %v2755, %v2780
        %v2792 = vsub.f32 %v2759, %v2780
        %v2793 = vsub.f32 %v2763, %v2780
        %v2794 = vsub.f32 %v2767, %v2780
        %v2795 = vsub.f32 %v2771, %v2780
        %v2796 = vsub.f32 %v2775, %v2780
        %v2797 = vmul.f32 %v2781, %v2781
        %v2798 = vmul.f32 %v2782, %v2782
        %v2799 = vmul.f32 %v2783, %v2783
        %v2800 = vmul.f32 %v2784, %v2784
        %v2801 = vmul.f32 %v2785, %v2785
        %v2802 = vmul.f32 %v2786, %v2786
        %v2803 = vmul.f32 %v2787, %v2787
        %v2804 = vmul.f32 %v2788, %v2788
        %v2805 = vmul.f32 %v2789, %v2789
        %v2806 = vmul.f32 %v2790, %v2790
        %v2807 = vmul.f32 %v2791, %v2791
        %v2808 = vmul.f32 %v2792, %v2792
        %v2809 = vmul.f32 %v2793, %v2793
        %v2810 = vmul.f32 %v2794, %v2794
        %v2811 = vmul.f32 %v2795, %v2795
        %v2812 = vmul.f32 %v2796, %v2796
        %v2813 = vlaneseq
        %v2814 = vshrl.u32 %v2813, 7
        %v2815 = vsub.s32 1, %v2814
        %v2816 = vrot.slane %v2576, %v2815
        %v2817 = vadd.f32 %v2797, %v2816
        %v2818 = vadd.f32 %v2798, %v2816
        %v2819 = vadd.f32 %v2799, %v2816
        %v2820 = vadd.f32 %v2800, %v2816
        %v2821 = vadd.f32 %v2801, %v2816
        %v2822 = vadd.f32 %v2802, %v2816
        %v2823 = vadd.f32 %v2803, %v2816
        %v2824 = vadd.f32 %v2804, %v2816
        %v2825 = vadd.f32 %v2805, %v2816
        %v2826 = vadd.f32 %v2806, %v2816
        %v2827 = vadd.f32 %v2807, %v2816
        %v2828 = vadd.f32 %v2808, %v2816
        %v2829 = vadd.f32 %v2809, %v2816
        %v2830 = vadd.f32 %v2810, %v2816
        %v2831 = vadd.f32 %v2811, %v2816
        %v2832 = vadd.f32 %v2812, %v2816
        %v2833 = vmul.f32 %v2697, %v2817
        %v2834 = vmul.f32 %v2698, %v2818
        %v2835 = vmul.f32 %v2699, %v2819
        %v2836 = vmul.f32 %v2700, %v2820
        %v2837 = vmul.f32 %v2701, %v2821
        %v2838 = vmul.f32 %v2702, %v2822
        %v2839 = vmul.f32 %v2703, %v2823
        %v2840 = vmul.f32 %v2704, %v2824
        %v2841 = vmul.f32 %v2705, %v2825
        %v2842 = vmul.f32 %v2706, %v2826
        %v2843 = vmul.f32 %v2707, %v2827
        %v2844 = vmul.f32 %v2708, %v2828
        %v2845 = vmul.f32 %v2709, %v2829
        %v2846 = vmul.f32 %v2710, %v2830
        %v2847 = vmul.f32 %v2711, %v2831
        %v2848 = vmul.f32 %v2712, %v2832
        %2849 = vset.pattern.permute.xlu0 2
        %2850 = vperm.xlu0 %2849, %v2556
        %v2851 = vpop.permute.xlu0 %2850
        %2853 = vset.pattern.permute.xlu0 2
        %2854 = vperm.xlu0 %2853, %v2557
        %v2855 = vpop.permute.xlu0 %2854
        %2857 = vset.pattern.permute.xlu0 2
        %2858 = vperm.xlu0 %2857, %v2558
        %v2859 = vpop.permute.xlu0 %2858
        %2861 = vset.pattern.permute.xlu0 2
        %2862 = vperm.xlu0 %2861, %v2559
        %v2863 = vpop.permute.xlu0 %2862
        %2865 = vset.pattern.permute.xlu0 2
        %2866 = vperm.xlu0 %2865, %v2560
        %v2867 = vpop.permute.xlu0 %2866
        %2869 = vset.pattern.permute.xlu0 2
        %2870 = vperm.xlu0 %2869, %v2561
        %v2871 = vpop.permute.xlu0 %2870
        %2873 = vset.pattern.permute.xlu0 2
        %2874 = vperm.xlu0 %2873, %v2562
        %v2875 = vpop.permute.xlu0 %2874
        %2877 = vset.pattern.permute.xlu0 2
        %2878 = vperm.xlu0 %2877, %v2563
        %v2879 = vpop.permute.xlu0 %2878
        %2881 = vset.pattern.permute.xlu0 2
        %2882 = vperm.xlu0 %2881, %v2564
        %v2883 = vpop.permute.xlu0 %2882
        %2885 = vset.pattern.permute.xlu0 2
        %2886 = vperm.xlu0 %2885, %v2565
        %v2887 = vpop.permute.xlu0 %2886
        %2889 = vset.pattern.permute.xlu0 2
        %2890 = vperm.xlu0 %2889, %v2566
        %v2891 = vpop.permute.xlu0 %2890
        %2893 = vset.pattern.permute.xlu0 2
        %2894 = vperm.xlu0 %2893, %v2567
        %v2895 = vpop.permute.xlu0 %2894
        %2897 = vset.pattern.permute.xlu0 2
        %2898 = vperm.xlu0 %2897, %v2568
        %v2899 = vpop.permute.xlu0 %2898
        %2901 = vset.pattern.permute.xlu0 2
        %2902 = vperm.xlu0 %2901, %v2569
        %v2903 = vpop.permute.xlu0 %2902
        %2905 = vset.pattern.permute.xlu0 2
        %2906 = vperm.xlu0 %2905, %v2570
        %v2907 = vpop.permute.xlu0 %2906
        %2909 = vset.pattern.permute.xlu0 2
        %2910 = vperm.xlu0 %2909, %v2571
        %v2911 = vpop.permute.xlu0 %2910
        %v2913 = vlaneseq
        %v2914 = vshrl.u32 %v2913, 7
        %v2915 = vsub.s32 2, %v2914
        %v2916 = vrot.slane %v2573, %v2915
        %v2917 = vsub.f32 %v2851, %v2916
        %v2918 = vsub.f32 %v2855, %v2916
        %v2919 = vsub.f32 %v2859, %v2916
        %v2920 = vsub.f32 %v2863, %v2916
        %v2921 = vsub.f32 %v2867, %v2916
        %v2922 = vsub.f32 %v2871, %v2916
        %v2923 = vsub.f32 %v2875, %v2916
        %v2924 = vsub.f32 %v2879, %v2916
        %v2925 = vsub.f32 %v2883, %v2916
        %v2926 = vsub.f32 %v2887, %v2916
        %v2927 = vsub.f32 %v2891, %v2916
        %v2928 = vsub.f32 %v2895, %v2916
        %v2929 = vsub.f32 %v2899, %v2916
        %v2930 = vsub.f32 %v2903, %v2916
        %v2931 = vsub.f32 %v2907, %v2916
        %v2932 = vsub.f32 %v2911, %v2916
        %v2933 = vmul.f32 %v2917, %v2917
        %v2934 = vmul.f32 %v2918, %v2918
        %v2935 = vmul.f32 %v2919, %v2919
        %v2936 = vmul.f32 %v2920, %v2920
        %v2937 = vmul.f32 %v2921, %v2921
        %v2938 = vmul.f32 %v2922, %v2922
        %v2939 = vmul.f32 %v2923, %v2923
        %v2940 = vmul.f32 %v2924, %v2924
        %v2941 = vmul.f32 %v2925, %v2925
        %v2942 = vmul.f32 %v2926, %v2926
        %v2943 = vmul.f32 %v2927, %v2927
        %v2944 = vmul.f32 %v2928, %v2928
        %v2945 = vmul.f32 %v2929, %v2929
        %v2946 = vmul.f32 %v2930, %v2930
        %v2947 = vmul.f32 %v2931, %v2931
        %v2948 = vmul.f32 %v2932, %v2932
        %v2949 = vlaneseq
        %v2950 = vshrl.u32 %v2949, 7
        %v2951 = vsub.s32 2, %v2950
        %v2952 = vrot.slane %v2576, %v2951
        %v2953 = vadd.f32 %v2933, %v2952
        %v2954 = vadd.f32 %v2934, %v2952
        %v2955 = vadd.f32 %v2935, %v2952
        %v2956 = vadd.f32 %v2936, %v2952
        %v2957 = vadd.f32 %v2937, %v2952
        %v2958 = vadd.f32 %v2938, %v2952
        %v2959 = vadd.f32 %v2939, %v2952
        %v2960 = vadd.f32 %v2940, %v2952
        %v2961 = vadd.f32 %v2941, %v2952
        %v2962 = vadd.f32 %v2942, %v2952
        %v2963 = vadd.f32 %v2943, %v2952
        %v2964 = vadd.f32 %v2944, %v2952
        %v2965 = vadd.f32 %v2945, %v2952
        %v2966 = vadd.f32 %v2946, %v2952
        %v2967 = vadd.f32 %v2947, %v2952
        %v2968 = vadd.f32 %v2948, %v2952
        %v2969 = vmul.f32 %v2833, %v2953
        %v2970 = vmul.f32 %v2834, %v2954
        %v2971 = vmul.f32 %v2835, %v2955
        %v2972 = vmul.f32 %v2836, %v2956
        %v2973 = vmul.f32 %v2837, %v2957
        %v2974 = vmul.f32 %v2838, %v2958
        %v2975 = vmul.f32 %v2839, %v2959
        %v2976 = vmul.f32 %v2840, %v2960
        %v2977 = vmul.f32 %v2841, %v2961
        %v2978 = vmul.f32 %v2842, %v2962
        %v2979 = vmul.f32 %v2843, %v2963
        %v2980 = vmul.f32 %v2844, %v2964
        %v2981 = vmul.f32 %v2845, %v2965
        %v2982 = vmul.f32 %v2846, %v2966
        %v2983 = vmul.f32 %v2847, %v2967
        %v2984 = vmul.f32 %v2848, %v2968
        %2985 = vset.pattern.permute.xlu0 3
        %2986 = vperm.xlu0 %2985, %v2556
        %v2987 = vpop.permute.xlu0 %2986
        %2989 = vset.pattern.permute.xlu0 3
        %2990 = vperm.xlu0 %2989, %v2557
        %v2991 = vpop.permute.xlu0 %2990
        %2993 = vset.pattern.permute.xlu0 3
        %2994 = vperm.xlu0 %2993, %v2558
        %v2995 = vpop.permute.xlu0 %2994
        %2997 = vset.pattern.permute.xlu0 3
        %2998 = vperm.xlu0 %2997, %v2559
        %v2999 = vpop.permute.xlu0 %2998
        %3001 = vset.pattern.permute.xlu0 3
        %3002 = vperm.xlu0 %3001, %v2560
        %v3003 = vpop.permute.xlu0 %3002
        %3005 = vset.pattern.permute.xlu0 3
        %3006 = vperm.xlu0 %3005, %v2561
        %v3007 = vpop.permute.xlu0 %3006
        %3009 = vset.pattern.permute.xlu0 3
        %3010 = vperm.xlu0 %3009, %v2562
        %v3011 = vpop.permute.xlu0 %3010
        %3013 = vset.pattern.permute.xlu0 3
        %3014 = vperm.xlu0 %3013, %v2563
        %v3015 = vpop.permute.xlu0 %3014
        %3017 = vset.pattern.permute.xlu0 3
        %3018 = vperm.xlu0 %3017, %v2564
        %v3019 = vpop.permute.xlu0 %3018
        %3021 = vset.pattern.permute.xlu0 3
        %3022 = vperm.xlu0 %3021, %v2565
        %v3023 = vpop.permute.xlu0 %3022
        %3025 = vset.pattern.permute.xlu0 3
        %3026 = vperm.xlu0 %3025, %v2566
        %v3027 = vpop.permute.xlu0 %3026
        %3029 = vset.pattern.permute.xlu0 3
        %3030 = vperm.xlu0 %3029, %v2567
        %v3031 = vpop.permute.xlu0 %3030
        %3033 = vset.pattern.permute.xlu0 3
        %3034 = vperm.xlu0 %3033, %v2568
        %v3035 = vpop.permute.xlu0 %3034
        %3037 = vset.pattern.permute.xlu0 3
        %3038 = vperm.xlu0 %3037, %v2569
        %v3039 = vpop.permute.xlu0 %3038
        %3041 = vset.pattern.permute.xlu0 3
        %3042 = vperm.xlu0 %3041, %v2570
        %v3043 = vpop.permute.xlu0 %3042
        %3045 = vset.pattern.permute.xlu0 3
        %3046 = vperm.xlu0 %3045, %v2571
        %v3047 = vpop.permute.xlu0 %3046
        %v3049 = vlaneseq
        %v3050 = vshrl.u32 %v3049, 7
        %v3051 = vsub.s32 3, %v3050
        %v3052 = vrot.slane %v2573, %v3051
        %v3053 = vsub.f32 %v2987, %v3052
        %v3054 = vsub.f32 %v2991, %v3052
        %v3055 = vsub.f32 %v2995, %v3052
        %v3056 = vsub.f32 %v2999, %v3052
        %v3057 = vsub.f32 %v3003, %v3052
        %v3058 = vsub.f32 %v3007, %v3052
        %v3059 = vsub.f32 %v3011, %v3052
        %v3060 = vsub.f32 %v3015, %v3052
        %v3061 = vsub.f32 %v3019, %v3052
        %v3062 = vsub.f32 %v3023, %v3052
        %v3063 = vsub.f32 %v3027, %v3052
        %v3064 = vsub.f32 %v3031, %v3052
        %v3065 = vsub.f32 %v3035, %v3052
        %v3066 = vsub.f32 %v3039, %v3052
        %v3067 = vsub.f32 %v3043, %v3052
        %v3068 = vsub.f32 %v3047, %v3052
        %v3069 = vmul.f32 %v3053, %v3053
        %v3070 = vmul.f32 %v3054, %v3054
        %v3071 = vmul.f32 %v3055, %v3055
        %v3072 = vmul.f32 %v3056, %v3056
        %v3073 = vmul.f32 %v3057, %v3057
        %v3074 = vmul.f32 %v3058, %v3058
        %v3075 = vmul.f32 %v3059, %v3059
        %v3076 = vmul.f32 %v3060, %v3060
        %v3077 = vmul.f32 %v3061, %v3061
        %v3078 = vmul.f32 %v3062, %v3062
        %v3079 = vmul.f32 %v3063, %v3063
        %v3080 = vmul.f32 %v3064, %v3064
        %v3081 = vmul.f32 %v3065, %v3065
        %v3082 = vmul.f32 %v3066, %v3066
        %v3083 = vmul.f32 %v3067, %v3067
        %v3084 = vmul.f32 %v3068, %v3068
        %v3085 = vlaneseq
        %v3086 = vshrl.u32 %v3085, 7
        %v3087 = vsub.s32 3, %v3086
        %v3088 = vrot.slane %v2576, %v3087
        %v3089 = vadd.f32 %v3069, %v3088
        %v3090 = vadd.f32 %v3070, %v3088
        %v3091 = vadd.f32 %v3071, %v3088
        %v3092 = vadd.f32 %v3072, %v3088
        %v3093 = vadd.f32 %v3073, %v3088
        %v3094 = vadd.f32 %v3074, %v3088
        %v3095 = vadd.f32 %v3075, %v3088
        %v3096 = vadd.f32 %v3076, %v3088
        %v3097 = vadd.f32 %v3077, %v3088
        %v3098 = vadd.f32 %v3078, %v3088
        %v3099 = vadd.f32 %v3079, %v3088
        %v3100 = vadd.f32 %v3080, %v3088
        %v3101 = vadd.f32 %v3081, %v3088
        %v3102 = vadd.f32 %v3082, %v3088
        %v3103 = vadd.f32 %v3083, %v3088
        %v3104 = vadd.f32 %v3084, %v3088
        %v3105 = vmul.f32 %v2969, %v3089
        %v3106 = vmul.f32 %v2970, %v3090
        %v3107 = vmul.f32 %v2971, %v3091
        %v3108 = vmul.f32 %v2972, %v3092
        %v3109 = vmul.f32 %v2973, %v3093
        %v3110 = vmul.f32 %v2974, %v3094
        %v3111 = vmul.f32 %v2975, %v3095
        %v3112 = vmul.f32 %v2976, %v3096
        %v3113 = vmul.f32 %v2977, %v3097
        %v3114 = vmul.f32 %v2978, %v3098
        %v3115 = vmul.f32 %v2979, %v3099
        %v3116 = vmul.f32 %v2980, %v3100
        %v3117 = vmul.f32 %v2981, %v3101
        %v3118 = vmul.f32 %v2982, %v3102
        %v3119 = vmul.f32 %v2983, %v3103
        %v3120 = vmul.f32 %v2984, %v3104
        %v3121 = vrcp.pop %v3105
        %v3122 = vrcp.pop %v3106
        %v3123 = vrcp.pop %v3107
        %v3124 = vrcp.pop %v3108
        %v3125 = vrcp.pop %v3109
        %v3126 = vrcp.pop %v3110
        %v3127 = vrcp.pop %v3111
        %v3128 = vrcp.pop %v3112
        %v3129 = vrcp.pop %v3113
        %v3130 = vrcp.pop %v3114
        %v3131 = vrcp.pop %v3115
        %v3132 = vrcp.pop %v3116
        %v3133 = vrcp.pop %v3117
        %v3134 = vrcp.pop %v3118
        %v3135 = vrcp.pop %v3119
        %v3136 = vrcp.pop %v3120
        %v3137 = vmul.f32 %v3105, %v3121
        %v3138 = vmul.f32 %v3106, %v3122
        %v3139 = vmul.f32 %v3107, %v3123
        %v3140 = vmul.f32 %v3108, %v3124
        %v3141 = vmul.f32 %v3109, %v3125
        %v3142 = vmul.f32 %v3110, %v3126
        %v3143 = vmul.f32 %v3111, %v3127
        %v3144 = vmul.f32 %v3112, %v3128
        %v3145 = vmul.f32 %v3113, %v3129
        %v3146 = vmul.f32 %v3114, %v3130
        %v3147 = vmul.f32 %v3115, %v3131
        %v3148 = vmul.f32 %v3116, %v3132
        %v3149 = vmul.f32 %v3117, %v3133
        %v3150 = vmul.f32 %v3118, %v3134
        %v3151 = vmul.f32 %v3119, %v3135
        %v3152 = vmul.f32 %v3120, %v3136
        %v3153 = vsub.f32 2.0, %v3137
        %v3154 = vsub.f32 2.0, %v3138
        %v3155 = vsub.f32 2.0, %v3139
        %v3156 = vsub.f32 2.0, %v3140
        %v3157 = vsub.f32 2.0, %v3141
        %v3158 = vsub.f32 2.0, %v3142
        %v3159 = vsub.f32 2.0, %v3143
        %v3160 = vsub.f32 2.0, %v3144
        %v3161 = vsub.f32 2.0, %v3145
        %v3162 = vsub.f32 2.0, %v3146
        %v3163 = vsub.f32 2.0, %v3147
        %v3164 = vsub.f32 2.0, %v3148
        %v3165 = vsub.f32 2.0, %v3149
        %v3166 = vsub.f32 2.0, %v3150
        %v3167 = vsub.f32 2.0, %v3151
        %v3168 = vsub.f32 2.0, %v3152
        %v3169 = vmul.f32 %v3121, %v3153
        %v3170 = vmul.f32 %v3122, %v3154
        %v3171 = vmul.f32 %v3123, %v3155
        %v3172 = vmul.f32 %v3124, %v3156
        %v3173 = vmul.f32 %v3125, %v3157
        %v3174 = vmul.f32 %v3126, %v3158
        %v3175 = vmul.f32 %v3127, %v3159
        %v3176 = vmul.f32 %v3128, %v3160
        %v3177 = vmul.f32 %v3129, %v3161
        %v3178 = vmul.f32 %v3130, %v3162
        %v3179 = vmul.f32 %v3131, %v3163
        %v3180 = vmul.f32 %v3132, %v3164
        %v3181 = vmul.f32 %v3133, %v3165
        %v3182 = vmul.f32 %v3134, %v3166
        %v3183 = vmul.f32 %v3135, %v3167
        %v3184 = vmul.f32 %v3136, %v3168
        %v3185 = vadd.f32 %v3169, %v3170
        %v3186 = vadd.f32 %v3185, %v3171
        %v3187 = vadd.f32 %v3186, %v3172
        %v3188 = vadd.f32 %v3187, %v3173
        %v3189 = vadd.f32 %v3188, %v3174
        %v3190 = vadd.f32 %v3189, %v3175
        %v3191 = vadd.f32 %v3190, %v3176
        %v3192 = vadd.f32 %v3191, %v3177
        %v3193 = vadd.f32 %v3192, %v3178
        %v3194 = vadd.f32 %v3193, %v3179
        %v3195 = vadd.f32 %v3194, %v3180
        %v3196 = vadd.f32 %v3195, %v3181
        %v3197 = vadd.f32 %v3196, %v3182
        %v3198 = vadd.f32 %v3197, %v3183
        %v3199 = vadd.f32 %v3198, %v3184
        %v3200 = vrot.slane %v3199, 4
        %v3201 = vadd.f32 %v3199, %v3200
        %v3202 = vrot.slane %v3201, 2
        %v3203 = vadd.f32 %v3201, %v3202
        %v3204 = vrot.slane %v3203, 1
        %v3205 = vadd.f32 %v3203, %v3204
        %v3206 = vrcp.pop %v3205
        %v3207 = vmul.f32 %v3169, %v3206
        %v3208 = vmul.f32 %v3170, %v3206
        %v3209 = vmul.f32 %v3171, %v3206
        %v3210 = vmul.f32 %v3172, %v3206
        %v3211 = vmul.f32 %v3173, %v3206
        %v3212 = vmul.f32 %v3174, %v3206
        %v3213 = vmul.f32 %v3175, %v3206
        %v3214 = vmul.f32 %v3176, %v3206
        %v3215 = vmul.f32 %v3177, %v3206
        %v3216 = vmul.f32 %v3178, %v3206
        %v3217 = vmul.f32 %v3179, %v3206
        %v3218 = vmul.f32 %v3180, %v3206
        %v3219 = vmul.f32 %v3181, %v3206
        %v3220 = vmul.f32 %v3182, %v3206
        %v3221 = vmul.f32 %v3183, %v3206
        %v3222 = vmul.f32 %v3184, %v3206
        %s3223 = scalar_lea.vmem %s249, 96
        %v3224 = vld [vmem:[%s3223] sm:$0xff]
        %v3225 = vld [vmem:[%s3223 + $0x8] sm:$0xff]
        %v3226 = vld [vmem:[%s3223 + $0x10] sm:$0xff]
        %v3227 = vld [vmem:[%s3223 + $0x18] sm:$0xff]
        %3228 = vmatprep.subr.mxu0 0.0
        %3229 = vmatpush1.msra.mxu0 %v3207
        %3230 = vmatprep.subr.mxu0 0.0
        %3231 = vmatpush1.msra.mxu0 %v3208
        %3232 = vmatprep.subr.mxu0 0.0
        %3233 = vmatpush1.msra.mxu0 %v3209
        %3234 = vmatprep.subr.mxu0 0.0
        %3235 = vmatpush1.msra.mxu0 %v3210
        %3236 = vmatprep.subr.mxu0 0.0
        %3237 = vmatpush1.msra.mxu0 %v3211
        %3238 = vmatprep.subr.mxu0 0.0
        %3239 = vmatpush1.msra.mxu0 %v3212
        %3240 = vmatprep.subr.mxu0 0.0
        %3241 = vmatpush1.msra.mxu0 %v3213
        %3242 = vmatprep.subr.mxu0 0.0
        %3243 = vmatpush1.msra.mxu0 %v3214
        %3244 = vmatprep.subr.mxu0 0.0
        %3245 = vmatpush1.msra.mxu0 %v3215
        %3246 = vmatprep.subr.mxu0 0.0
        %3247 = vmatpush1.msra.mxu0 %v3216
        %3248 = vmatprep.subr.mxu0 0.0
        %3249 = vmatpush1.msra.mxu0 %v3217
        %3250 = vmatprep.subr.mxu0 0.0
        %3251 = vmatpush1.msra.mxu0 %v3218
        %3252 = vmatprep.subr.mxu0 0.0
        %3253 = vmatpush1.msra.mxu0 %v3219
        %3254 = vmatprep.subr.mxu0 0.0
        %3255 = vmatpush1.msra.mxu0 %v3220
        %3256 = vmatprep.subr.mxu0 0.0
        %3257 = vmatpush1.msra.mxu0 %v3221
        %3258 = vmatprep.subr.mxu0 0.0
        %3259 = vmatpush1.msra.mxu0 %v3222
        %3260 = vmatprep.subr.mxu0 0.0
        %3261 = vmatpush1.msra.mxu0 0.0
        %3262 = vmatprep.subr.mxu0 0.0
        %3263 = vmatpush1.msra.mxu0 0.0
        %3264 = vmatprep.subr.mxu0 0.0
        %3265 = vmatpush1.msra.mxu0 0.0
        %3266 = vmatprep.subr.mxu0 0.0
        %3267 = vmatpush1.msra.mxu0 0.0
        %3268 = vmatprep.subr.mxu0 0.0
        %3269 = vmatpush1.msra.mxu0 0.0
        %3270 = vmatprep.subr.mxu0 0.0
        %3271 = vmatpush1.msra.mxu0 0.0
        %3272 = vmatprep.subr.mxu0 0.0
        %3273 = vmatpush1.msra.mxu0 0.0
        %3274 = vmatprep.subr.mxu0 0.0
        %3275 = vmatpush1.msra.mxu0 0.0
        %3276 = vmatprep.subr.mxu0 0.0
        %3277 = vmatpush1.msra.mxu0 0.0
        %3278 = vmatprep.subr.mxu0 0.0
        %3279 = vmatpush1.msra.mxu0 0.0
        %3280 = vmatprep.subr.mxu0 0.0
        %3281 = vmatpush1.msra.mxu0 0.0
        %3282 = vmatprep.subr.mxu0 0.0
        %3283 = vmatpush1.msra.mxu0 0.0
        %3284 = vmatprep.subr.mxu0 0.0
        %3285 = vmatpush1.msra.mxu0 0.0
        %3286 = vmatprep.subr.mxu0 0.0
        %3287 = vmatpush1.msra.mxu0 0.0
        %3288 = vmatprep.subr.mxu0 0.0
        %3289 = vmatpush1.msra.mxu0 0.0
        %3290 = vmatprep.subr.mxu0 0.0
        %3291 = vmatpush1.msra.mxu0 0.0
        %3292 = vmatprep.mubr.f32.mxu0 0.0
        %3293 = vmatmul.mubr.f32.gmra.mrb[0].mxu0 %v3224
        %v3294 = vpop.f32.mrb[0].mxu0
        %v3295 = vadd.f32 0.0, %v3294
        %v3296 = vpop.f32.mrb[0].mxu0
        %3297 = vmatprep.mubr.f32.mxu0 0.0
        %3298 = vmatmul.mubr.f32.gmra.mrb[0].mxu0 %v3225
        %v3299 = vpop.f32.mrb[0].mxu0
        %v3300 = vadd.f32 0.0, %v3299
        %v3301 = vpop.f32.mrb[0].mxu0
        %3302 = vmatprep.mubr.f32.mxu0 0.0
        %3303 = vmatmul.mubr.f32.gmra.mrb[0].mxu0 %v3226
        %v3304 = vpop.f32.mrb[0].mxu0
        %v3305 = vadd.f32 0.0, %v3304
        %v3306 = vpop.f32.mrb[0].mxu0
        %3307 = vmatprep.mubr.f32.mxu0 0.0
        %3308 = vmatmul.mubr.f32.gmra.mrb[0].mxu0 %v3227
        %v3309 = vpop.f32.mrb[0].mxu0
        %v3310 = vadd.f32 0.0, %v3309
        %v3311 = vpop.f32.mrb[0].mxu0
        %3312 = vdwg.mxu0
        %s3313 = scalar_lea.vmem %s243, 96 [#allocation2]
        %3314 = vst [vmem:[%s3313] sm:$0xff] %v3295
        %3315 = vst [vmem:[%s3313 + $0x8] sm:$0xff] %v3300
        %3316 = vst [vmem:[%s3313 + $0x10] sm:$0xff] %v3305
        %3317 = vst [vmem:[%s3313 + $0x18] sm:$0xff] %v3310
        %s3318 = sand.u32 %s130, 1
        %s3319 = scalar_lea.sflag [#allocation3], %s3318
        %s3320 = sand.u32 %s130, 1
        %s3321 = smul.addr %s3320, 128
        %s3322 = scalar_lea.vmem [#allocation2], %s3321
        // Predicated region
        $region37: #{tpu_custom_call.1} parent=35 // pred_check
          %p3323 = pneg %p140
        $region38: #{tpu_custom_call.1} parent=35 // pred_check_branch
          %3325 = sbr.rel (%p3323) target = $region40
        $region39: #{tpu_custom_call.1} parent=35 // pred_region
          %s3326 = smul.u32 4, %s18
          %s3328 = ssub.s32 2048, 2048
          %3329 = vsyncadd %s3319, %s3328
          %s3330 = smul.addr %s3326, 4
          %s3331 = smul.addr %s3330, 128
          %s3332 = scalar_lea.hbm %s4, %s3331
          %s3333 = sshll.u32 %s3322, 4
          %s3334 = int_to_ptr.vmem [resolvable:$true] %s3333
          %3339 = dma.vmem_to_hbm [thread:$0]  %s3334, 2048, %s3332, %s3319, 128, 128, 8
        $region40: #{tpu_custom_call.1} parent=35 // pred_fallthru
          _
      $region36: #{tpu_custom_call.1} parent=5 // pred_fallthru
        _
      %p3340 = scmp.le.s32.totalorder 2, %s13
      // Predicated region
      $region41: #{tpu_custom_call.1} parent=5 // pred_check
        %p3341 = pneg %p3340
      $region42: #{tpu_custom_call.1} parent=5 // pred_check_branch
        %3343 = sbr.rel (%p3341) target = $region44
      $region43: #{tpu_custom_call.1} parent=5 // pred_region
        %s3344 = ssub.s32 %s13, 2
        // Predicated region
        $region45: #{tpu_custom_call.1} parent=43 // pred_check
          %p3345 = pneg %p146
        $region46: #{tpu_custom_call.1} parent=43 // pred_check_branch
          %3347 = sbr.rel (%p3345) target = $region48
        $region47: #{tpu_custom_call.1} parent=43 // pred_region
          %s3348 = sand.u32 %s131, 1
          %s3349 = scalar_lea.sflag [#allocation3], %s3348
          %s3350 = sand.u32 %s131, 1
          %s3351 = smul.addr %s3350, 128
          %s3352 = scalar_lea.vmem [#allocation2], %s3351
          %3353 = dma.done %s3349, 2048
        $region48: #{tpu_custom_call.1} parent=43 // pred_fallthru
          _
      $region44: #{tpu_custom_call.1} parent=5 // pred_fallthru
        _
    $region6: #{tpu_custom_call.1} parent=1 // loop_footer
      %s17 = sadd.s32 1, %s13
    $region7: #{tpu_custom_call.1} parent=1 // loop_footer_branch
      %12 = sbr.rel target = $region3
    $region8: #{tpu_custom_call.1} parent=1 // loop_exit
      _
    %3354 = vsyncpa [#allocation3], 1
    %s3355 = scalar_lea.sflag [#allocation3], 1
    %3356 = vsyncpa %s3355, 1

</llo_original>
